<compile_context>
chip_gen: v5e
topology: v5e:2x2
jax: 0.10.0
libtpu: 0.0.40
codegen_flags: <defaults>
</compile_context>

<pallas_src>
import math

import numpy as np
import jax
import jax.numpy as jnp
from jax import lax
from jax.experimental import pallas as pl
from jax.experimental.pallas import tpu as pltpu

# ---------------- model hyper-parameters (small, synthetic) ----------------
D_MODEL = 32
N_LAYER = 2
VOCAB = 64
D_STATE = 16
D_CONV = 4
EXPAND = 2
D_INNER = EXPAND * D_MODEL              # 64
DT_RANK = (D_MODEL + 15) // 16          # math.ceil(d_model / 16)
EPS = 1e-5
XPROJ_PAD = 128                         # fused x_proj output padded to a full 128-lane tile
STATE_SUB = 8                           # packed SSM state: 8 sublanes ...
STATE_LANE = (D_STATE // STATE_SUB) * D_INNER   # ... x 128 lanes (one f32 vreg)
assert D_STATE % STATE_SUB == 0 and STATE_LANE == 128

KERNEL_PARAM_ORDER = [
    "gamma", "beta",           # (1, D_MODEL) f32
    "w_in_t",                  # (D_MODEL, 2*D_INNER)  bf16   fused in_proj (x | z)
    "w_conv_t", "b_conv",      # (D_CONV, D_INNER) f32, (1, D_INNER) f32
    "w_xproj_t",               # (D_INNER, XPROJ_PAD)  f32    fused [dt | B | C | pad]
    "b_dt",                    # (1, D_INNER) f32
    "neg_a_pack",              # (STATE_SUB, STATE_LANE) f32  lane-packed -exp(A_log)^T
    "d_skip",                  # (1, D_INNER) f32
    "w_out_t",                 # (D_INNER, D_MODEL) bf16
]


def _silu(x):
    return x * (1.0 / (1.0 + jnp.exp(-x)))


def _softplus(x):
    # matches torch.nn.functional.softplus (threshold=20)
    return jnp.where(x > 20.0, x, jnp.log1p(jnp.exp(x)))


def _layernorm(x, gamma, beta):
    mean = jnp.mean(x, axis=-1, keepdims=True)
    var = jnp.mean((x - mean) ** 2, axis=-1, keepdims=True)
    return (x - mean) * lax.rsqrt(var + EPS) * gamma + beta


# ---------------------------------------------------------------------------
# Fused Pallas kernel: embedding gather + N_LAYER Mamba blocks + final LayerNorm.
# One grid step processes one batch element end-to-end.
# ---------------------------------------------------------------------------
def mixer_model_kernel(
    ids_ref,                              # SMEM (B, L) int32 (scalar prefetch)
    emb_ref,                              # (VOCAB, D_MODEL) f32
    gamma_ref, beta_ref,                  # (N_LAYER, 1, D_MODEL)
    w_in_ref,                             # (N_LAYER, D_MODEL, 2*D_INNER) bf16
    w_conv_ref, b_conv_ref,               # (N_LAYER, D_CONV, D_INNER), (N_LAYER, 1, D_INNER)
    w_xproj_ref,                          # (N_LAYER, D_INNER, XPROJ_PAD) f32
    b_dt_ref,                             # (N_LAYER, 1, D_INNER)
    neg_a_ref,                            # (N_LAYER, STATE_SUB, STATE_LANE) f32
    d_skip_ref,                           # (N_LAYER, 1, D_INNER)
    w_out_ref,                            # (N_LAYER, D_INNER, D_MODEL) bf16
    gamma_f_ref, beta_f_ref,              # (1, D_MODEL)
    out_ref,                              # (1, L, D_MODEL) f32
):
    b = pl.program_id(0)
    L = out_ref.shape[1]

    # ---- in-kernel embedding gather (table is resident in VMEM, ids in SMEM) ----
    rows = [emb_ref[pl.ds(ids_ref[b, t], 1), :] for t in range(L)]
    h = jnp.concatenate(rows, axis=0)                               # (L, D_MODEL) f32
    res = jnp.zeros_like(h)                                         # residual=None -> 0

    # ---- causal-conv tap masks: layer-invariant, built once ----
    row_idx = lax.broadcasted_iota(jnp.int32, (L, D_INNER), 0)
    tap_masks = [row_idx >= s for s in range(1, D_CONV)]

    for layer in range(N_LAYER):                                    # static loop, fused
        # ---- residual add + LayerNorm (pre-norm), f32 ----
        resid = h + res
        hs = _layernorm(resid, gamma_ref[layer], beta_ref[layer])   # (L, D_MODEL)

        # ---- fused in_proj: one lane-dense (L, 2*D_INNER) matmul, bf16 x bf16 -> f32 ----
        xz = jnp.dot(hs.astype(jnp.bfloat16), w_in_ref[layer],
                     preferred_element_type=jnp.float32)            # (L, 2*D_INNER)
        x = xz[:, :D_INNER]
        z = xz[:, D_INNER:]

        # ---- causal depthwise conv1d (kernel size D_CONV) + SiLU, f32 ----
        w_conv = w_conv_ref[layer]                                  # (D_CONV, D_INNER)
        taps = [x] + [jnp.where(tap_masks[s - 1], pltpu.roll(x, shift=s, axis=0), 0.0)
                      for s in range(1, D_CONV)]                    # all rolls issued first
        acc = jnp.broadcast_to(b_conv_ref[layer], (L, D_INNER))
        for s in range(D_CONV):                                     # tap shifted by s <-> w[k=D_CONV-1-s]
            acc = acc + taps[s] * w_conv[D_CONV - 1 - s:D_CONV - s, :]
        u = _silu(acc)                                              # (L, D_INNER)

        # ---- fused x_proj (+ composed dt_proj), f32 matmul -> [dt | B | C | pad] ----
        proj = jnp.dot(u, w_xproj_ref[layer],
                       preferred_element_type=jnp.float32)          # (L, XPROJ_PAD)
        delta = _softplus(proj[:, :D_INNER] + b_dt_ref[layer])      # (L, D_INNER)
        Bm = proj[:, D_INNER:D_INNER + D_STATE]                     # (L, D_STATE)
        Cm = proj[:, D_INNER + D_STATE:D_INNER + 2 * D_STATE]       # (L, D_STATE)

        # ---- selective scan on a lane-packed (STATE_SUB, STATE_LANE) = (8, 128) state ----
        # packed[i, h*64+d] <-> unpacked[n=h*8+i, d]
        du = delta * u                                              # (L, D_INNER)
        delta_dup = jnp.concatenate([delta, delta], axis=-1)        # (L, 128)
        du_dup = jnp.concatenate([du, du], axis=-1)                 # (L, 128)
        dA = jnp.exp(delta_dup[:, None, :] * neg_a_ref[layer][None, :, :])   # (L, 8, 128)

        B0 = jnp.broadcast_to(Bm[:, :STATE_SUB][:, :, None], (L, STATE_SUB, D_INNER))
        B1 = jnp.broadcast_to(Bm[:, STATE_SUB:][:, :, None], (L, STATE_SUB, D_INNER))
        B_pack = jnp.concatenate([B0, B1], axis=-1)                 # (L, 8, 128)
        dBu = du_dup[:, None, :] * B_pack                           # (L, 8, 128)

        C0 = jnp.broadcast_to(Cm[:, :STATE_SUB][:, :, None], (L, STATE_SUB, D_INNER))
        C1 = jnp.broadcast_to(Cm[:, STATE_SUB:][:, :, None], (L, STATE_SUB, D_INNER))
        C_pack = jnp.concatenate([C0, C1], axis=-1)                 # (L, 8, 128)

        # register-carried unrolled scan; each packed state is exactly one f32 vreg
        st = jnp.zeros((STATE_SUB, STATE_LANE), jnp.float32)
        states = []
        for t in range(L):
            st = dA[t] * st + dBu[t]
            states.append(st)
        states = jnp.stack(states, axis=0)                          # (L, 8, 128)

        # ---- deferred C-contraction (one vectorized pass), D skip, gate, out_proj ----
        yc = jnp.sum(states * C_pack, axis=1)                       # (L, 128)
        y = yc[:, :D_INNER] + yc[:, D_INNER:]                       # fold packed halves
        y = (y + u * d_skip_ref[layer]) * _silu(z)
        h = jnp.dot(y.astype(jnp.bfloat16), w_out_ref[layer],
                    preferred_element_type=jnp.float32)             # (L, D_MODEL)
        res = resid

    # ---- final add + LayerNorm (norm_f); only HBM write of the whole kernel ----
    out_ref[0] = _layernorm(h + res, gamma_f_ref[...], beta_f_ref[...])


def _full_spec(shape):
    nd = len(shape)
    return pl.BlockSpec(shape, lambda b, ids, _nd=nd: (0,) * _nd)


def mixer_model_forward(params, input_ids):
    B, L = input_ids.shape
    weights = [params["stacked"][k] for k in KERNEL_PARAM_ORDER]
    dense_args = [params["embedding"]] + weights + [params["gamma_f"], params["beta_f"]]
    fn = pl.pallas_call(
        mixer_model_kernel,
        out_shape=jax.ShapeDtypeStruct((B, L, D_MODEL), jnp.float32),
        grid_spec=pltpu.PrefetchScalarGridSpec(
            num_scalar_prefetch=1,                 # input_ids -> SMEM
            grid=(B,),
            in_specs=[_full_spec(a.shape) for a in dense_args],
            out_specs=pl.BlockSpec((1, L, D_MODEL), lambda b, ids: (b, 0, 0)),
        ),
        # B=2 maps to the 2 TensorCores on v7x; on v5e/v6e this is 2 cheap serial steps.
        compiler_params=pltpu.CompilerParams(dimension_semantics=("parallel",)),
    )
    return fn(input_ids.astype(jnp.int32), *dense_args)


# ---------------------------------------------------------------------------
# Deterministic "raw" (PyTorch-shaped) parameters + kernel-ready preparation
# ---------------------------------------------------------------------------
def init_params(key):
    keys = jax.random.split(key, N_LAYER + 1)
    emb = 0.02 * jax.random.normal(keys[0], (VOCAB, D_MODEL), jnp.float32)
    layers = []
    for i in range(N_LAYER):
        k = jax.random.split(keys[i + 1], 8)
        w_in = 0.02 * jax.random.normal(k[0], (2 * D_INNER, D_MODEL), jnp.float32)
        w_conv = 0.2 * jax.random.normal(k[1], (D_INNER, D_CONV), jnp.float32)
        b_conv = 0.1 * jax.random.normal(k[2], (D_INNER,), jnp.float32)
        w_xproj = 0.02 * jax.random.normal(k[3], (DT_RANK + 2 * D_STATE, D_INNER),
                                           jnp.float32)
        w_dt = (DT_RANK ** -0.5) * jax.random.normal(k[4], (D_INNER, DT_RANK), jnp.float32)
        # Mamba-style dt bias init (inverse softplus of dt in [1e-3, 0.1])
        dt0 = jnp.exp(jax.random.uniform(k[5], (D_INNER,), jnp.float32)
                      * (math.log(0.1) - math.log(1e-3)) + math.log(1e-3))
        dt0 = jnp.maximum(dt0, 1e-4)
        b_dt = dt0 + jnp.log(-jnp.expm1(-dt0))
        a_log = jnp.log(jnp.broadcast_to(
            jnp.arange(1, D_STATE + 1, dtype=jnp.float32), (D_INNER, D_STATE)))
        d_skip = jnp.ones((D_INNER,), jnp.float32)
        # out_proj rescaled by 1/sqrt(n_layer) (rescale_prenorm_residual flavor)
        w_out = (0.02 / math.sqrt(N_LAYER)) * jax.random.normal(
            k[6], (D_MODEL, D_INNER), jnp.float32)
        layers.append({
            "norm_w": jnp.ones((D_MODEL,), jnp.float32),
            "norm_b": jnp.zeros((D_MODEL,), jnp.float32),
            "w_in": w_in, "w_conv": w_conv, "b_conv": b_conv,
            "w_xproj": w_xproj, "w_dt": w_dt, "b_dt": b_dt,
            "A_log": a_log, "D": d_skip, "w_out": w_out,
        })
    return {
        "embedding": emb,
        "layers": layers,
        "norm_f_w": jnp.ones((D_MODEL,), jnp.float32),
        "norm_f_b": jnp.zeros((D_MODEL,), jnp.float32),
    }


def prepare_layer(p):
    """Host-side weight fusion / transposition / packing / dtype prep for the kernel."""
    # Compose dt_proj with the dt-rank slice of x_proj:  u @ (Wx_dt^T @ Wdt^T) + b_dt.
    # Kept in f32 (delta feeds exp() in the scan).
    m_dt = p["w_xproj"][:DT_RANK, :].T @ p["w_dt"].T                     # (D_INNER, D_INNER)
    w_xproj_fused = jnp.zeros((D_INNER, XPROJ_PAD), jnp.float32)
    w_xproj_fused = w_xproj_fused.at[:, :D_INNER].set(m_dt)
    w_xproj_fused = w_xproj_fused.at[:, D_INNER:D_INNER + D_STATE].set(
        p["w_xproj"][DT_RANK:DT_RANK + D_STATE, :].T)
    w_xproj_fused = w_xproj_fused.at[:, D_INNER + D_STATE:D_INNER + 2 * D_STATE].set(
        p["w_xproj"][DT_RANK + D_STATE:, :].T)
    # Lane-pack -exp(A_log)^T: packed[i, h*D_INNER + d] = negA_T[h*STATE_SUB + i, d]
    neg_a_t = (-jnp.exp(p["A_log"])).T                                   # (D_STATE, D_INNER)
    neg_a_pack = neg_a_t.reshape(D_STATE // STATE_SUB, STATE_SUB, D_INNER) \
                        .transpose(1, 0, 2).reshape(STATE_SUB, STATE_LANE)
    return {
        "gamma": p["norm_w"][None, :].astype(jnp.float32),
        "beta": p["norm_b"][None, :].astype(jnp.float32),
        "w_in_t": p["w_in"].T.astype(jnp.bfloat16),                      # (32, 128)
        "w_conv_t": p["w_conv"].T.astype(jnp.float32),                   # (4, 64)
        "b_conv": p["b_conv"][None, :].astype(jnp.float32),
        "w_xproj_t": w_xproj_fused.astype(jnp.float32),                  # (64, 128) f32
        "b_dt": p["b_dt"][None, :].astype(jnp.float32),
        "neg_a_pack": neg_a_pack.astype(jnp.float32),                    # (8, 128)
        "d_skip": p["D"][None, :].astype(jnp.float32),
        "w_out_t": p["w_out"].T.astype(jnp.bfloat16),                    # (64, 32)
    }


def prepare_params(raw):
    layer_dicts = [prepare_layer(p) for p in raw["layers"]]
    stacked = {k: jnp.stack([d[k] for d in layer_dicts], axis=0)
               for k in KERNEL_PARAM_ORDER}
    return {
        "embedding": raw["embedding"].astype(jnp.float32),
        "stacked": stacked,
        "gamma_f": raw["norm_f_w"][None, :].astype(jnp.float32),
        "beta_f": raw["norm_f_b"][None, :].astype(jnp.float32),
    }


# ---------------------------------------------------------------------------
# Pure-JAX f32 reference (PyTorch module math on the raw params) for validation
# ---------------------------------------------------------------------------
def ref_block(h, res, p):
    resid = h + res
    mean = resid.mean(-1, keepdims=True)
    var = ((resid - mean) ** 2).mean(-1, keepdims=True)
    hs = (resid - mean) / jnp.sqrt(var + EPS) * p["norm_w"] + p["norm_b"]
    xz = hs @ p["w_in"].T
    x, z = xz[..., :D_INNER], xz[..., D_INNER:]
    Bsz, L, _ = h.shape
    xp = jnp.pad(x, ((0, 0), (D_CONV - 1, 0), (0, 0)))
    acc = jnp.broadcast_to(p["b_conv"], x.shape)
    for k in range(D_CONV):
        acc = acc + xp[:, k:k + L, :] * p["w_conv"][:, k]
    u = jax.nn.silu(acc)
    xproj = u @ p["w_xproj"].T
    dt_in = xproj[..., :DT_RANK]
    Bm = xproj[..., DT_RANK:DT_RANK + D_STATE]
    Cm = xproj[..., DT_RANK + D_STATE:]
    delta = jax.nn.softplus(dt_in @ p["w_dt"].T + p["b_dt"])
    A = -jnp.exp(p["A_log"])                                         # (D_INNER, D_STATE)

    def scan_fn(state, inp):
        d_l, u_l, B_l, C_l = inp
        dA = jnp.exp(d_l[..., None] * A)
        state = dA * state + (d_l * u_l)[..., None] * B_l[:, None, :]
        y = jnp.einsum("bdn,bn->bd", state, C_l)
        return state, y

    xs = (jnp.moveaxis(delta, 1, 0), jnp.moveaxis(u, 1, 0),
          jnp.moveaxis(Bm, 1, 0), jnp.moveaxis(Cm, 1, 0))
    init = jnp.zeros((Bsz, D_INNER, D_STATE), jnp.float32)
    _, ys = lax.scan(scan_fn, init, xs)
    y = jnp.moveaxis(ys, 0, 1)
    y = y + u * p["D"]
    y = y * jax.nn.silu(z)
    return y @ p["w_out"].T, resid


def ref_forward(params, input_ids):
    h = params["embedding"][input_ids]
    res = jnp.zeros_like(h)
    for p in params["layers"]:
        h, res = ref_block(h, res, p)
    x = h + res
    mean = x.mean(-1, keepdims=True)
    var = ((x - mean) ** 2).mean(-1, keepdims=True)
    return (x - mean) / jnp.sqrt(var + EPS) * params["norm_f_w"] + params["norm_f_b"]


# TODO(synk): attention layers (MHA), GatedMLP (d_intermediate>0), RMSNorm and the
# fused_add_norm Triton path are not instantiated by this configuration and are not implemented.

if __name__ == "__main__":
    key = jax.random.PRNGKey(0)
    pkey, ikey = jax.random.split(key)
    raw_params = init_params(pkey)
    kernel_params = prepare_params(raw_params)

    B, L = 2, 8
    input_ids = jax.random.randint(ikey, (B, L), 0, VOCAB)

    out = jax.jit(mixer_model_forward)(kernel_params, input_ids)
    out = jax.block_until_ready(out)

    with jax.default_matmul_precision("highest"):
        ref = jax.jit(ref_forward)(raw_params, input_ids)
    ref = jax.block_until_ready(ref)

    # Kernel uses bf16 in_proj/out_proj operands (f32 accumulate); dt/scan path is f32.
    np.testing.assert_allclose(np.asarray(out), np.asarray(ref), rtol=2e-2, atol=5e-3)
    print("KERNEL_OK")
</pallas_src>

<mosaic_0001>
module attributes {stable_mosaic.version = 11 : i64} {
  func.func @mixer_model_kernel(%arg0: i32, %arg1: memref<2x8xi32, #tpu.memory_space<smem>>, %arg2: memref<64x32xf32, #tpu.memory_space<vmem>>, %arg3: memref<2x1x32xf32, #tpu.memory_space<vmem>>, %arg4: memref<2x1x32xf32, #tpu.memory_space<vmem>>, %arg5: memref<2x32x128xbf16, #tpu.memory_space<vmem>>, %arg6: memref<2x4x64xf32, #tpu.memory_space<vmem>>, %arg7: memref<2x1x64xf32, #tpu.memory_space<vmem>>, %arg8: memref<2x64x128xf32, #tpu.memory_space<vmem>>, %arg9: memref<2x1x64xf32, #tpu.memory_space<vmem>>, %arg10: memref<2x8x128xf32, #tpu.memory_space<vmem>>, %arg11: memref<2x1x64xf32, #tpu.memory_space<vmem>>, %arg12: memref<2x64x32xbf16, #tpu.memory_space<vmem>>, %arg13: memref<1x32xf32, #tpu.memory_space<vmem>>, %arg14: memref<1x32xf32, #tpu.memory_space<vmem>>, %arg15: memref<1x8x32xf32, #tpu.memory_space<vmem>>) attributes {dimension_semantics = [#tpu.dimension_semantics<parallel>], iteration_bounds = array<i64: 2>, scalar_prefetch = 1 : i64, scratch_operands = 0 : i64, tpu.core_type = #tpu.core_type<tc>, window_params = [{pipeline_mode = #tpu.pipeline_mode<synchronous>, transform_indices = @transform_0, window_bounds = array<i64: 64, 32>}, {pipeline_mode = #tpu.pipeline_mode<synchronous>, transform_indices = @transform_1, window_bounds = array<i64: 2, 1, 32>}, {pipeline_mode = #tpu.pipeline_mode<synchronous>, transform_indices = @transform_2, window_bounds = array<i64: 2, 1, 32>}, {pipeline_mode = #tpu.pipeline_mode<synchronous>, transform_indices = @transform_3, window_bounds = array<i64: 2, 32, 128>}, {pipeline_mode = #tpu.pipeline_mode<synchronous>, transform_indices = @transform_4, window_bounds = array<i64: 2, 4, 64>}, {pipeline_mode = #tpu.pipeline_mode<synchronous>, transform_indices = @transform_5, window_bounds = array<i64: 2, 1, 64>}, {pipeline_mode = #tpu.pipeline_mode<synchronous>, transform_indices = @transform_6, window_bounds = array<i64: 2, 64, 128>}, {pipeline_mode = #tpu.pipeline_mode<synchronous>, transform_indices = @transform_7, window_bounds = array<i64: 2, 1, 64>}, {pipeline_mode = #tpu.pipeline_mode<synchronous>, transform_indices = @transform_8, window_bounds = array<i64: 2, 8, 128>}, {pipeline_mode = #tpu.pipeline_mode<synchronous>, transform_indices = @transform_9, window_bounds = array<i64: 2, 1, 64>}, {pipeline_mode = #tpu.pipeline_mode<synchronous>, transform_indices = @transform_10, window_bounds = array<i64: 2, 64, 32>}, {pipeline_mode = #tpu.pipeline_mode<synchronous>, transform_indices = @transform_11, window_bounds = array<i64: 1, 32>}, {pipeline_mode = #tpu.pipeline_mode<synchronous>, transform_indices = @transform_12, window_bounds = array<i64: 1, 32>}, {transform_indices = @transform_13, window_bounds = array<i64: 1, 8, 32>}]} {
    %0 = arith.index_cast %arg0 : i32 to index
    %c0 = arith.constant 0 : index
    %1 = memref.load %arg1[%0, %c0] : memref<2x8xi32, #tpu.memory_space<smem>>
    %2 = arith.index_cast %1 : i32 to index
    %c0_0 = arith.constant 0 : index
    %3 = vector.load %arg2[%2, %c0_0] : memref<64x32xf32, #tpu.memory_space<vmem>>, vector<1x32xf32>
    %4 = arith.index_cast %arg0 : i32 to index
    %c1 = arith.constant 1 : index
    %5 = memref.load %arg1[%4, %c1] : memref<2x8xi32, #tpu.memory_space<smem>>
    %6 = arith.index_cast %5 : i32 to index
    %c0_1 = arith.constant 0 : index
    %7 = vector.load %arg2[%6, %c0_1] : memref<64x32xf32, #tpu.memory_space<vmem>>, vector<1x32xf32>
    %8 = arith.index_cast %arg0 : i32 to index
    %c2 = arith.constant 2 : index
    %9 = memref.load %arg1[%8, %c2] : memref<2x8xi32, #tpu.memory_space<smem>>
    %10 = arith.index_cast %9 : i32 to index
    %c0_2 = arith.constant 0 : index
    %11 = vector.load %arg2[%10, %c0_2] : memref<64x32xf32, #tpu.memory_space<vmem>>, vector<1x32xf32>
    %12 = arith.index_cast %arg0 : i32 to index
    %c3 = arith.constant 3 : index
    %13 = memref.load %arg1[%12, %c3] : memref<2x8xi32, #tpu.memory_space<smem>>
    %14 = arith.index_cast %13 : i32 to index
    %c0_3 = arith.constant 0 : index
    %15 = vector.load %arg2[%14, %c0_3] : memref<64x32xf32, #tpu.memory_space<vmem>>, vector<1x32xf32>
    %16 = arith.index_cast %arg0 : i32 to index
    %c4 = arith.constant 4 : index
    %17 = memref.load %arg1[%16, %c4] : memref<2x8xi32, #tpu.memory_space<smem>>
    %18 = arith.index_cast %17 : i32 to index
    %c0_4 = arith.constant 0 : index
    %19 = vector.load %arg2[%18, %c0_4] : memref<64x32xf32, #tpu.memory_space<vmem>>, vector<1x32xf32>
    %20 = arith.index_cast %arg0 : i32 to index
    %c5 = arith.constant 5 : index
    %21 = memref.load %arg1[%20, %c5] : memref<2x8xi32, #tpu.memory_space<smem>>
    %22 = arith.index_cast %21 : i32 to index
    %c0_5 = arith.constant 0 : index
    %23 = vector.load %arg2[%22, %c0_5] : memref<64x32xf32, #tpu.memory_space<vmem>>, vector<1x32xf32>
    %24 = arith.index_cast %arg0 : i32 to index
    %c6 = arith.constant 6 : index
    %25 = memref.load %arg1[%24, %c6] : memref<2x8xi32, #tpu.memory_space<smem>>
    %26 = arith.index_cast %25 : i32 to index
    %c0_6 = arith.constant 0 : index
    %27 = vector.load %arg2[%26, %c0_6] : memref<64x32xf32, #tpu.memory_space<vmem>>, vector<1x32xf32>
    %28 = arith.index_cast %arg0 : i32 to index
    %c7 = arith.constant 7 : index
    %29 = memref.load %arg1[%28, %c7] : memref<2x8xi32, #tpu.memory_space<smem>>
    %30 = arith.index_cast %29 : i32 to index
    %c0_7 = arith.constant 0 : index
    %31 = vector.load %arg2[%30, %c0_7] : memref<64x32xf32, #tpu.memory_space<vmem>>, vector<1x32xf32>
    %32 = tpu.concatenate %3, %7, %11, %15, %19, %23, %27, %31 in 0 : vector<1x32xf32>, vector<1x32xf32>, vector<1x32xf32>, vector<1x32xf32>, vector<1x32xf32>, vector<1x32xf32>, vector<1x32xf32>, vector<1x32xf32> -> vector<8x32xf32>
    %cst = arith.constant 0.000000e+00 : f32
    %33 = vector.broadcast %cst : f32 to vector<8x32xf32>
    %34 = tpu.iota {dimensions = array<i32: 0>} : vector<8x64xi32>
    %c1_i32 = arith.constant 1 : i32
    %35 = vector.broadcast %c1_i32 : i32 to vector<8x64xi32>
    %36 = arith.cmpi sge, %34, %35 : vector<8x64xi32>
    %c2_i32 = arith.constant 2 : i32
    %37 = vector.broadcast %c2_i32 : i32 to vector<8x64xi32>
    %38 = arith.cmpi sge, %34, %37 : vector<8x64xi32>
    %c3_i32 = arith.constant 3 : i32
    %39 = vector.broadcast %c3_i32 : i32 to vector<8x64xi32>
    %40 = arith.cmpi sge, %34, %39 : vector<8x64xi32>
    %41 = arith.addf %32, %33 : vector<8x32xf32>
    %c0_8 = arith.constant 0 : index
    %c0_9 = arith.constant 0 : index
    %c0_10 = arith.constant 0 : index
    %42 = vector.load %arg3[%c0_8, %c0_9, %c0_10] : memref<2x1x32xf32, #tpu.memory_space<vmem>>, vector<1x1x32xf32>
    %43 = vector.shape_cast %42 : vector<1x1x32xf32> to vector<1x32xf32>
    %c0_11 = arith.constant 0 : index
    %c0_12 = arith.constant 0 : index
    %c0_13 = arith.constant 0 : index
    %44 = vector.load %arg4[%c0_11, %c0_12, %c0_13] : memref<2x1x32xf32, #tpu.memory_space<vmem>>, vector<1x1x32xf32>
    %45 = vector.shape_cast %44 : vector<1x1x32xf32> to vector<1x32xf32>
    %cst_14 = arith.constant dense<0.000000e+00> : vector<8xf32>
    %46 = vector.multi_reduction <add>, %41, %cst_14 [1] : vector<8x32xf32> to vector<8xf32>
    %47 = vector.shape_cast %46 : vector<8xf32> to vector<8x1xf32>
    %cst_15 = arith.constant 3.200000e+01 : f32
    %48 = vector.broadcast %cst_15 : f32 to vector<8x1xf32>
    %49 = arith.divf %47, %48 : vector<8x1xf32>
    %50 = vector.broadcast %49 : vector<8x1xf32> to vector<8x32xf32>
    %51 = arith.subf %41, %50 : vector<8x32xf32>
    %52 = arith.mulf %51, %51 : vector<8x32xf32>
    %cst_16 = arith.constant dense<0.000000e+00> : vector<8xf32>
    %53 = vector.multi_reduction <add>, %52, %cst_16 [1] : vector<8x32xf32> to vector<8xf32>
    %54 = vector.shape_cast %53 : vector<8xf32> to vector<8x1xf32>
    %cst_17 = arith.constant 3.200000e+01 : f32
    %55 = vector.broadcast %cst_17 : f32 to vector<8x1xf32>
    %56 = arith.divf %54, %55 : vector<8x1xf32>
    %57 = vector.broadcast %49 : vector<8x1xf32> to vector<8x32xf32>
    %58 = arith.subf %41, %57 : vector<8x32xf32>
    %cst_18 = arith.constant 9.99999974E-6 : f32
    %59 = vector.broadcast %cst_18 : f32 to vector<8x1xf32>
    %60 = arith.addf %56, %59 : vector<8x1xf32>
    %61 = math.rsqrt %60 : vector<8x1xf32>
    %62 = vector.broadcast %61 : vector<8x1xf32> to vector<8x32xf32>
    %63 = arith.mulf %58, %62 : vector<8x32xf32>
    %64 = vector.broadcast %43 : vector<1x32xf32> to vector<8x32xf32>
    %65 = arith.mulf %63, %64 : vector<8x32xf32>
    %66 = vector.broadcast %45 : vector<1x32xf32> to vector<8x32xf32>
    %67 = arith.addf %65, %66 : vector<8x32xf32>
    %68 = arith.truncf %67 : vector<8x32xf32> to vector<8x32xbf16>
    %c0_19 = arith.constant 0 : index
    %c0_20 = arith.constant 0 : index
    %c0_21 = arith.constant 0 : index
    %69 = vector.load %arg5[%c0_19, %c0_20, %c0_21] : memref<2x32x128xbf16, #tpu.memory_space<vmem>>, vector<1x32x128xbf16>
    %70 = vector.shape_cast %69 : vector<1x32x128xbf16> to vector<32x128xbf16>
    %cst_22 = arith.constant dense<0.000000e+00> : vector<8x128xf32>
    %71 = tpu.matmul %68, %70, %cst_22 {dimension_numbers = #tpu.dot_dimension_numbers<[1], [0], [0], [1], [0, 0, 1, 1], [], []>} : vector<8x32xbf16>, vector<32x128xbf16>, vector<8x128xf32> -> vector<8x128xf32>
    %72 = vector.extract_strided_slice %71 {offsets = [0, 0], sizes = [8, 64], strides = [1, 1]} : vector<8x128xf32> to vector<8x64xf32>
    %73 = vector.extract_strided_slice %71 {offsets = [0, 64], sizes = [8, 64], strides = [1, 1]} : vector<8x128xf32> to vector<8x64xf32>
    %c0_23 = arith.constant 0 : index
    %c0_24 = arith.constant 0 : index
    %c0_25 = arith.constant 0 : index
    %74 = vector.load %arg6[%c0_23, %c0_24, %c0_25] : memref<2x4x64xf32, #tpu.memory_space<vmem>>, vector<1x4x64xf32>
    %75 = vector.shape_cast %74 : vector<1x4x64xf32> to vector<4x64xf32>
    %c1_i32_26 = arith.constant 1 : i32
    %76 = tpu.dynamic_rotate %72 by %c1_i32_26 dim 0 : vector<8x64xf32>, i32 -> vector<8x64xf32>
    %cst_27 = arith.constant 0.000000e+00 : f32
    %77 = vector.broadcast %cst_27 : f32 to vector<8x64xf32>
    %78 = arith.select %36, %76, %77 : vector<8x64xi1>, vector<8x64xf32>
    %c2_i32_28 = arith.constant 2 : i32
    %79 = tpu.dynamic_rotate %72 by %c2_i32_28 dim 0 : vector<8x64xf32>, i32 -> vector<8x64xf32>
    %cst_29 = arith.constant 0.000000e+00 : f32
    %80 = vector.broadcast %cst_29 : f32 to vector<8x64xf32>
    %81 = arith.select %38, %79, %80 : vector<8x64xi1>, vector<8x64xf32>
    %c3_i32_30 = arith.constant 3 : i32
    %82 = tpu.dynamic_rotate %72 by %c3_i32_30 dim 0 : vector<8x64xf32>, i32 -> vector<8x64xf32>
    %cst_31 = arith.constant 0.000000e+00 : f32
    %83 = vector.broadcast %cst_31 : f32 to vector<8x64xf32>
    %84 = arith.select %40, %82, %83 : vector<8x64xi1>, vector<8x64xf32>
    %c0_32 = arith.constant 0 : index
    %c0_33 = arith.constant 0 : index
    %c0_34 = arith.constant 0 : index
    %85 = vector.load %arg7[%c0_32, %c0_33, %c0_34] : memref<2x1x64xf32, #tpu.memory_space<vmem>>, vector<1x1x64xf32>
    %86 = vector.shape_cast %85 : vector<1x1x64xf32> to vector<1x64xf32>
    %87 = vector.shape_cast %86 : vector<1x64xf32> to vector<1x64xf32>
    %88 = vector.broadcast %87 : vector<1x64xf32> to vector<8x64xf32>
    %89 = vector.extract_strided_slice %75 {offsets = [3, 0], sizes = [1, 64], strides = [1, 1]} : vector<4x64xf32> to vector<1x64xf32>
    %90 = vector.broadcast %89 : vector<1x64xf32> to vector<8x64xf32>
    %91 = arith.mulf %72, %90 : vector<8x64xf32>
    %92 = arith.addf %88, %91 : vector<8x64xf32>
    %93 = vector.extract_strided_slice %75 {offsets = [2, 0], sizes = [1, 64], strides = [1, 1]} : vector<4x64xf32> to vector<1x64xf32>
    %94 = vector.broadcast %93 : vector<1x64xf32> to vector<8x64xf32>
    %95 = arith.mulf %78, %94 : vector<8x64xf32>
    %96 = arith.addf %92, %95 : vector<8x64xf32>
    %97 = vector.extract_strided_slice %75 {offsets = [1, 0], sizes = [1, 64], strides = [1, 1]} : vector<4x64xf32> to vector<1x64xf32>
    %98 = vector.broadcast %97 : vector<1x64xf32> to vector<8x64xf32>
    %99 = arith.mulf %81, %98 : vector<8x64xf32>
    %100 = arith.addf %96, %99 : vector<8x64xf32>
    %101 = vector.extract_strided_slice %75 {offsets = [0, 0], sizes = [1, 64], strides = [1, 1]} : vector<4x64xf32> to vector<1x64xf32>
    %102 = vector.broadcast %101 : vector<1x64xf32> to vector<8x64xf32>
    %103 = arith.mulf %84, %102 : vector<8x64xf32>
    %104 = arith.addf %100, %103 : vector<8x64xf32>
    %cst_35 = arith.constant 0.000000e+00 : f32
    %105 = vector.broadcast %cst_35 : f32 to vector<8x64xf32>
    %106 = arith.subf %105, %104 : vector<8x64xf32>
    %107 = math.exp %106 : vector<8x64xf32>
    %cst_36 = arith.constant 1.000000e+00 : f32
    %108 = vector.broadcast %cst_36 : f32 to vector<8x64xf32>
    %109 = arith.addf %108, %107 : vector<8x64xf32>
    %cst_37 = arith.constant 1.000000e+00 : f32
    %110 = vector.broadcast %cst_37 : f32 to vector<8x64xf32>
    %111 = arith.divf %110, %109 : vector<8x64xf32>
    %112 = arith.mulf %104, %111 : vector<8x64xf32>
    %c0_38 = arith.constant 0 : index
    %c0_39 = arith.constant 0 : index
    %c0_40 = arith.constant 0 : index
    %113 = vector.load %arg8[%c0_38, %c0_39, %c0_40] : memref<2x64x128xf32, #tpu.memory_space<vmem>>, vector<1x64x128xf32>
    %114 = vector.shape_cast %113 : vector<1x64x128xf32> to vector<64x128xf32>
    %cst_41 = arith.constant dense<0.000000e+00> : vector<8x128xf32>
    %115 = tpu.matmul %112, %114, %cst_41 {dimension_numbers = #tpu.dot_dimension_numbers<[1], [0], [0], [1], [0, 0, 1, 1], [], []>} : vector<8x64xf32>, vector<64x128xf32>, vector<8x128xf32> -> vector<8x128xf32>
    %116 = vector.extract_strided_slice %115 {offsets = [0, 0], sizes = [8, 64], strides = [1, 1]} : vector<8x128xf32> to vector<8x64xf32>
    %c0_42 = arith.constant 0 : index
    %c0_43 = arith.constant 0 : index
    %c0_44 = arith.constant 0 : index
    %117 = vector.load %arg9[%c0_42, %c0_43, %c0_44] : memref<2x1x64xf32, #tpu.memory_space<vmem>>, vector<1x1x64xf32>
    %118 = vector.shape_cast %117 : vector<1x1x64xf32> to vector<1x64xf32>
    %119 = vector.broadcast %118 : vector<1x64xf32> to vector<8x64xf32>
    %120 = arith.addf %116, %119 : vector<8x64xf32>
    %cst_45 = arith.constant 2.000000e+01 : f32
    %121 = vector.broadcast %cst_45 : f32 to vector<8x64xf32>
    %122 = arith.cmpf ogt, %120, %121 : vector<8x64xf32>
    %123 = math.exp %120 : vector<8x64xf32>
    %124 = math.log1p %123 : vector<8x64xf32>
    %125 = arith.select %122, %120, %124 : vector<8x64xi1>, vector<8x64xf32>
    %126 = vector.extract_strided_slice %115 {offsets = [0, 64], sizes = [8, 16], strides = [1, 1]} : vector<8x128xf32> to vector<8x16xf32>
    %127 = vector.extract_strided_slice %115 {offsets = [0, 80], sizes = [8, 16], strides = [1, 1]} : vector<8x128xf32> to vector<8x16xf32>
    %128 = arith.mulf %125, %112 : vector<8x64xf32>
    %129 = tpu.concatenate %125, %125 in 1 : vector<8x64xf32>, vector<8x64xf32> -> vector<8x128xf32>
    %130 = tpu.concatenate %128, %128 in 1 : vector<8x64xf32>, vector<8x64xf32> -> vector<8x128xf32>
    %131 = vector.shape_cast %129 : vector<8x128xf32> to vector<8x1x128xf32>
    %c0_46 = arith.constant 0 : index
    %c0_47 = arith.constant 0 : index
    %c0_48 = arith.constant 0 : index
    %132 = vector.load %arg10[%c0_46, %c0_47, %c0_48] : memref<2x8x128xf32, #tpu.memory_space<vmem>>, vector<1x8x128xf32>
    %133 = vector.shape_cast %132 : vector<1x8x128xf32> to vector<8x128xf32>
    %134 = vector.shape_cast %133 : vector<8x128xf32> to vector<1x8x128xf32>
    %135 = vector.broadcast %131 : vector<8x1x128xf32> to vector<8x8x128xf32>
    %136 = vector.broadcast %134 : vector<1x8x128xf32> to vector<8x8x128xf32>
    %137 = arith.mulf %135, %136 : vector<8x8x128xf32>
    %138 = math.exp %137 : vector<8x8x128xf32>
    %139 = vector.extract_strided_slice %126 {offsets = [0, 0], sizes = [8, 8], strides = [1, 1]} : vector<8x16xf32> to vector<8x8xf32>
    %140 = vector.shape_cast %139 : vector<8x8xf32> to vector<8x8x1xf32>
    %141 = vector.shape_cast %140 : vector<8x8x1xf32> to vector<8x8x1xf32>
    %142 = vector.broadcast %141 : vector<8x8x1xf32> to vector<8x8x64xf32>
    %143 = vector.extract_strided_slice %126 {offsets = [0, 8], sizes = [8, 8], strides = [1, 1]} : vector<8x16xf32> to vector<8x8xf32>
    %144 = vector.shape_cast %143 : vector<8x8xf32> to vector<8x8x1xf32>
    %145 = vector.shape_cast %144 : vector<8x8x1xf32> to vector<8x8x1xf32>
    %146 = vector.broadcast %145 : vector<8x8x1xf32> to vector<8x8x64xf32>
    %147 = tpu.concatenate %142, %146 in 2 : vector<8x8x64xf32>, vector<8x8x64xf32> -> vector<8x8x128xf32>
    %148 = vector.shape_cast %130 : vector<8x128xf32> to vector<8x1x128xf32>
    %149 = vector.broadcast %148 : vector<8x1x128xf32> to vector<8x8x128xf32>
    %150 = arith.mulf %149, %147 : vector<8x8x128xf32>
    %151 = vector.extract_strided_slice %127 {offsets = [0, 0], sizes = [8, 8], strides = [1, 1]} : vector<8x16xf32> to vector<8x8xf32>
    %152 = vector.shape_cast %151 : vector<8x8xf32> to vector<8x8x1xf32>
    %153 = vector.shape_cast %152 : vector<8x8x1xf32> to vector<8x8x1xf32>
    %154 = vector.broadcast %153 : vector<8x8x1xf32> to vector<8x8x64xf32>
    %155 = vector.extract_strided_slice %127 {offsets = [0, 8], sizes = [8, 8], strides = [1, 1]} : vector<8x16xf32> to vector<8x8xf32>
    %156 = vector.shape_cast %155 : vector<8x8xf32> to vector<8x8x1xf32>
    %157 = vector.shape_cast %156 : vector<8x8x1xf32> to vector<8x8x1xf32>
    %158 = vector.broadcast %157 : vector<8x8x1xf32> to vector<8x8x64xf32>
    %159 = tpu.concatenate %154, %158 in 2 : vector<8x8x64xf32>, vector<8x8x64xf32> -> vector<8x8x128xf32>
    %cst_49 = arith.constant 0.000000e+00 : f32
    %160 = vector.broadcast %cst_49 : f32 to vector<8x128xf32>
    %161 = vector.extract_strided_slice %138 {offsets = [0, 0, 0], sizes = [1, 8, 128], strides = [1, 1, 1]} : vector<8x8x128xf32> to vector<1x8x128xf32>
    %162 = vector.shape_cast %161 : vector<1x8x128xf32> to vector<8x128xf32>
    %163 = arith.mulf %162, %160 : vector<8x128xf32>
    %164 = vector.extract_strided_slice %150 {offsets = [0, 0, 0], sizes = [1, 8, 128], strides = [1, 1, 1]} : vector<8x8x128xf32> to vector<1x8x128xf32>
    %165 = vector.shape_cast %164 : vector<1x8x128xf32> to vector<8x128xf32>
    %166 = arith.addf %163, %165 : vector<8x128xf32>
    %167 = vector.extract_strided_slice %138 {offsets = [1, 0, 0], sizes = [1, 8, 128], strides = [1, 1, 1]} : vector<8x8x128xf32> to vector<1x8x128xf32>
    %168 = vector.shape_cast %167 : vector<1x8x128xf32> to vector<8x128xf32>
    %169 = arith.mulf %168, %166 : vector<8x128xf32>
    %170 = vector.extract_strided_slice %150 {offsets = [1, 0, 0], sizes = [1, 8, 128], strides = [1, 1, 1]} : vector<8x8x128xf32> to vector<1x8x128xf32>
    %171 = vector.shape_cast %170 : vector<1x8x128xf32> to vector<8x128xf32>
    %172 = arith.addf %169, %171 : vector<8x128xf32>
    %173 = vector.extract_strided_slice %138 {offsets = [2, 0, 0], sizes = [1, 8, 128], strides = [1, 1, 1]} : vector<8x8x128xf32> to vector<1x8x128xf32>
    %174 = vector.shape_cast %173 : vector<1x8x128xf32> to vector<8x128xf32>
    %175 = arith.mulf %174, %172 : vector<8x128xf32>
    %176 = vector.extract_strided_slice %150 {offsets = [2, 0, 0], sizes = [1, 8, 128], strides = [1, 1, 1]} : vector<8x8x128xf32> to vector<1x8x128xf32>
    %177 = vector.shape_cast %176 : vector<1x8x128xf32> to vector<8x128xf32>
    %178 = arith.addf %175, %177 : vector<8x128xf32>
    %179 = vector.extract_strided_slice %138 {offsets = [3, 0, 0], sizes = [1, 8, 128], strides = [1, 1, 1]} : vector<8x8x128xf32> to vector<1x8x128xf32>
    %180 = vector.shape_cast %179 : vector<1x8x128xf32> to vector<8x128xf32>
    %181 = arith.mulf %180, %178 : vector<8x128xf32>
    %182 = vector.extract_strided_slice %150 {offsets = [3, 0, 0], sizes = [1, 8, 128], strides = [1, 1, 1]} : vector<8x8x128xf32> to vector<1x8x128xf32>
    %183 = vector.shape_cast %182 : vector<1x8x128xf32> to vector<8x128xf32>
    %184 = arith.addf %181, %183 : vector<8x128xf32>
    %185 = vector.extract_strided_slice %138 {offsets = [4, 0, 0], sizes = [1, 8, 128], strides = [1, 1, 1]} : vector<8x8x128xf32> to vector<1x8x128xf32>
    %186 = vector.shape_cast %185 : vector<1x8x128xf32> to vector<8x128xf32>
    %187 = arith.mulf %186, %184 : vector<8x128xf32>
    %188 = vector.extract_strided_slice %150 {offsets = [4, 0, 0], sizes = [1, 8, 128], strides = [1, 1, 1]} : vector<8x8x128xf32> to vector<1x8x128xf32>
    %189 = vector.shape_cast %188 : vector<1x8x128xf32> to vector<8x128xf32>
    %190 = arith.addf %187, %189 : vector<8x128xf32>
    %191 = vector.extract_strided_slice %138 {offsets = [5, 0, 0], sizes = [1, 8, 128], strides = [1, 1, 1]} : vector<8x8x128xf32> to vector<1x8x128xf32>
    %192 = vector.shape_cast %191 : vector<1x8x128xf32> to vector<8x128xf32>
    %193 = arith.mulf %192, %190 : vector<8x128xf32>
    %194 = vector.extract_strided_slice %150 {offsets = [5, 0, 0], sizes = [1, 8, 128], strides = [1, 1, 1]} : vector<8x8x128xf32> to vector<1x8x128xf32>
    %195 = vector.shape_cast %194 : vector<1x8x128xf32> to vector<8x128xf32>
    %196 = arith.addf %193, %195 : vector<8x128xf32>
    %197 = vector.extract_strided_slice %138 {offsets = [6, 0, 0], sizes = [1, 8, 128], strides = [1, 1, 1]} : vector<8x8x128xf32> to vector<1x8x128xf32>
    %198 = vector.shape_cast %197 : vector<1x8x128xf32> to vector<8x128xf32>
    %199 = arith.mulf %198, %196 : vector<8x128xf32>
    %200 = vector.extract_strided_slice %150 {offsets = [6, 0, 0], sizes = [1, 8, 128], strides = [1, 1, 1]} : vector<8x8x128xf32> to vector<1x8x128xf32>
    %201 = vector.shape_cast %200 : vector<1x8x128xf32> to vector<8x128xf32>
    %202 = arith.addf %199, %201 : vector<8x128xf32>
    %203 = vector.extract_strided_slice %138 {offsets = [7, 0, 0], sizes = [1, 8, 128], strides = [1, 1, 1]} : vector<8x8x128xf32> to vector<1x8x128xf32>
    %204 = vector.shape_cast %203 : vector<1x8x128xf32> to vector<8x128xf32>
    %205 = arith.mulf %204, %202 : vector<8x128xf32>
    %206 = vector.extract_strided_slice %150 {offsets = [7, 0, 0], sizes = [1, 8, 128], strides = [1, 1, 1]} : vector<8x8x128xf32> to vector<1x8x128xf32>
    %207 = vector.shape_cast %206 : vector<1x8x128xf32> to vector<8x128xf32>
    %208 = arith.addf %205, %207 : vector<8x128xf32>
    %209 = vector.shape_cast %166 : vector<8x128xf32> to vector<1x8x128xf32>
    %210 = vector.shape_cast %172 : vector<8x128xf32> to vector<1x8x128xf32>
    %211 = vector.shape_cast %178 : vector<8x128xf32> to vector<1x8x128xf32>
    %212 = vector.shape_cast %184 : vector<8x128xf32> to vector<1x8x128xf32>
    %213 = vector.shape_cast %190 : vector<8x128xf32> to vector<1x8x128xf32>
    %214 = vector.shape_cast %196 : vector<8x128xf32> to vector<1x8x128xf32>
    %215 = vector.shape_cast %202 : vector<8x128xf32> to vector<1x8x128xf32>
    %216 = vector.shape_cast %208 : vector<8x128xf32> to vector<1x8x128xf32>
    %217 = tpu.concatenate %209, %210, %211, %212, %213, %214, %215, %216 in 0 : vector<1x8x128xf32>, vector<1x8x128xf32>, vector<1x8x128xf32>, vector<1x8x128xf32>, vector<1x8x128xf32>, vector<1x8x128xf32>, vector<1x8x128xf32>, vector<1x8x128xf32> -> vector<8x8x128xf32>
    %218 = arith.mulf %217, %159 : vector<8x8x128xf32>
    %cst_50 = arith.constant dense<0.000000e+00> : vector<8x128xf32>
    %219 = vector.multi_reduction <add>, %218, %cst_50 [1] : vector<8x8x128xf32> to vector<8x128xf32>
    %220 = vector.extract_strided_slice %219 {offsets = [0, 0], sizes = [8, 64], strides = [1, 1]} : vector<8x128xf32> to vector<8x64xf32>
    %221 = vector.extract_strided_slice %219 {offsets = [0, 64], sizes = [8, 64], strides = [1, 1]} : vector<8x128xf32> to vector<8x64xf32>
    %222 = arith.addf %220, %221 : vector<8x64xf32>
    %c0_51 = arith.constant 0 : index
    %c0_52 = arith.constant 0 : index
    %c0_53 = arith.constant 0 : index
    %223 = vector.load %arg11[%c0_51, %c0_52, %c0_53] : memref<2x1x64xf32, #tpu.memory_space<vmem>>, vector<1x1x64xf32>
    %224 = vector.shape_cast %223 : vector<1x1x64xf32> to vector<1x64xf32>
    %225 = vector.broadcast %224 : vector<1x64xf32> to vector<8x64xf32>
    %226 = arith.mulf %112, %225 : vector<8x64xf32>
    %227 = arith.addf %222, %226 : vector<8x64xf32>
    %cst_54 = arith.constant 0.000000e+00 : f32
    %228 = vector.broadcast %cst_54 : f32 to vector<8x64xf32>
    %229 = arith.subf %228, %73 : vector<8x64xf32>
    %230 = math.exp %229 : vector<8x64xf32>
    %cst_55 = arith.constant 1.000000e+00 : f32
    %231 = vector.broadcast %cst_55 : f32 to vector<8x64xf32>
    %232 = arith.addf %231, %230 : vector<8x64xf32>
    %cst_56 = arith.constant 1.000000e+00 : f32
    %233 = vector.broadcast %cst_56 : f32 to vector<8x64xf32>
    %234 = arith.divf %233, %232 : vector<8x64xf32>
    %235 = arith.mulf %73, %234 : vector<8x64xf32>
    %236 = arith.mulf %227, %235 : vector<8x64xf32>
    %237 = arith.truncf %236 : vector<8x64xf32> to vector<8x64xbf16>
    %c0_57 = arith.constant 0 : index
    %c0_58 = arith.constant 0 : index
    %c0_59 = arith.constant 0 : index
    %238 = vector.load %arg12[%c0_57, %c0_58, %c0_59] : memref<2x64x32xbf16, #tpu.memory_space<vmem>>, vector<1x64x32xbf16>
    %239 = vector.shape_cast %238 : vector<1x64x32xbf16> to vector<64x32xbf16>
    %cst_60 = arith.constant dense<0.000000e+00> : vector<8x32xf32>
    %240 = tpu.matmul %237, %239, %cst_60 {dimension_numbers = #tpu.dot_dimension_numbers<[1], [0], [0], [1], [0, 0, 1, 1], [], []>} : vector<8x64xbf16>, vector<64x32xbf16>, vector<8x32xf32> -> vector<8x32xf32>
    %241 = arith.addf %240, %41 : vector<8x32xf32>
    %c1_61 = arith.constant 1 : index
    %c0_62 = arith.constant 0 : index
    %c0_63 = arith.constant 0 : index
    %242 = vector.load %arg3[%c1_61, %c0_62, %c0_63] : memref<2x1x32xf32, #tpu.memory_space<vmem>>, vector<1x1x32xf32>
    %243 = vector.shape_cast %242 : vector<1x1x32xf32> to vector<1x32xf32>
    %c1_64 = arith.constant 1 : index
    %c0_65 = arith.constant 0 : index
    %c0_66 = arith.constant 0 : index
    %244 = vector.load %arg4[%c1_64, %c0_65, %c0_66] : memref<2x1x32xf32, #tpu.memory_space<vmem>>, vector<1x1x32xf32>
    %245 = vector.shape_cast %244 : vector<1x1x32xf32> to vector<1x32xf32>
    %cst_67 = arith.constant dense<0.000000e+00> : vector<8xf32>
    %246 = vector.multi_reduction <add>, %241, %cst_67 [1] : vector<8x32xf32> to vector<8xf32>
    %247 = vector.shape_cast %246 : vector<8xf32> to vector<8x1xf32>
    %cst_68 = arith.constant 3.200000e+01 : f32
    %248 = vector.broadcast %cst_68 : f32 to vector<8x1xf32>
    %249 = arith.divf %247, %248 : vector<8x1xf32>
    %250 = vector.broadcast %249 : vector<8x1xf32> to vector<8x32xf32>
    %251 = arith.subf %241, %250 : vector<8x32xf32>
    %252 = arith.mulf %251, %251 : vector<8x32xf32>
    %cst_69 = arith.constant dense<0.000000e+00> : vector<8xf32>
    %253 = vector.multi_reduction <add>, %252, %cst_69 [1] : vector<8x32xf32> to vector<8xf32>
    %254 = vector.shape_cast %253 : vector<8xf32> to vector<8x1xf32>
    %cst_70 = arith.constant 3.200000e+01 : f32
    %255 = vector.broadcast %cst_70 : f32 to vector<8x1xf32>
    %256 = arith.divf %254, %255 : vector<8x1xf32>
    %257 = vector.broadcast %249 : vector<8x1xf32> to vector<8x32xf32>
    %258 = arith.subf %241, %257 : vector<8x32xf32>
    %cst_71 = arith.constant 9.99999974E-6 : f32
    %259 = vector.broadcast %cst_71 : f32 to vector<8x1xf32>
    %260 = arith.addf %256, %259 : vector<8x1xf32>
    %261 = math.rsqrt %260 : vector<8x1xf32>
    %262 = vector.broadcast %261 : vector<8x1xf32> to vector<8x32xf32>
    %263 = arith.mulf %258, %262 : vector<8x32xf32>
    %264 = vector.broadcast %243 : vector<1x32xf32> to vector<8x32xf32>
    %265 = arith.mulf %263, %264 : vector<8x32xf32>
    %266 = vector.broadcast %245 : vector<1x32xf32> to vector<8x32xf32>
    %267 = arith.addf %265, %266 : vector<8x32xf32>
    %268 = arith.truncf %267 : vector<8x32xf32> to vector<8x32xbf16>
    %c1_72 = arith.constant 1 : index
    %c0_73 = arith.constant 0 : index
    %c0_74 = arith.constant 0 : index
    %269 = vector.load %arg5[%c1_72, %c0_73, %c0_74] : memref<2x32x128xbf16, #tpu.memory_space<vmem>>, vector<1x32x128xbf16>
    %270 = vector.shape_cast %269 : vector<1x32x128xbf16> to vector<32x128xbf16>
    %cst_75 = arith.constant dense<0.000000e+00> : vector<8x128xf32>
    %271 = tpu.matmul %268, %270, %cst_75 {dimension_numbers = #tpu.dot_dimension_numbers<[1], [0], [0], [1], [0, 0, 1, 1], [], []>} : vector<8x32xbf16>, vector<32x128xbf16>, vector<8x128xf32> -> vector<8x128xf32>
    %272 = vector.extract_strided_slice %271 {offsets = [0, 0], sizes = [8, 64], strides = [1, 1]} : vector<8x128xf32> to vector<8x64xf32>
    %273 = vector.extract_strided_slice %271 {offsets = [0, 64], sizes = [8, 64], strides = [1, 1]} : vector<8x128xf32> to vector<8x64xf32>
    %c1_76 = arith.constant 1 : index
    %c0_77 = arith.constant 0 : index
    %c0_78 = arith.constant 0 : index
    %274 = vector.load %arg6[%c1_76, %c0_77, %c0_78] : memref<2x4x64xf32, #tpu.memory_space<vmem>>, vector<1x4x64xf32>
    %275 = vector.shape_cast %274 : vector<1x4x64xf32> to vector<4x64xf32>
    %c1_i32_79 = arith.constant 1 : i32
    %276 = tpu.dynamic_rotate %272 by %c1_i32_79 dim 0 : vector<8x64xf32>, i32 -> vector<8x64xf32>
    %cst_80 = arith.constant 0.000000e+00 : f32
    %277 = vector.broadcast %cst_80 : f32 to vector<8x64xf32>
    %278 = arith.select %36, %276, %277 : vector<8x64xi1>, vector<8x64xf32>
    %c2_i32_81 = arith.constant 2 : i32
    %279 = tpu.dynamic_rotate %272 by %c2_i32_81 dim 0 : vector<8x64xf32>, i32 -> vector<8x64xf32>
    %cst_82 = arith.constant 0.000000e+00 : f32
    %280 = vector.broadcast %cst_82 : f32 to vector<8x64xf32>
    %281 = arith.select %38, %279, %280 : vector<8x64xi1>, vector<8x64xf32>
    %c3_i32_83 = arith.constant 3 : i32
    %282 = tpu.dynamic_rotate %272 by %c3_i32_83 dim 0 : vector<8x64xf32>, i32 -> vector<8x64xf32>
    %cst_84 = arith.constant 0.000000e+00 : f32
    %283 = vector.broadcast %cst_84 : f32 to vector<8x64xf32>
    %284 = arith.select %40, %282, %283 : vector<8x64xi1>, vector<8x64xf32>
    %c1_85 = arith.constant 1 : index
    %c0_86 = arith.constant 0 : index
    %c0_87 = arith.constant 0 : index
    %285 = vector.load %arg7[%c1_85, %c0_86, %c0_87] : memref<2x1x64xf32, #tpu.memory_space<vmem>>, vector<1x1x64xf32>
    %286 = vector.shape_cast %285 : vector<1x1x64xf32> to vector<1x64xf32>
    %287 = vector.shape_cast %286 : vector<1x64xf32> to vector<1x64xf32>
    %288 = vector.broadcast %287 : vector<1x64xf32> to vector<8x64xf32>
    %289 = vector.extract_strided_slice %275 {offsets = [3, 0], sizes = [1, 64], strides = [1, 1]} : vector<4x64xf32> to vector<1x64xf32>
    %290 = vector.broadcast %289 : vector<1x64xf32> to vector<8x64xf32>
    %291 = arith.mulf %272, %290 : vector<8x64xf32>
    %292 = arith.addf %288, %291 : vector<8x64xf32>
    %293 = vector.extract_strided_slice %275 {offsets = [2, 0], sizes = [1, 64], strides = [1, 1]} : vector<4x64xf32> to vector<1x64xf32>
    %294 = vector.broadcast %293 : vector<1x64xf32> to vector<8x64xf32>
    %295 = arith.mulf %278, %294 : vector<8x64xf32>
    %296 = arith.addf %292, %295 : vector<8x64xf32>
    %297 = vector.extract_strided_slice %275 {offsets = [1, 0], sizes = [1, 64], strides = [1, 1]} : vector<4x64xf32> to vector<1x64xf32>
    %298 = vector.broadcast %297 : vector<1x64xf32> to vector<8x64xf32>
    %299 = arith.mulf %281, %298 : vector<8x64xf32>
    %300 = arith.addf %296, %299 : vector<8x64xf32>
    %301 = vector.extract_strided_slice %275 {offsets = [0, 0], sizes = [1, 64], strides = [1, 1]} : vector<4x64xf32> to vector<1x64xf32>
    %302 = vector.broadcast %301 : vector<1x64xf32> to vector<8x64xf32>
    %303 = arith.mulf %284, %302 : vector<8x64xf32>
    %304 = arith.addf %300, %303 : vector<8x64xf32>
    %cst_88 = arith.constant 0.000000e+00 : f32
    %305 = vector.broadcast %cst_88 : f32 to vector<8x64xf32>
    %306 = arith.subf %305, %304 : vector<8x64xf32>
    %307 = math.exp %306 : vector<8x64xf32>
    %cst_89 = arith.constant 1.000000e+00 : f32
    %308 = vector.broadcast %cst_89 : f32 to vector<8x64xf32>
    %309 = arith.addf %308, %307 : vector<8x64xf32>
    %cst_90 = arith.constant 1.000000e+00 : f32
    %310 = vector.broadcast %cst_90 : f32 to vector<8x64xf32>
    %311 = arith.divf %310, %309 : vector<8x64xf32>
    %312 = arith.mulf %304, %311 : vector<8x64xf32>
    %c1_91 = arith.constant 1 : index
    %c0_92 = arith.constant 0 : index
    %c0_93 = arith.constant 0 : index
    %313 = vector.load %arg8[%c1_91, %c0_92, %c0_93] : memref<2x64x128xf32, #tpu.memory_space<vmem>>, vector<1x64x128xf32>
    %314 = vector.shape_cast %313 : vector<1x64x128xf32> to vector<64x128xf32>
    %cst_94 = arith.constant dense<0.000000e+00> : vector<8x128xf32>
    %315 = tpu.matmul %312, %314, %cst_94 {dimension_numbers = #tpu.dot_dimension_numbers<[1], [0], [0], [1], [0, 0, 1, 1], [], []>} : vector<8x64xf32>, vector<64x128xf32>, vector<8x128xf32> -> vector<8x128xf32>
    %316 = vector.extract_strided_slice %315 {offsets = [0, 0], sizes = [8, 64], strides = [1, 1]} : vector<8x128xf32> to vector<8x64xf32>
    %c1_95 = arith.constant 1 : index
    %c0_96 = arith.constant 0 : index
    %c0_97 = arith.constant 0 : index
    %317 = vector.load %arg9[%c1_95, %c0_96, %c0_97] : memref<2x1x64xf32, #tpu.memory_space<vmem>>, vector<1x1x64xf32>
    %318 = vector.shape_cast %317 : vector<1x1x64xf32> to vector<1x64xf32>
    %319 = vector.broadcast %318 : vector<1x64xf32> to vector<8x64xf32>
    %320 = arith.addf %316, %319 : vector<8x64xf32>
    %cst_98 = arith.constant 2.000000e+01 : f32
    %321 = vector.broadcast %cst_98 : f32 to vector<8x64xf32>
    %322 = arith.cmpf ogt, %320, %321 : vector<8x64xf32>
    %323 = math.exp %320 : vector<8x64xf32>
    %324 = math.log1p %323 : vector<8x64xf32>
    %325 = arith.select %322, %320, %324 : vector<8x64xi1>, vector<8x64xf32>
    %326 = vector.extract_strided_slice %315 {offsets = [0, 64], sizes = [8, 16], strides = [1, 1]} : vector<8x128xf32> to vector<8x16xf32>
    %327 = vector.extract_strided_slice %315 {offsets = [0, 80], sizes = [8, 16], strides = [1, 1]} : vector<8x128xf32> to vector<8x16xf32>
    %328 = arith.mulf %325, %312 : vector<8x64xf32>
    %329 = tpu.concatenate %325, %325 in 1 : vector<8x64xf32>, vector<8x64xf32> -> vector<8x128xf32>
    %330 = tpu.concatenate %328, %328 in 1 : vector<8x64xf32>, vector<8x64xf32> -> vector<8x128xf32>
    %331 = vector.shape_cast %329 : vector<8x128xf32> to vector<8x1x128xf32>
    %c1_99 = arith.constant 1 : index
    %c0_100 = arith.constant 0 : index
    %c0_101 = arith.constant 0 : index
    %332 = vector.load %arg10[%c1_99, %c0_100, %c0_101] : memref<2x8x128xf32, #tpu.memory_space<vmem>>, vector<1x8x128xf32>
    %333 = vector.shape_cast %332 : vector<1x8x128xf32> to vector<8x128xf32>
    %334 = vector.shape_cast %333 : vector<8x128xf32> to vector<1x8x128xf32>
    %335 = vector.broadcast %331 : vector<8x1x128xf32> to vector<8x8x128xf32>
    %336 = vector.broadcast %334 : vector<1x8x128xf32> to vector<8x8x128xf32>
    %337 = arith.mulf %335, %336 : vector<8x8x128xf32>
    %338 = math.exp %337 : vector<8x8x128xf32>
    %339 = vector.extract_strided_slice %326 {offsets = [0, 0], sizes = [8, 8], strides = [1, 1]} : vector<8x16xf32> to vector<8x8xf32>
    %340 = vector.shape_cast %339 : vector<8x8xf32> to vector<8x8x1xf32>
    %341 = vector.shape_cast %340 : vector<8x8x1xf32> to vector<8x8x1xf32>
    %342 = vector.broadcast %341 : vector<8x8x1xf32> to vector<8x8x64xf32>
    %343 = vector.extract_strided_slice %326 {offsets = [0, 8], sizes = [8, 8], strides = [1, 1]} : vector<8x16xf32> to vector<8x8xf32>
    %344 = vector.shape_cast %343 : vector<8x8xf32> to vector<8x8x1xf32>
    %345 = vector.shape_cast %344 : vector<8x8x1xf32> to vector<8x8x1xf32>
    %346 = vector.broadcast %345 : vector<8x8x1xf32> to vector<8x8x64xf32>
    %347 = tpu.concatenate %342, %346 in 2 : vector<8x8x64xf32>, vector<8x8x64xf32> -> vector<8x8x128xf32>
    %348 = vector.shape_cast %330 : vector<8x128xf32> to vector<8x1x128xf32>
    %349 = vector.broadcast %348 : vector<8x1x128xf32> to vector<8x8x128xf32>
    %350 = arith.mulf %349, %347 : vector<8x8x128xf32>
    %351 = vector.extract_strided_slice %327 {offsets = [0, 0], sizes = [8, 8], strides = [1, 1]} : vector<8x16xf32> to vector<8x8xf32>
    %352 = vector.shape_cast %351 : vector<8x8xf32> to vector<8x8x1xf32>
    %353 = vector.shape_cast %352 : vector<8x8x1xf32> to vector<8x8x1xf32>
    %354 = vector.broadcast %353 : vector<8x8x1xf32> to vector<8x8x64xf32>
    %355 = vector.extract_strided_slice %327 {offsets = [0, 8], sizes = [8, 8], strides = [1, 1]} : vector<8x16xf32> to vector<8x8xf32>
    %356 = vector.shape_cast %355 : vector<8x8xf32> to vector<8x8x1xf32>
    %357 = vector.shape_cast %356 : vector<8x8x1xf32> to vector<8x8x1xf32>
    %358 = vector.broadcast %357 : vector<8x8x1xf32> to vector<8x8x64xf32>
    %359 = tpu.concatenate %354, %358 in 2 : vector<8x8x64xf32>, vector<8x8x64xf32> -> vector<8x8x128xf32>
    %cst_102 = arith.constant 0.000000e+00 : f32
    %360 = vector.broadcast %cst_102 : f32 to vector<8x128xf32>
    %361 = vector.extract_strided_slice %338 {offsets = [0, 0, 0], sizes = [1, 8, 128], strides = [1, 1, 1]} : vector<8x8x128xf32> to vector<1x8x128xf32>
    %362 = vector.shape_cast %361 : vector<1x8x128xf32> to vector<8x128xf32>
    %363 = arith.mulf %362, %360 : vector<8x128xf32>
    %364 = vector.extract_strided_slice %350 {offsets = [0, 0, 0], sizes = [1, 8, 128], strides = [1, 1, 1]} : vector<8x8x128xf32> to vector<1x8x128xf32>
    %365 = vector.shape_cast %364 : vector<1x8x128xf32> to vector<8x128xf32>
    %366 = arith.addf %363, %365 : vector<8x128xf32>
    %367 = vector.extract_strided_slice %338 {offsets = [1, 0, 0], sizes = [1, 8, 128], strides = [1, 1, 1]} : vector<8x8x128xf32> to vector<1x8x128xf32>
    %368 = vector.shape_cast %367 : vector<1x8x128xf32> to vector<8x128xf32>
    %369 = arith.mulf %368, %366 : vector<8x128xf32>
    %370 = vector.extract_strided_slice %350 {offsets = [1, 0, 0], sizes = [1, 8, 128], strides = [1, 1, 1]} : vector<8x8x128xf32> to vector<1x8x128xf32>
    %371 = vector.shape_cast %370 : vector<1x8x128xf32> to vector<8x128xf32>
    %372 = arith.addf %369, %371 : vector<8x128xf32>
    %373 = vector.extract_strided_slice %338 {offsets = [2, 0, 0], sizes = [1, 8, 128], strides = [1, 1, 1]} : vector<8x8x128xf32> to vector<1x8x128xf32>
    %374 = vector.shape_cast %373 : vector<1x8x128xf32> to vector<8x128xf32>
    %375 = arith.mulf %374, %372 : vector<8x128xf32>
    %376 = vector.extract_strided_slice %350 {offsets = [2, 0, 0], sizes = [1, 8, 128], strides = [1, 1, 1]} : vector<8x8x128xf32> to vector<1x8x128xf32>
    %377 = vector.shape_cast %376 : vector<1x8x128xf32> to vector<8x128xf32>
    %378 = arith.addf %375, %377 : vector<8x128xf32>
    %379 = vector.extract_strided_slice %338 {offsets = [3, 0, 0], sizes = [1, 8, 128], strides = [1, 1, 1]} : vector<8x8x128xf32> to vector<1x8x128xf32>
    %380 = vector.shape_cast %379 : vector<1x8x128xf32> to vector<8x128xf32>
    %381 = arith.mulf %380, %378 : vector<8x128xf32>
    %382 = vector.extract_strided_slice %350 {offsets = [3, 0, 0], sizes = [1, 8, 128], strides = [1, 1, 1]} : vector<8x8x128xf32> to vector<1x8x128xf32>
    %383 = vector.shape_cast %382 : vector<1x8x128xf32> to vector<8x128xf32>
    %384 = arith.addf %381, %383 : vector<8x128xf32>
    %385 = vector.extract_strided_slice %338 {offsets = [4, 0, 0], sizes = [1, 8, 128], strides = [1, 1, 1]} : vector<8x8x128xf32> to vector<1x8x128xf32>
    %386 = vector.shape_cast %385 : vector<1x8x128xf32> to vector<8x128xf32>
    %387 = arith.mulf %386, %384 : vector<8x128xf32>
    %388 = vector.extract_strided_slice %350 {offsets = [4, 0, 0], sizes = [1, 8, 128], strides = [1, 1, 1]} : vector<8x8x128xf32> to vector<1x8x128xf32>
    %389 = vector.shape_cast %388 : vector<1x8x128xf32> to vector<8x128xf32>
    %390 = arith.addf %387, %389 : vector<8x128xf32>
    %391 = vector.extract_strided_slice %338 {offsets = [5, 0, 0], sizes = [1, 8, 128], strides = [1, 1, 1]} : vector<8x8x128xf32> to vector<1x8x128xf32>
    %392 = vector.shape_cast %391 : vector<1x8x128xf32> to vector<8x128xf32>
    %393 = arith.mulf %392, %390 : vector<8x128xf32>
    %394 = vector.extract_strided_slice %350 {offsets = [5, 0, 0], sizes = [1, 8, 128], strides = [1, 1, 1]} : vector<8x8x128xf32> to vector<1x8x128xf32>
    %395 = vector.shape_cast %394 : vector<1x8x128xf32> to vector<8x128xf32>
    %396 = arith.addf %393, %395 : vector<8x128xf32>
    %397 = vector.extract_strided_slice %338 {offsets = [6, 0, 0], sizes = [1, 8, 128], strides = [1, 1, 1]} : vector<8x8x128xf32> to vector<1x8x128xf32>
    %398 = vector.shape_cast %397 : vector<1x8x128xf32> to vector<8x128xf32>
    %399 = arith.mulf %398, %396 : vector<8x128xf32>
    %400 = vector.extract_strided_slice %350 {offsets = [6, 0, 0], sizes = [1, 8, 128], strides = [1, 1, 1]} : vector<8x8x128xf32> to vector<1x8x128xf32>
    %401 = vector.shape_cast %400 : vector<1x8x128xf32> to vector<8x128xf32>
    %402 = arith.addf %399, %401 : vector<8x128xf32>
    %403 = vector.extract_strided_slice %338 {offsets = [7, 0, 0], sizes = [1, 8, 128], strides = [1, 1, 1]} : vector<8x8x128xf32> to vector<1x8x128xf32>
    %404 = vector.shape_cast %403 : vector<1x8x128xf32> to vector<8x128xf32>
    %405 = arith.mulf %404, %402 : vector<8x128xf32>
    %406 = vector.extract_strided_slice %350 {offsets = [7, 0, 0], sizes = [1, 8, 128], strides = [1, 1, 1]} : vector<8x8x128xf32> to vector<1x8x128xf32>
    %407 = vector.shape_cast %406 : vector<1x8x128xf32> to vector<8x128xf32>
    %408 = arith.addf %405, %407 : vector<8x128xf32>
    %409 = vector.shape_cast %366 : vector<8x128xf32> to vector<1x8x128xf32>
    %410 = vector.shape_cast %372 : vector<8x128xf32> to vector<1x8x128xf32>
    %411 = vector.shape_cast %378 : vector<8x128xf32> to vector<1x8x128xf32>
    %412 = vector.shape_cast %384 : vector<8x128xf32> to vector<1x8x128xf32>
    %413 = vector.shape_cast %390 : vector<8x128xf32> to vector<1x8x128xf32>
    %414 = vector.shape_cast %396 : vector<8x128xf32> to vector<1x8x128xf32>
    %415 = vector.shape_cast %402 : vector<8x128xf32> to vector<1x8x128xf32>
    %416 = vector.shape_cast %408 : vector<8x128xf32> to vector<1x8x128xf32>
    %417 = tpu.concatenate %409, %410, %411, %412, %413, %414, %415, %416 in 0 : vector<1x8x128xf32>, vector<1x8x128xf32>, vector<1x8x128xf32>, vector<1x8x128xf32>, vector<1x8x128xf32>, vector<1x8x128xf32>, vector<1x8x128xf32>, vector<1x8x128xf32> -> vector<8x8x128xf32>
    %418 = arith.mulf %417, %359 : vector<8x8x128xf32>
    %cst_103 = arith.constant dense<0.000000e+00> : vector<8x128xf32>
    %419 = vector.multi_reduction <add>, %418, %cst_103 [1] : vector<8x8x128xf32> to vector<8x128xf32>
    %420 = vector.extract_strided_slice %419 {offsets = [0, 0], sizes = [8, 64], strides = [1, 1]} : vector<8x128xf32> to vector<8x64xf32>
    %421 = vector.extract_strided_slice %419 {offsets = [0, 64], sizes = [8, 64], strides = [1, 1]} : vector<8x128xf32> to vector<8x64xf32>
    %422 = arith.addf %420, %421 : vector<8x64xf32>
    %c1_104 = arith.constant 1 : index
    %c0_105 = arith.constant 0 : index
    %c0_106 = arith.constant 0 : index
    %423 = vector.load %arg11[%c1_104, %c0_105, %c0_106] : memref<2x1x64xf32, #tpu.memory_space<vmem>>, vector<1x1x64xf32>
    %424 = vector.shape_cast %423 : vector<1x1x64xf32> to vector<1x64xf32>
    %425 = vector.broadcast %424 : vector<1x64xf32> to vector<8x64xf32>
    %426 = arith.mulf %312, %425 : vector<8x64xf32>
    %427 = arith.addf %422, %426 : vector<8x64xf32>
    %cst_107 = arith.constant 0.000000e+00 : f32
    %428 = vector.broadcast %cst_107 : f32 to vector<8x64xf32>
    %429 = arith.subf %428, %273 : vector<8x64xf32>
    %430 = math.exp %429 : vector<8x64xf32>
    %cst_108 = arith.constant 1.000000e+00 : f32
    %431 = vector.broadcast %cst_108 : f32 to vector<8x64xf32>
    %432 = arith.addf %431, %430 : vector<8x64xf32>
    %cst_109 = arith.constant 1.000000e+00 : f32
    %433 = vector.broadcast %cst_109 : f32 to vector<8x64xf32>
    %434 = arith.divf %433, %432 : vector<8x64xf32>
    %435 = arith.mulf %273, %434 : vector<8x64xf32>
    %436 = arith.mulf %427, %435 : vector<8x64xf32>
    %437 = arith.truncf %436 : vector<8x64xf32> to vector<8x64xbf16>
    %c1_110 = arith.constant 1 : index
    %c0_111 = arith.constant 0 : index
    %c0_112 = arith.constant 0 : index
    %438 = vector.load %arg12[%c1_110, %c0_111, %c0_112] : memref<2x64x32xbf16, #tpu.memory_space<vmem>>, vector<1x64x32xbf16>
    %439 = vector.shape_cast %438 : vector<1x64x32xbf16> to vector<64x32xbf16>
    %cst_113 = arith.constant dense<0.000000e+00> : vector<8x32xf32>
    %440 = tpu.matmul %437, %439, %cst_113 {dimension_numbers = #tpu.dot_dimension_numbers<[1], [0], [0], [1], [0, 0, 1, 1], [], []>} : vector<8x64xbf16>, vector<64x32xbf16>, vector<8x32xf32> -> vector<8x32xf32>
    %441 = arith.addf %440, %241 : vector<8x32xf32>
    %c0_114 = arith.constant 0 : index
    %c0_115 = arith.constant 0 : index
    %442 = vector.load %arg13[%c0_114, %c0_115] : memref<1x32xf32, #tpu.memory_space<vmem>>, vector<1x32xf32>
    %c0_116 = arith.constant 0 : index
    %c0_117 = arith.constant 0 : index
    %443 = vector.load %arg14[%c0_116, %c0_117] : memref<1x32xf32, #tpu.memory_space<vmem>>, vector<1x32xf32>
    %cst_118 = arith.constant dense<0.000000e+00> : vector<8xf32>
    %444 = vector.multi_reduction <add>, %441, %cst_118 [1] : vector<8x32xf32> to vector<8xf32>
    %445 = vector.shape_cast %444 : vector<8xf32> to vector<8x1xf32>
    %cst_119 = arith.constant 3.200000e+01 : f32
    %446 = vector.broadcast %cst_119 : f32 to vector<8x1xf32>
    %447 = arith.divf %445, %446 : vector<8x1xf32>
    %448 = vector.broadcast %447 : vector<8x1xf32> to vector<8x32xf32>
    %449 = arith.subf %441, %448 : vector<8x32xf32>
    %450 = arith.mulf %449, %449 : vector<8x32xf32>
    %cst_120 = arith.constant dense<0.000000e+00> : vector<8xf32>
    %451 = vector.multi_reduction <add>, %450, %cst_120 [1] : vector<8x32xf32> to vector<8xf32>
    %452 = vector.shape_cast %451 : vector<8xf32> to vector<8x1xf32>
    %cst_121 = arith.constant 3.200000e+01 : f32
    %453 = vector.broadcast %cst_121 : f32 to vector<8x1xf32>
    %454 = arith.divf %452, %453 : vector<8x1xf32>
    %455 = vector.broadcast %447 : vector<8x1xf32> to vector<8x32xf32>
    %456 = arith.subf %441, %455 : vector<8x32xf32>
    %cst_122 = arith.constant 9.99999974E-6 : f32
    %457 = vector.broadcast %cst_122 : f32 to vector<8x1xf32>
    %458 = arith.addf %454, %457 : vector<8x1xf32>
    %459 = math.rsqrt %458 : vector<8x1xf32>
    %460 = vector.broadcast %459 : vector<8x1xf32> to vector<8x32xf32>
    %461 = arith.mulf %456, %460 : vector<8x32xf32>
    %462 = vector.broadcast %442 : vector<1x32xf32> to vector<8x32xf32>
    %463 = arith.mulf %461, %462 : vector<8x32xf32>
    %464 = vector.broadcast %443 : vector<1x32xf32> to vector<8x32xf32>
    %465 = arith.addf %463, %464 : vector<8x32xf32>
    %c0_123 = arith.constant 0 : index
    %c0_124 = arith.constant 0 : index
    %c0_125 = arith.constant 0 : index
    %466 = vector.load %arg15[%c0_123, %c0_124, %c0_125] : memref<1x8x32xf32, #tpu.memory_space<vmem>>, vector<1x8x32xf32>
    %467 = vector.shape_cast %466 : vector<1x8x32xf32> to vector<8x32xf32>
    %468 = vector.shape_cast %465 : vector<8x32xf32> to vector<1x8x32xf32>
    tpu.vector_store %arg15[%c0_123, %c0_124, %c0_125], %468 {strides = array<i32>} : memref<1x8x32xf32, #tpu.memory_space<vmem>>, vector<1x8x32xf32>,
    return
  }
  func.func @transform_0(%arg0: i32, %arg1: memref<2x8xi32, #tpu.memory_space<smem>>) -> (i32, i32) {
    %c0_i32 = arith.constant 0 : i32
    %c0_i32_0 = arith.constant 0 : i32
    %c0_i32_1 = arith.constant 0 : i32
    return %c0_i32, %c0_i32_0 : i32, i32
  }
  func.func @transform_1(%arg0: i32, %arg1: memref<2x8xi32, #tpu.memory_space<smem>>) -> (i32, i32, i32) {
    %c0_i32 = arith.constant 0 : i32
    %c0_i32_0 = arith.constant 0 : i32
    %c0_i32_1 = arith.constant 0 : i32
    %c0_i32_2 = arith.constant 0 : i32
    return %c0_i32, %c0_i32_0, %c0_i32_1 : i32, i32, i32
  }
  func.func @transform_2(%arg0: i32, %arg1: memref<2x8xi32, #tpu.memory_space<smem>>) -> (i32, i32, i32) {
    %c0_i32 = arith.constant 0 : i32
    %c0_i32_0 = arith.constant 0 : i32
    %c0_i32_1 = arith.constant 0 : i32
    %c0_i32_2 = arith.constant 0 : i32
    return %c0_i32, %c0_i32_0, %c0_i32_1 : i32, i32, i32
  }
  func.func @transform_3(%arg0: i32, %arg1: memref<2x8xi32, #tpu.memory_space<smem>>) -> (i32, i32, i32) {
    %c0_i32 = arith.constant 0 : i32
    %c0_i32_0 = arith.constant 0 : i32
    %c0_i32_1 = arith.constant 0 : i32
    %c0_i32_2 = arith.constant 0 : i32
    return %c0_i32, %c0_i32_0, %c0_i32_1 : i32, i32, i32
  }
  func.func @transform_4(%arg0: i32, %arg1: memref<2x8xi32, #tpu.memory_space<smem>>) -> (i32, i32, i32) {
    %c0_i32 = arith.constant 0 : i32
    %c0_i32_0 = arith.constant 0 : i32
    %c0_i32_1 = arith.constant 0 : i32
    %c0_i32_2 = arith.constant 0 : i32
    return %c0_i32, %c0_i32_0, %c0_i32_1 : i32, i32, i32
  }
  func.func @transform_5(%arg0: i32, %arg1: memref<2x8xi32, #tpu.memory_space<smem>>) -> (i32, i32, i32) {
    %c0_i32 = arith.constant 0 : i32
    %c0_i32_0 = arith.constant 0 : i32
    %c0_i32_1 = arith.constant 0 : i32
    %c0_i32_2 = arith.constant 0 : i32
    return %c0_i32, %c0_i32_0, %c0_i32_1 : i32, i32, i32
  }
  func.func @transform_6(%arg0: i32, %arg1: memref<2x8xi32, #tpu.memory_space<smem>>) -> (i32, i32, i32) {
    %c0_i32 = arith.constant 0 : i32
    %c0_i32_0 = arith.constant 0 : i32
    %c0_i32_1 = arith.constant 0 : i32
    %c0_i32_2 = arith.constant 0 : i32
    return %c0_i32, %c0_i32_0, %c0_i32_1 : i32, i32, i32
  }
  func.func @transform_7(%arg0: i32, %arg1: memref<2x8xi32, #tpu.memory_space<smem>>) -> (i32, i32, i32) {
    %c0_i32 = arith.constant 0 : i32
    %c0_i32_0 = arith.constant 0 : i32
    %c0_i32_1 = arith.constant 0 : i32
    %c0_i32_2 = arith.constant 0 : i32
    return %c0_i32, %c0_i32_0, %c0_i32_1 : i32, i32, i32
  }
  func.func @transform_8(%arg0: i32, %arg1: memref<2x8xi32, #tpu.memory_space<smem>>) -> (i32, i32, i32) {
    %c0_i32 = arith.constant 0 : i32
    %c0_i32_0 = arith.constant 0 : i32
    %c0_i32_1 = arith.constant 0 : i32
    %c0_i32_2 = arith.constant 0 : i32
    return %c0_i32, %c0_i32_0, %c0_i32_1 : i32, i32, i32
  }
  func.func @transform_9(%arg0: i32, %arg1: memref<2x8xi32, #tpu.memory_space<smem>>) -> (i32, i32, i32) {
    %c0_i32 = arith.constant 0 : i32
    %c0_i32_0 = arith.constant 0 : i32
    %c0_i32_1 = arith.constant 0 : i32
    %c0_i32_2 = arith.constant 0 : i32
    return %c0_i32, %c0_i32_0, %c0_i32_1 : i32, i32, i32
  }
  func.func @transform_10(%arg0: i32, %arg1: memref<2x8xi32, #tpu.memory_space<smem>>) -> (i32, i32, i32) {
    %c0_i32 = arith.constant 0 : i32
    %c0_i32_0 = arith.constant 0 : i32
    %c0_i32_1 = arith.constant 0 : i32
    %c0_i32_2 = arith.constant 0 : i32
    return %c0_i32, %c0_i32_0, %c0_i32_1 : i32, i32, i32
  }
  func.func @transform_11(%arg0: i32, %arg1: memref<2x8xi32, #tpu.memory_space<smem>>) -> (i32, i32) {
    %c0_i32 = arith.constant 0 : i32
    %c0_i32_0 = arith.constant 0 : i32
    %c0_i32_1 = arith.constant 0 : i32
    return %c0_i32, %c0_i32_0 : i32, i32
  }
  func.func @transform_12(%arg0: i32, %arg1: memref<2x8xi32, #tpu.memory_space<smem>>) -> (i32, i32) {
    %c0_i32 = arith.constant 0 : i32
    %c0_i32_0 = arith.constant 0 : i32
    %c0_i32_1 = arith.constant 0 : i32
    return %c0_i32, %c0_i32_0 : i32, i32
  }
  func.func @transform_13(%arg0: i32, %arg1: memref<2x8xi32, #tpu.memory_space<smem>>) -> (i32, i32, i32) {
    %c0_i32 = arith.constant 0 : i32
    %c0_i32_0 = arith.constant 0 : i32
    %c0_i32_1 = arith.constant 0 : i32
    return %arg0, %c0_i32, %c0_i32_0 : i32, i32, i32
  }
}

</mosaic_0001>

<llo_original>
// kernel: mixer_model_forward.1
$region0: #{mixer_model_forward.1}
  #allocation0 [shape = 'u32[]', space=smem, size = 0x4, offset = 0x4, fixed_abs, tag = 'smem constant byte address 0x4 - core index']
  #allocation1 [shape = 'u32[72,128]{1,0:T(1,128)}', space=vmem, size = 0x9000, scoped, tag = 'internal scratch']
  #allocation2 [shape = 's32[1]{0}', space=sflag, size = 0x4, scoped, tag = 'scoped memory for mixer_model_forward.1']
  #allocation3 [shape = 'u8[1024]{0}', space=smem, size = 0x400, scoped, tag = 'prefetched SMEM operand 0']
  %s0 = inlined_call_operand.vmem [shape: s32[2,8], index: 0, kind: input, shape index: {}]
  %s1 = inlined_call_operand.vmem [shape: f32[64,32], index: 1, kind: input, shape index: {}]
  %s2 = inlined_call_operand.hbm [shape: f32[2,1,32], index: 2, kind: input, shape index: {}]
  %s3 = inlined_call_operand.hbm [shape: f32[2,1,32], index: 3, kind: input, shape index: {}]
  %s4 = inlined_call_operand.vmem [shape: bf16[2,32,128], index: 4, kind: input, shape index: {}]
  %s5 = inlined_call_operand.vmem [shape: f32[2,4,64], index: 5, kind: input, shape index: {}]
  %s6 = inlined_call_operand.hbm [shape: f32[2,1,64], index: 6, kind: input, shape index: {}]
  %s7 = inlined_call_operand.vmem [shape: f32[2,64,128], index: 7, kind: input, shape index: {}]
  %s8 = inlined_call_operand.hbm [shape: f32[2,1,64], index: 8, kind: input, shape index: {}]
  %s9 = inlined_call_operand.hbm [shape: f32[2,8,128], index: 9, kind: input, shape index: {}]
  %s10 = inlined_call_operand.hbm [shape: f32[2,1,64], index: 10, kind: input, shape index: {}]
  %s11 = inlined_call_operand.vmem [shape: bf16[2,64,32], index: 11, kind: input, shape index: {}]
  %s12 = inlined_call_operand.hbm [shape: f32[1,32], index: 12, kind: input, shape index: {}]
  %s13 = inlined_call_operand.hbm [shape: f32[1,32], index: 13, kind: input, shape index: {}]
  %s14 = inlined_call_operand.hbm [shape: f32[2,8,32], index: 14, kind: output, shape index: {}]
  %s15 = sld [smem:[#allocation0]]
  $region117: #{mixer_model_forward.1} parent=0
    _
  %s17 = ssub.s32 1, %s15
  %s18 = scalar_select 0, %s17, %s15
  %s20 = sshll.u32 %s0, 4
  %s21 = int_to_ptr.vmem [resolvable:$true] %s20
  %23 = dma.vmem_to_smem %s21, 32, [#allocation3], [#allocation2]
  %25 = dma.done [#allocation2], 32
  %26 = sfence
  $region1: #{mixer_model_forward.1} parent=0
    #allocation4 [shape = 'u8[1024]{0}', space=vmem, size = 0x400, scoped, tag = 'input window, operand 2, single buffered']
    #allocation5 [shape = 's32[2]{0}', space=sflag, size = 0x8, scoped, tag = 'scoped memory for mixer_model_forward.1']
    #allocation6 [shape = 's32[2]{0}', space=sflag, size = 0x8, scoped, tag = 'scoped memory for mixer_model_forward.1']
    #allocation7 [shape = 'u8[1024]{0}', space=vmem, size = 0x400, scoped, tag = 'input window, operand 3, single buffered']
    #allocation8 [shape = 's32[1]{0}', space=sflag, size = 0x4, scoped, tag = 'scoped memory for mixer_model_forward.1']
    #allocation9 [shape = 'u8[1024]{0}', space=vmem, size = 0x400, scoped, tag = 'input window, operand 6, single buffered']
    #allocation10 [shape = 'u8[1024]{0}', space=vmem, size = 0x400, scoped, tag = 'input window, operand 8, single buffered']
    #allocation11 [shape = 's32[1]{0}', space=sflag, size = 0x4, scoped, tag = 'scoped memory for mixer_model_forward.1']
    #allocation12 [shape = 'u8[8192]{0}', space=vmem, size = 0x2000, scoped, tag = 'input window, operand 9, single buffered']
    #allocation13 [shape = 'u8[1024]{0}', space=vmem, size = 0x400, scoped, tag = 'input window, operand 10, single buffered']
    #allocation14 [shape = 's32[1]{0}', space=sflag, size = 0x4, scoped, tag = 'scoped memory for mixer_model_forward.1']
    #allocation15 [shape = 'u8[512]{0}', space=vmem, size = 0x400, scoped, tag = 'input window, operand 12, single buffered']
    #allocation16 [shape = 'u8[512]{0}', space=vmem, size = 0x400, scoped, tag = 'input window, operand 13, single buffered']
    #allocation17 [shape = 's32[1]{0}', space=sflag, size = 0x4, scoped, tag = 'scoped memory for mixer_model_forward.1']
    #allocation18 [shape = 'u8[8192]{0}', space=vmem, size = 0x2000, scoped, tag = 'output window, operand 0']
    %27 = vsyncpa [#allocation5], 0
    %28 = vsyncpa [#allocation8], 0
    %29 = vsyncpa [#allocation11], 0
    %30 = vsyncpa [#allocation14], 0
    %31 = vsyncpa [#allocation17], 0
    %32 = vsyncpa [#allocation6], 0
    %s33 = scalar_lea.sflag [#allocation6], 1
    %34 = vsyncpa %s33, 0
    loop: start=0, step=1, limit=4
    $region2: #{mixer_model_forward.1} parent=1 // loop_pre_header
      _
    $region3: #{mixer_model_forward.1} parent=1 // loop_header
      %s36 = sphi 0, %s40
      %p37 = scmp.ge.s32.totalorder %s36, 4
      %s44 = sphi 0, %s44
      %s46 = sphi 0, %s44
      %s47 = sphi 0, %s46
      %s61 = sphi 0, %s47
      %s65 = sphi 0, %s65
      %s67 = sphi 0, %s65
      %s68 = sphi 0, %s67
      %s82 = sphi 0, %s68
      %s86 = sphi 0, %s86
      %s88 = sphi 0, %s86
      %s89 = sphi 0, %s88
      %s103 = sphi 0, %s89
      %s107 = sphi 0, %s107
      %s109 = sphi 0, %s107
      %s110 = sphi 0, %s109
      %s124 = sphi 0, %s110
      %s128 = sphi 0, %s128
      %s130 = sphi 0, %s128
      %s131 = sphi 0, %s130
      %s145 = sphi 0, %s131
      %s149 = sphi 0, %s149
      %s151 = sphi 0, %s149
      %s152 = sphi 0, %s151
      %s166 = sphi 0, %s152
      %s170 = sphi 0, %s170
      %s172 = sphi 0, %s170
      %s173 = sphi 0, %s172
      %s187 = sphi 0, %s173
      %s191 = sphi 0, %s191
      %s193 = sphi 0, %s191
      %s194 = sphi 0, %s193
      %s208 = sphi 0, %s194
      %s212 = sphi 0, %s212
      %s214 = sphi 0, %s212
      %s215 = sphi 0, %s214
      %s229 = sphi 0, %s215
      %s233 = sphi 0, %s233
      %s235 = sphi 0, %s233
      %s236 = sphi 0, %s235
      %s250 = sphi 0, %s236
      %s254 = sphi 0, %s254
      %s256 = sphi 0, %s254
      %s257 = sphi 0, %s256
      %s271 = sphi 0, %s257
      %s275 = sphi 0, %s275
      %s277 = sphi 0, %s275
      %s278 = sphi 0, %s277
      %s292 = sphi 0, %s278
      %s296 = sphi 0, %s296
      %s298 = sphi 0, %s296
      %s299 = sphi 0, %s298
      %s313 = sphi 0, %s299
      %s319 = sphi 0, %s321
      %s322 = sphi 0, %s319
      %s323 = sphi 0, %s322
      %s339 = sphi 0, %s323
    $region4: #{mixer_model_forward.1} parent=1 // loop_header_branch
      %39 = sbr.rel (%p37) target = $region8
    $region5: #{mixer_model_forward.1} parent=1 // loop_body
      %s41 = ssub.s32 %s36, 1
      %s42 = ssub.s32 %s36, 2
      %s43 = sadd.s32 %s36, 1
      %s45 = sadd.s32 %s44, 1
      %p48 = scmp.eq.s32.totalorder %s36, 1
      %p49 = scmp.ne.s32.totalorder %s44, %s46
      %p50 = scmp.eq.s32.totalorder %s36, 0
      %p51 = por %p49, %p50
      %p52 = scmp.ne.s32.totalorder %s44, %s46
      %p53 = scmp.eq.s32.totalorder %s41, 1
      %p54 = por %p52, %p53
      %p55 = scmp.ne.s32.totalorder %s46, %s47
      %p56 = scmp.eq.s32.totalorder %s41, 0
      %p57 = por %p55, %p56
      %p58 = scmp.ne.s32.totalorder %s46, %s47
      %p59 = scmp.eq.s32.totalorder %s42, 1
      %p60 = por %p58, %p59
      %p62 = scmp.ne.s32.totalorder %s47, %s61
      %p63 = scmp.eq.s32.totalorder %s42, 0
      %p64 = por %p62, %p63
      %s66 = sadd.s32 %s65, 1
      %p69 = scmp.eq.s32.totalorder %s36, 1
      %p70 = scmp.ne.s32.totalorder %s65, %s67
      %p71 = scmp.eq.s32.totalorder %s36, 0
      %p72 = por %p70, %p71
      %p73 = scmp.ne.s32.totalorder %s65, %s67
      %p74 = scmp.eq.s32.totalorder %s41, 1
      %p75 = por %p73, %p74
      %p76 = scmp.ne.s32.totalorder %s67, %s68
      %p77 = scmp.eq.s32.totalorder %s41, 0
      %p78 = por %p76, %p77
      %p79 = scmp.ne.s32.totalorder %s67, %s68
      %p80 = scmp.eq.s32.totalorder %s42, 1
      %p81 = por %p79, %p80
      %p83 = scmp.ne.s32.totalorder %s68, %s82
      %p84 = scmp.eq.s32.totalorder %s42, 0
      %p85 = por %p83, %p84
      %s87 = sadd.s32 %s86, 1
      %p90 = scmp.eq.s32.totalorder %s36, 1
      %p91 = scmp.ne.s32.totalorder %s86, %s88
      %p92 = scmp.eq.s32.totalorder %s36, 0
      %p93 = por %p91, %p92
      %p94 = scmp.ne.s32.totalorder %s86, %s88
      %p95 = scmp.eq.s32.totalorder %s41, 1
      %p96 = por %p94, %p95
      %p97 = scmp.ne.s32.totalorder %s88, %s89
      %p98 = scmp.eq.s32.totalorder %s41, 0
      %p99 = por %p97, %p98
      %p100 = scmp.ne.s32.totalorder %s88, %s89
      %p101 = scmp.eq.s32.totalorder %s42, 1
      %p102 = por %p100, %p101
      %p104 = scmp.ne.s32.totalorder %s89, %s103
      %p105 = scmp.eq.s32.totalorder %s42, 0
      %p106 = por %p104, %p105
      %s108 = sadd.s32 %s107, 1
      %p111 = scmp.eq.s32.totalorder %s36, 1
      %p112 = scmp.ne.s32.totalorder %s107, %s109
      %p113 = scmp.eq.s32.totalorder %s36, 0
      %p114 = por %p112, %p113
      %p115 = scmp.ne.s32.totalorder %s107, %s109
      %p116 = scmp.eq.s32.totalorder %s41, 1
      %p117 = por %p115, %p116
      %p118 = scmp.ne.s32.totalorder %s109, %s110
      %p119 = scmp.eq.s32.totalorder %s41, 0
      %p120 = por %p118, %p119
      %p121 = scmp.ne.s32.totalorder %s109, %s110
      %p122 = scmp.eq.s32.totalorder %s42, 1
      %p123 = por %p121, %p122
      %p125 = scmp.ne.s32.totalorder %s110, %s124
      %p126 = scmp.eq.s32.totalorder %s42, 0
      %p127 = por %p125, %p126
      %s129 = sadd.s32 %s128, 1
      %p132 = scmp.eq.s32.totalorder %s36, 1
      %p133 = scmp.ne.s32.totalorder %s128, %s130
      %p134 = scmp.eq.s32.totalorder %s36, 0
      %p135 = por %p133, %p134
      %p136 = scmp.ne.s32.totalorder %s128, %s130
      %p137 = scmp.eq.s32.totalorder %s41, 1
      %p138 = por %p136, %p137
      %p139 = scmp.ne.s32.totalorder %s130, %s131
      %p140 = scmp.eq.s32.totalorder %s41, 0
      %p141 = por %p139, %p140
      %p142 = scmp.ne.s32.totalorder %s130, %s131
      %p143 = scmp.eq.s32.totalorder %s42, 1
      %p144 = por %p142, %p143
      %p146 = scmp.ne.s32.totalorder %s131, %s145
      %p147 = scmp.eq.s32.totalorder %s42, 0
      %p148 = por %p146, %p147
      %s150 = sadd.s32 %s149, 1
      %p153 = scmp.eq.s32.totalorder %s36, 1
      %p154 = scmp.ne.s32.totalorder %s149, %s151
      %p155 = scmp.eq.s32.totalorder %s36, 0
      %p156 = por %p154, %p155
      %p157 = scmp.ne.s32.totalorder %s149, %s151
      %p158 = scmp.eq.s32.totalorder %s41, 1
      %p159 = por %p157, %p158
      %p160 = scmp.ne.s32.totalorder %s151, %s152
      %p161 = scmp.eq.s32.totalorder %s41, 0
      %p162 = por %p160, %p161
      %p163 = scmp.ne.s32.totalorder %s151, %s152
      %p164 = scmp.eq.s32.totalorder %s42, 1
      %p165 = por %p163, %p164
      %p167 = scmp.ne.s32.totalorder %s152, %s166
      %p168 = scmp.eq.s32.totalorder %s42, 0
      %p169 = por %p167, %p168
      %s171 = sadd.s32 %s170, 1
      %p174 = scmp.eq.s32.totalorder %s36, 1
      %p175 = scmp.ne.s32.totalorder %s170, %s172
      %p176 = scmp.eq.s32.totalorder %s36, 0
      %p177 = por %p175, %p176
      %p178 = scmp.ne.s32.totalorder %s170, %s172
      %p179 = scmp.eq.s32.totalorder %s41, 1
      %p180 = por %p178, %p179
      %p181 = scmp.ne.s32.totalorder %s172, %s173
      %p182 = scmp.eq.s32.totalorder %s41, 0
      %p183 = por %p181, %p182
      %p184 = scmp.ne.s32.totalorder %s172, %s173
      %p185 = scmp.eq.s32.totalorder %s42, 1
      %p186 = por %p184, %p185
      %p188 = scmp.ne.s32.totalorder %s173, %s187
      %p189 = scmp.eq.s32.totalorder %s42, 0
      %p190 = por %p188, %p189
      %s192 = sadd.s32 %s191, 1
      %p195 = scmp.eq.s32.totalorder %s36, 1
      %p196 = scmp.ne.s32.totalorder %s191, %s193
      %p197 = scmp.eq.s32.totalorder %s36, 0
      %p198 = por %p196, %p197
      %p199 = scmp.ne.s32.totalorder %s191, %s193
      %p200 = scmp.eq.s32.totalorder %s41, 1
      %p201 = por %p199, %p200
      %p202 = scmp.ne.s32.totalorder %s193, %s194
      %p203 = scmp.eq.s32.totalorder %s41, 0
      %p204 = por %p202, %p203
      %p205 = scmp.ne.s32.totalorder %s193, %s194
      %p206 = scmp.eq.s32.totalorder %s42, 1
      %p207 = por %p205, %p206
      %p209 = scmp.ne.s32.totalorder %s194, %s208
      %p210 = scmp.eq.s32.totalorder %s42, 0
      %p211 = por %p209, %p210
      %s213 = sadd.s32 %s212, 1
      %p216 = scmp.eq.s32.totalorder %s36, 1
      %p217 = scmp.ne.s32.totalorder %s212, %s214
      %p218 = scmp.eq.s32.totalorder %s36, 0
      %p219 = por %p217, %p218
      %p220 = scmp.ne.s32.totalorder %s212, %s214
      %p221 = scmp.eq.s32.totalorder %s41, 1
      %p222 = por %p220, %p221
      %p223 = scmp.ne.s32.totalorder %s214, %s215
      %p224 = scmp.eq.s32.totalorder %s41, 0
      %p225 = por %p223, %p224
      %p226 = scmp.ne.s32.totalorder %s214, %s215
      %p227 = scmp.eq.s32.totalorder %s42, 1
      %p228 = por %p226, %p227
      %p230 = scmp.ne.s32.totalorder %s215, %s229
      %p231 = scmp.eq.s32.totalorder %s42, 0
      %p232 = por %p230, %p231
      %s234 = sadd.s32 %s233, 1
      %p237 = scmp.eq.s32.totalorder %s36, 1
      %p238 = scmp.ne.s32.totalorder %s233, %s235
      %p239 = scmp.eq.s32.totalorder %s36, 0
      %p240 = por %p238, %p239
      %p241 = scmp.ne.s32.totalorder %s233, %s235
      %p242 = scmp.eq.s32.totalorder %s41, 1
      %p243 = por %p241, %p242
      %p244 = scmp.ne.s32.totalorder %s235, %s236
      %p245 = scmp.eq.s32.totalorder %s41, 0
      %p246 = por %p244, %p245
      %p247 = scmp.ne.s32.totalorder %s235, %s236
      %p248 = scmp.eq.s32.totalorder %s42, 1
      %p249 = por %p247, %p248
      %p251 = scmp.ne.s32.totalorder %s236, %s250
      %p252 = scmp.eq.s32.totalorder %s42, 0
      %p253 = por %p251, %p252
      %s255 = sadd.s32 %s254, 1
      %p258 = scmp.eq.s32.totalorder %s36, 1
      %p259 = scmp.ne.s32.totalorder %s254, %s256
      %p260 = scmp.eq.s32.totalorder %s36, 0
      %p261 = por %p259, %p260
      %p262 = scmp.ne.s32.totalorder %s254, %s256
      %p263 = scmp.eq.s32.totalorder %s41, 1
      %p264 = por %p262, %p263
      %p265 = scmp.ne.s32.totalorder %s256, %s257
      %p266 = scmp.eq.s32.totalorder %s41, 0
      %p267 = por %p265, %p266
      %p268 = scmp.ne.s32.totalorder %s256, %s257
      %p269 = scmp.eq.s32.totalorder %s42, 1
      %p270 = por %p268, %p269
      %p272 = scmp.ne.s32.totalorder %s257, %s271
      %p273 = scmp.eq.s32.totalorder %s42, 0
      %p274 = por %p272, %p273
      %s276 = sadd.s32 %s275, 1
      %p279 = scmp.eq.s32.totalorder %s36, 1
      %p280 = scmp.ne.s32.totalorder %s275, %s277
      %p281 = scmp.eq.s32.totalorder %s36, 0
      %p282 = por %p280, %p281
      %p283 = scmp.ne.s32.totalorder %s275, %s277
      %p284 = scmp.eq.s32.totalorder %s41, 1
      %p285 = por %p283, %p284
      %p286 = scmp.ne.s32.totalorder %s277, %s278
      %p287 = scmp.eq.s32.totalorder %s41, 0
      %p288 = por %p286, %p287
      %p289 = scmp.ne.s32.totalorder %s277, %s278
      %p290 = scmp.eq.s32.totalorder %s42, 1
      %p291 = por %p289, %p290
      %p293 = scmp.ne.s32.totalorder %s278, %s292
      %p294 = scmp.eq.s32.totalorder %s42, 0
      %p295 = por %p293, %p294
      %s297 = sadd.s32 %s296, 1
      %p300 = scmp.eq.s32.totalorder %s36, 1
      %p301 = scmp.ne.s32.totalorder %s296, %s298
      %p302 = scmp.eq.s32.totalorder %s36, 0
      %p303 = por %p301, %p302
      %p304 = scmp.ne.s32.totalorder %s296, %s298
      %p305 = scmp.eq.s32.totalorder %s41, 1
      %p306 = por %p304, %p305
      %p307 = scmp.ne.s32.totalorder %s298, %s299
      %p308 = scmp.eq.s32.totalorder %s41, 0
      %p309 = por %p307, %p308
      %p310 = scmp.ne.s32.totalorder %s298, %s299
      %p311 = scmp.eq.s32.totalorder %s42, 1
      %p312 = por %p310, %p311
      %p314 = scmp.ne.s32.totalorder %s299, %s313
      %p315 = scmp.eq.s32.totalorder %s42, 0
      %p316 = por %p314, %p315
      %s317 = ssub.s32 %s36, %s43
      %p318 = scmp.eq.s32.totalorder %s317, 0
      %s320 = sadd.s32 %s319, 1
      %s321 = scalar_select %p318, %s319, %s320
      %p324 = pneg %p318
      %p325 = scmp.eq.s32.totalorder %s36, 1
      %p326 = por %p324, %p325
      %p327 = scmp.ne.s32.totalorder %s319, %s322
      %p328 = scmp.eq.s32.totalorder %s36, 0
      %p329 = por %p327, %p328
      %p330 = scmp.ne.s32.totalorder %s319, %s322
      %p331 = scmp.eq.s32.totalorder %s41, 1
      %p332 = por %p330, %p331
      %p333 = scmp.ne.s32.totalorder %s322, %s323
      %p334 = scmp.eq.s32.totalorder %s41, 0
      %p335 = por %p333, %p334
      %p336 = scmp.ne.s32.totalorder %s322, %s323
      %p337 = scmp.eq.s32.totalorder %s42, 1
      %p338 = por %p336, %p337
      %p340 = scmp.ne.s32.totalorder %s323, %s339
      %p341 = scmp.eq.s32.totalorder %s42, 0
      %p342 = por %p340, %p341
      %p343 = scmp.le.s32.totalorder 1, %s36
      %p344 = scmp.lt.s32.totalorder %s36, 3
      %p345 = pnand %p343, %p344
      %p346 = pneg %p345
      // Predicated region
      $region9: #{mixer_model_forward.1} parent=5 // pred_check
        _
      $region10: #{mixer_model_forward.1} parent=5 // pred_check_branch
        %348 = sbr.rel (%p345) target = $region12
      $region11: #{mixer_model_forward.1} parent=5 // pred_region
        %s349 = ssub.s32 %s36, 1
        // Predicated region
        $region13: #{mixer_model_forward.1} parent=11 // pred_check
          %p350 = pneg %p57
        $region14: #{mixer_model_forward.1} parent=11 // pred_check_branch
          %352 = sbr.rel (%p350) target = $region16
        $region15: #{mixer_model_forward.1} parent=11 // pred_region
          _
        $region16: #{mixer_model_forward.1} parent=11 // pred_fallthru
          _
        // Predicated region
        $region17: #{mixer_model_forward.1} parent=11 // pred_check
          %p353 = pneg %p78
        $region18: #{mixer_model_forward.1} parent=11 // pred_check_branch
          %355 = sbr.rel (%p353) target = $region20
        $region19: #{mixer_model_forward.1} parent=11 // pred_region
          %357 = vsyncadd [#allocation5], 0
          %s358 = sshll.u32 %s2, 4
          %s359 = int_to_ptr.hbm [resolvable:$true] %s358
          %s360 = sshll.u32 [#allocation4], 4
          %s361 = int_to_ptr.vmem [resolvable:$true] %s360
          %366 = dma.hbm_to_vmem [thread:$0]  %s359, 32, %s361, [#allocation5], 16, 16, 1
        $region20: #{mixer_model_forward.1} parent=11 // pred_fallthru
          _
        // Predicated region
        $region21: #{mixer_model_forward.1} parent=11 // pred_check
          %p367 = pneg %p99
        $region22: #{mixer_model_forward.1} parent=11 // pred_check_branch
          %369 = sbr.rel (%p367) target = $region24
        $region23: #{mixer_model_forward.1} parent=11 // pred_region
          %371 = vsyncadd [#allocation8], 0
          %s372 = sshll.u32 %s3, 4
          %s373 = int_to_ptr.hbm [resolvable:$true] %s372
          %s374 = sshll.u32 [#allocation7], 4
          %s375 = int_to_ptr.vmem [resolvable:$true] %s374
          %380 = dma.hbm_to_vmem [thread:$0]  %s373, 32, %s375, [#allocation8], 16, 16, 1
        $region24: #{mixer_model_forward.1} parent=11 // pred_fallthru
          _
        // Predicated region
        $region25: #{mixer_model_forward.1} parent=11 // pred_check
          %p381 = pneg %p120
        $region26: #{mixer_model_forward.1} parent=11 // pred_check_branch
          %383 = sbr.rel (%p381) target = $region28
        $region27: #{mixer_model_forward.1} parent=11 // pred_region
          _
        $region28: #{mixer_model_forward.1} parent=11 // pred_fallthru
          _
        // Predicated region
        $region29: #{mixer_model_forward.1} parent=11 // pred_check
          %p384 = pneg %p141
        $region30: #{mixer_model_forward.1} parent=11 // pred_check_branch
          %386 = sbr.rel (%p384) target = $region32
        $region31: #{mixer_model_forward.1} parent=11 // pred_region
          _
        $region32: #{mixer_model_forward.1} parent=11 // pred_fallthru
          _
        // Predicated region
        $region33: #{mixer_model_forward.1} parent=11 // pred_check
          %p387 = pneg %p162
        $region34: #{mixer_model_forward.1} parent=11 // pred_check_branch
          %389 = sbr.rel (%p387) target = $region36
        $region35: #{mixer_model_forward.1} parent=11 // pred_region
          %391 = vsyncadd [#allocation8], 0
          %s392 = sshll.u32 %s6, 4
          %s393 = int_to_ptr.hbm [resolvable:$true] %s392
          %s394 = sshll.u32 [#allocation9], 4
          %s395 = int_to_ptr.vmem [resolvable:$true] %s394
          %400 = dma.hbm_to_vmem [thread:$0]  %s393, 32, %s395, [#allocation8], 16, 16, 1
        $region36: #{mixer_model_forward.1} parent=11 // pred_fallthru
          _
        // Predicated region
        $region37: #{mixer_model_forward.1} parent=11 // pred_check
          %p401 = pneg %p183
        $region38: #{mixer_model_forward.1} parent=11 // pred_check_branch
          %403 = sbr.rel (%p401) target = $region40
        $region39: #{mixer_model_forward.1} parent=11 // pred_region
          _
        $region40: #{mixer_model_forward.1} parent=11 // pred_fallthru
          _
        // Predicated region
        $region41: #{mixer_model_forward.1} parent=11 // pred_check
          %p404 = pneg %p204
        $region42: #{mixer_model_forward.1} parent=11 // pred_check_branch
          %406 = sbr.rel (%p404) target = $region44
        $region43: #{mixer_model_forward.1} parent=11 // pred_region
          %408 = vsyncadd [#allocation11], 0
          %s409 = sshll.u32 %s8, 4
          %s410 = int_to_ptr.hbm [resolvable:$true] %s409
          %s411 = sshll.u32 [#allocation10], 4
          %s412 = int_to_ptr.vmem [resolvable:$true] %s411
          %417 = dma.hbm_to_vmem [thread:$0]  %s410, 32, %s412, [#allocation11], 16, 16, 1
        $region44: #{mixer_model_forward.1} parent=11 // pred_fallthru
          _
        // Predicated region
        $region45: #{mixer_model_forward.1} parent=11 // pred_check
          %p418 = pneg %p225
        $region46: #{mixer_model_forward.1} parent=11 // pred_check_branch
          %420 = sbr.rel (%p418) target = $region48
        $region47: #{mixer_model_forward.1} parent=11 // pred_region
          %422 = vsyncadd [#allocation11], 0
          %s423 = sshll.u32 %s9, 4
          %s424 = int_to_ptr.hbm [resolvable:$true] %s423
          %s425 = sshll.u32 [#allocation12], 4
          %s426 = int_to_ptr.vmem [resolvable:$true] %s425
          %431 = dma.hbm_to_vmem [thread:$0]  %s424, 256, %s426, [#allocation11], 128, 128, 8
        $region48: #{mixer_model_forward.1} parent=11 // pred_fallthru
          _
        // Predicated region
        $region49: #{mixer_model_forward.1} parent=11 // pred_check
          %p432 = pneg %p246
        $region50: #{mixer_model_forward.1} parent=11 // pred_check_branch
          %434 = sbr.rel (%p432) target = $region52
        $region51: #{mixer_model_forward.1} parent=11 // pred_region
          %436 = vsyncadd [#allocation14], 0
          %s437 = sshll.u32 %s10, 4
          %s438 = int_to_ptr.hbm [resolvable:$true] %s437
          %s439 = sshll.u32 [#allocation13], 4
          %s440 = int_to_ptr.vmem [resolvable:$true] %s439
          %445 = dma.hbm_to_vmem [thread:$0]  %s438, 32, %s440, [#allocation14], 16, 16, 1
        $region52: #{mixer_model_forward.1} parent=11 // pred_fallthru
          _
        // Predicated region
        $region53: #{mixer_model_forward.1} parent=11 // pred_check
          %p446 = pneg %p267
        $region54: #{mixer_model_forward.1} parent=11 // pred_check_branch
          %448 = sbr.rel (%p446) target = $region56
        $region55: #{mixer_model_forward.1} parent=11 // pred_region
          _
        $region56: #{mixer_model_forward.1} parent=11 // pred_fallthru
          _
        // Predicated region
        $region57: #{mixer_model_forward.1} parent=11 // pred_check
          %p449 = pneg %p288
        $region58: #{mixer_model_forward.1} parent=11 // pred_check_branch
          %451 = sbr.rel (%p449) target = $region60
        $region59: #{mixer_model_forward.1} parent=11 // pred_region
          %453 = vsyncadd [#allocation14], 0
          %s455 = sshll.u32 %s12, 4
          %s456 = int_to_ptr.hbm [resolvable:$true] %s455
          %s457 = sshll.u32 [#allocation15], 4
          %s458 = int_to_ptr.vmem [resolvable:$true] %s457
          %460 = dma.hbm_to_vmem [thread:$0]  %s456, 16, %s458, [#allocation14]
        $region60: #{mixer_model_forward.1} parent=11 // pred_fallthru
          _
        // Predicated region
        $region61: #{mixer_model_forward.1} parent=11 // pred_check
          %p461 = pneg %p309
        $region62: #{mixer_model_forward.1} parent=11 // pred_check_branch
          %463 = sbr.rel (%p461) target = $region64
        $region63: #{mixer_model_forward.1} parent=11 // pred_region
          %465 = vsyncadd [#allocation17], 0
          %s467 = sshll.u32 %s13, 4
          %s468 = int_to_ptr.hbm [resolvable:$true] %s467
          %s469 = sshll.u32 [#allocation16], 4
          %s470 = int_to_ptr.vmem [resolvable:$true] %s469
          %472 = dma.hbm_to_vmem [thread:$0]  %s468, 16, %s470, [#allocation17]
        $region64: #{mixer_model_forward.1} parent=11 // pred_fallthru
          _
      $region12: #{mixer_model_forward.1} parent=5 // pred_fallthru
        _
      %p473 = scmp.lt.s32.totalorder %s36, 2
      // Predicated region
      $region65: #{mixer_model_forward.1} parent=5 // pred_check
        %p474 = pneg %p473
      $region66: #{mixer_model_forward.1} parent=5 // pred_check_branch
        %476 = sbr.rel (%p474) target = $region68
      $region67: #{mixer_model_forward.1} parent=5 // pred_region
        _
      $region68: #{mixer_model_forward.1} parent=5 // pred_fallthru
        _
      %p477 = scmp.le.s32.totalorder 1, %s36
      %p478 = scmp.lt.s32.totalorder %s36, 3
      %p479 = pnand %p477, %p478
      %p480 = pneg %p479
      // Predicated region
      $region69: #{mixer_model_forward.1} parent=5 // pred_check
        _
      $region70: #{mixer_model_forward.1} parent=5 // pred_check_branch
        %482 = sbr.rel (%p479) target = $region72
      $region71: #{mixer_model_forward.1} parent=5 // pred_region
        %s483 = ssub.s32 %s36, 1
        // Predicated region
        $region73: #{mixer_model_forward.1} parent=71 // pred_check
          %p484 = pneg %p78
        $region74: #{mixer_model_forward.1} parent=71 // pred_check_branch
          %486 = sbr.rel (%p484) target = $region76
        $region75: #{mixer_model_forward.1} parent=71 // pred_region
          %488 = dma.done [#allocation5], 32
        $region76: #{mixer_model_forward.1} parent=71 // pred_fallthru
          _
        // Predicated region
        $region77: #{mixer_model_forward.1} parent=71 // pred_check
          %p489 = pneg %p99
        $region78: #{mixer_model_forward.1} parent=71 // pred_check_branch
          %491 = sbr.rel (%p489) target = $region80
        $region79: #{mixer_model_forward.1} parent=71 // pred_region
          %493 = dma.done [#allocation8], 32
        $region80: #{mixer_model_forward.1} parent=71 // pred_fallthru
          _
        // Predicated region
        $region81: #{mixer_model_forward.1} parent=71 // pred_check
          %p494 = pneg %p162
        $region82: #{mixer_model_forward.1} parent=71 // pred_check_branch
          %496 = sbr.rel (%p494) target = $region84
        $region83: #{mixer_model_forward.1} parent=71 // pred_region
          %498 = dma.done [#allocation8], 32
        $region84: #{mixer_model_forward.1} parent=71 // pred_fallthru
          _
        // Predicated region
        $region85: #{mixer_model_forward.1} parent=71 // pred_check
          %p499 = pneg %p204
        $region86: #{mixer_model_forward.1} parent=71 // pred_check_branch
          %501 = sbr.rel (%p499) target = $region88
        $region87: #{mixer_model_forward.1} parent=71 // pred_region
          %503 = dma.done [#allocation11], 32
        $region88: #{mixer_model_forward.1} parent=71 // pred_fallthru
          _
        // Predicated region
        $region89: #{mixer_model_forward.1} parent=71 // pred_check
          %p504 = pneg %p225
        $region90: #{mixer_model_forward.1} parent=71 // pred_check_branch
          %506 = sbr.rel (%p504) target = $region92
        $region91: #{mixer_model_forward.1} parent=71 // pred_region
          %508 = dma.done [#allocation11], 256
        $region92: #{mixer_model_forward.1} parent=71 // pred_fallthru
          _
        // Predicated region
        $region93: #{mixer_model_forward.1} parent=71 // pred_check
          %p509 = pneg %p246
        $region94: #{mixer_model_forward.1} parent=71 // pred_check_branch
          %511 = sbr.rel (%p509) target = $region96
        $region95: #{mixer_model_forward.1} parent=71 // pred_region
          %513 = dma.done [#allocation14], 32
        $region96: #{mixer_model_forward.1} parent=71 // pred_fallthru
          _
        // Predicated region
        $region97: #{mixer_model_forward.1} parent=71 // pred_check
          %p514 = pneg %p288
        $region98: #{mixer_model_forward.1} parent=71 // pred_check_branch
          %516 = sbr.rel (%p514) target = $region100
        $region99: #{mixer_model_forward.1} parent=71 // pred_region
          %518 = dma.done [#allocation14], 16
        $region100: #{mixer_model_forward.1} parent=71 // pred_fallthru
          _
        // Predicated region
        $region101: #{mixer_model_forward.1} parent=71 // pred_check
          %p519 = pneg %p309
        $region102: #{mixer_model_forward.1} parent=71 // pred_check_branch
          %521 = sbr.rel (%p519) target = $region104
        $region103: #{mixer_model_forward.1} parent=71 // pred_region
          %523 = dma.done [#allocation17], 16
        $region104: #{mixer_model_forward.1} parent=71 // pred_fallthru
          _
        %p524 = pneg %p57
        %p525 = pneg %p54
        %p526 = pneg %p78
        %p527 = pneg %p75
        %p528 = pneg %p99
        %p529 = pneg %p96
        %p530 = pneg %p120
        %p531 = pneg %p117
        %p532 = pneg %p141
        %p533 = pneg %p138
        %p534 = pneg %p162
        %p535 = pneg %p159
        %p536 = pneg %p183
        %p537 = pneg %p180
        %p538 = pneg %p204
        %p539 = pneg %p201
        %p540 = pneg %p225
        %p541 = pneg %p222
        %p542 = pneg %p246
        %p543 = pneg %p243
        %p544 = pneg %p267
        %p545 = pneg %p264
        %p546 = pneg %p288
        %p547 = pneg %p285
        %p548 = pneg %p309
        %p549 = pneg %p306
        %p550 = pneg %p335
        %p551 = pneg %p332
        %s552 = sand.u32 %s322, 1
        %s553 = scalar_lea.sflag [#allocation6], %s552
        %s554 = sand.u32 %s322, 1
        %s555 = smul.addr %s554, 8
        %s556 = scalar_lea.vmem [#allocation18], %s555
        %s558 = smul.u32 %s41, 128
        %s559 = sld [smem:[#allocation3 + %s558]]
        %s560 = scalar_lea.vmem %s1, %s559
        %v561 = vld [vmem:[%s560] sm:$0x1]
        %s562 = sadd.s32 %s558, 1
        %s563 = sld [smem:[#allocation3 + %s562]]
        %s564 = scalar_lea.vmem %s1, %s563
        %v565 = vld [vmem:[%s564] sm:$0x1]
        %s566 = sadd.s32 %s558, 2
        %s567 = sld [smem:[#allocation3 + %s566]]
        %s568 = scalar_lea.vmem %s1, %s567
        %v569 = vld [vmem:[%s568] sm:$0x1]
        %s570 = sadd.s32 %s558, 3
        %s571 = sld [smem:[#allocation3 + %s570]]
        %s572 = scalar_lea.vmem %s1, %s571
        %v573 = vld [vmem:[%s572] sm:$0x1]
        %s574 = sadd.s32 %s558, 4
        %s575 = sld [smem:[#allocation3 + %s574]]
        %s576 = scalar_lea.vmem %s1, %s575
        %v577 = vld [vmem:[%s576] sm:$0x1]
        %s578 = sadd.s32 %s558, 5
        %s579 = sld [smem:[#allocation3 + %s578]]
        %s580 = scalar_lea.vmem %s1, %s579
        %v581 = vld [vmem:[%s580] sm:$0x1]
        %s582 = sadd.s32 %s558, 6
        %s583 = sld [smem:[#allocation3 + %s582]]
        %s584 = scalar_lea.vmem %s1, %s583
        %v585 = vld [vmem:[%s584] sm:$0x1]
        %s586 = sadd.s32 %s558, 7
        %s587 = sld [smem:[#allocation3 + %s586]]
        %s588 = scalar_lea.vmem %s1, %s587
        %v589 = vld [vmem:[%s588] sm:$0x1]
        %v591 = vrot.slane %v565, 7
        %v594 = vrot.slane %v569, 6
        %v597 = vrot.slane %v573, 5
        %v600 = vrot.slane %v577, 4
        %v603 = vrot.slane %v581, 3
        %v606 = vrot.slane %v585, 2
        %v609 = vrot.slane %v589, 1
        %vm611 = vcmask 1040384
        %v612 = vsel %vm611, %v561, %v591
        %vm613 = vcmask 1041408
        %v614 = vsel %vm613, %v612, %v594
        %vm615 = vcmask 1042432
        %v616 = vsel %vm615, %v614, %v597
        %vm617 = vcmask 1043456
        %v618 = vsel %vm617, %v616, %v600
        %vm619 = vcmask 1044480
        %v620 = vsel %vm619, %v618, %v603
        %vm621 = vcmask 1045504
        %v622 = vsel %vm621, %v620, %v606
        %vm623 = vcmask 1046528
        %v624 = vsel %vm623, %v622, %v609
        %v625 = vlaneseq
        %v626 = vshrl.u32 %v625, 7
        %vm627 = vcmp.ge.s32.totalorder %v626, 1
        %vm628 = vcmp.ge.s32.totalorder %v626, 2
        %vm629 = vcmp.ge.s32.totalorder %v626, 3
        %v630 = vadd.f32 %v624, 0.0
        %v631 = vld [vmem:[#allocation4] sm:$0x1]
        %v632 = vld [vmem:[#allocation7] sm:$0x1]
        %vm633 = vcmask 261120
        %v634 = vsel %vm633, %v630, 0.0
        %635 = vadd.xlane.f32.xlu0 %v634
        %v636 = vpop.xlane.xlu0 %635
        %v637 = vrcp.pop 32.0
        %v638 = vmul.f32 32.0, %v637
        %v639 = vsub.f32 1.0, %v638
        %v640 = vmul.f32 %v637, %v639
        %v641 = vadd.f32 %v637, %v640
        %vm642 = vweird.f32 %v637
        %v643 = vsel %vm642, %v637, %v641
        %v644 = vmul.f32 %v636, %v643
        %v645 = vsub.f32 %v630, %v644
        %v646 = vmul.f32 %v645, %v645
        %v647 = vsel %vm633, %v646, 0.0
        %648 = vadd.xlane.f32.xlu0 %v647
        %v649 = vpop.xlane.xlu0 %648
        %v650 = vmul.f32 %v649, %v643
        %v651 = vadd.f32 %v650, 1e-05
        %v652 = vrsqrt.pop %v651
        %v653 = vmul.f32 %v652, %v651
        %v654 = vmul.f32 %v653, %v652
        %v655 = vmul.f32 0.5, %v654
        %v656 = vsub.f32 1.5, %v655
        %v657 = vmul.f32 %v652, %v656
        %vm658 = vweird.f32 %v651
        %vm659 = vweird.f32 %v652
        %vm660 = vmor %vm658, %vm659
        %v661 = vsel %vm660, %v652, %v657
        %v662 = vmul.f32 %v645, %v661
        %v664 = vperm.slane %v631, 0
        %v666 = vmul.f32 %v662, %v664
        %v668 = vperm.slane %v632, 0
        %v670 = vadd.f32 %v666, %v668
        %v671 = vpack.c.bf16 %v670, %v670
        %v672 = vld [vmem:[%s4] sm:$0xf]
        %v673 = vld [vmem:[%s4 + $0x4] sm:$0xf]
        %v674 = vld [vmem:[%s4 + $0x8] sm:$0xf]
        %v675 = vld [vmem:[%s4 + $0xc] sm:$0xf]
        %v680 = vunpack.c.l.b16 %v672
        %v681 = vunpack.c.l.b16 %v673
        %v682 = vunpack.c.l.b16 %v674
        %v683 = vunpack.c.l.b16 %v675
        %v684 = vpack.c.b16 %v681, %v680
        %v685 = vpack.c.b16 %v683, %v682
        %v689 = vsel %vm633, %v671, 0
        %691 = vmatpush.bf16.msra.mxu0 0
        %692 = vmatpush.bf16.msra.mxu0 0
        %693 = vmatpush.bf16.msra.mxu0 0
        %694 = vmatpush.bf16.msra.mxu0 0
        %695 = vmatpush.bf16.msra.mxu0 0
        %696 = vmatpush.bf16.msra.mxu0 0
        %697 = vmatpush.bf16.msra.mxu0 %v685
        %698 = vmatpush.bf16.msra.mxu0 %v684
        %699 = vmatmul.bf16.gmra.mxu0 %v689
        %v700 = vpop.f32.mrf.mxu0
        %v701 = vadd.f32 0.0, %v700
        %v702 = vpop.f32.mrf.mxu0
        %703 = vdwg.mxu0
        %v704 = vld [vmem:[%s5] sm:$0xf]
        %v705 = vrot.slane %v701, 7
        %v706 = vsel %vm627, %v705, 0.0
        %v707 = vrot.slane %v701, 6
        %v708 = vsel %vm628, %v707, 0.0
        %v709 = vrot.slane %v701, 5
        %v710 = vsel %vm629, %v709, 0.0
        %v711 = vld [vmem:[#allocation9] sm:$0x1]
        %v713 = vperm.slane %v711, 0
        %v715 = vperm.slane %v704, 3
        %v716 = vmul.f32 %v701, %v715
        %v717 = vadd.f32 %v713, %v716
        %v718 = vperm.slane %v704, 2
        %v719 = vmul.f32 %v706, %v718
        %v720 = vadd.f32 %v717, %v719
        %v721 = vperm.slane %v704, 1
        %v722 = vmul.f32 %v708, %v721
        %v723 = vadd.f32 %v720, %v722
        %v724 = vperm.slane %v704, 0
        %v725 = vmul.f32 %v710, %v724
        %v726 = vadd.f32 %v723, %v725
        %v727 = vsub.f32 0.0, %v726
        %v728 = vmul.f32 %v727, 1.442695
        %v729 = vpow.pop %v728
        %v730 = vadd.f32 %v729, 1.0
        %v731 = vrcp.pop %v730
        %v732 = vmul.f32 %v730, %v731
        %v733 = vsub.f32 1.0, %v732
        %v734 = vmul.f32 %v731, %v733
        %v735 = vadd.f32 %v731, %v734
        %vm736 = vweird.f32 %v730
        %vm737 = vweird.f32 %v731
        %vm738 = vmor %vm736, %vm737
        %v739 = vsel %vm738, %v731, %v735
        %v740 = vand.u32 2147483647, %v730
        %vm741 = vcmp.eq.f32.partialorder %v740, 8.507059e+37
        %v742 = vand.u32 %v730, 2147483648
        %v743 = vor.u32 1.1754944e-38, %v742
        %v744 = vsel %vm741, %v743, %v739
        %v745 = vmul.f32 1.0, %v744
        %v746 = vmul.f32 %v726, %v745
        %v747 = vld [vmem:[%s7] sm:$0xff]
        %v748 = vld [vmem:[%s7 + $0x8] sm:$0xff]
        %v749 = vld [vmem:[%s7 + $0x10] sm:$0xff]
        %v750 = vld [vmem:[%s7 + $0x18] sm:$0xff]
        %v751 = vld [vmem:[%s7 + $0x20] sm:$0xff]
        %v752 = vld [vmem:[%s7 + $0x28] sm:$0xff]
        %v753 = vld [vmem:[%s7 + $0x30] sm:$0xff]
        %v754 = vld [vmem:[%s7 + $0x38] sm:$0xff]
        %vm755 = vcmask 523264
        %v757 = vsel %vm755, %v746, 0
        %759 = vmatpush.msra.mxu0 0.0
        %760 = vmatpush.msra.mxu0 0.0
        %761 = vmatpush.msra.mxu0 0.0
        %762 = vmatpush.msra.mxu0 0.0
        %763 = vmatpush.msra.mxu0 0.0
        %764 = vmatpush.msra.mxu0 0.0
        %765 = vmatpush.msra.mxu0 0.0
        %766 = vmatpush.msra.mxu0 0.0
        %767 = vmatpush.msra.mxu0 %v754
        %768 = vmatpush.msra.mxu0 %v753
        %769 = vmatpush.msra.mxu0 %v752
        %770 = vmatpush.msra.mxu0 %v751
        %771 = vmatpush.msra.mxu0 %v750
        %772 = vmatpush.msra.mxu0 %v749
        %773 = vmatpush.msra.mxu0 %v748
        %774 = vmatpush.msra.mxu0 %v747
        %775 = vmatmul.f32.gmra.mxu0 %v757
        %v776 = vpop.f32.mrf.mxu0
        %v777 = vadd.f32 0.0, %v776
        %778 = vdwg.mxu0
        %v779 = vld [vmem:[#allocation10] sm:$0x1]
        %v781 = vperm.slane %v779, 0
        %v783 = vadd.f32 %v777, %v781
        %vm784 = vcmp.gt.f32.partialorder %v783, 20.0
        %v785 = vmul.f32 %v783, 1.442695
        %v786 = vpow.pop %v785
        %v787 = vadd.f32 %v786, 1.0
        %v788 = vlog2.pop %v787
        %v789 = vmul.f32 %v788, 0.6931472
        %v790 = vmul.f32 -0.5, %v786
        %v791 = vadd.f32 %v790, 1.0
        %v792 = vmul.f32 %v791, %v786
        %v793 = vand.u32 2147483647, %v786
        %vm794 = vcmp.lt.f32.partialorder %v793, 0.0004427343
        %v795 = vsel %vm794, %v792, %v789
        %v796 = vsel %vm784, %v783, %v795
        %v797 = vmul.f32 %v796, %v746
        %799 = vrot.lane.b32.xlu0 %v796, 64
        %v800 = vpop.permute.xlu0 %799
        %v802 = vsel %vm755, %v796, %v800
        %804 = vrot.lane.b32.xlu0 %v797, 64
        %v805 = vpop.permute.xlu0 %804
        %v807 = vsel %vm755, %v797, %v805
        %v809 = vrot.slane %v802, 1
        %v810 = vrot.slane %v802, 2
        %v811 = vrot.slane %v802, 3
        %v812 = vrot.slane %v802, 4
        %v813 = vrot.slane %v802, 5
        %v814 = vrot.slane %v802, 6
        %v815 = vrot.slane %v802, 7
        %v816 = vld [vmem:[#allocation12] sm:$0xff]
        %v817 = vperm.slane %v802, 0
        %v818 = vperm.slane %v809, 0
        %v819 = vperm.slane %v810, 0
        %v820 = vperm.slane %v811, 0
        %v821 = vperm.slane %v812, 0
        %v822 = vperm.slane %v813, 0
        %v823 = vperm.slane %v814, 0
        %v824 = vperm.slane %v815, 0
        %v833 = vmul.f32 %v817, %v816
        %v834 = vmul.f32 %v818, %v816
        %v835 = vmul.f32 %v819, %v816
        %v836 = vmul.f32 %v820, %v816
        %v837 = vmul.f32 %v821, %v816
        %v838 = vmul.f32 %v822, %v816
        %v839 = vmul.f32 %v823, %v816
        %v840 = vmul.f32 %v824, %v816
        %v841 = vmul.f32 %v833, 1.442695
        %v842 = vpow.pop %v841
        %v843 = vmul.f32 %v834, 1.442695
        %v844 = vpow.pop %v843
        %v845 = vmul.f32 %v835, 1.442695
        %v846 = vpow.pop %v845
        %v847 = vmul.f32 %v836, 1.442695
        %v848 = vpow.pop %v847
        %v849 = vmul.f32 %v837, 1.442695
        %v850 = vpow.pop %v849
        %v851 = vmul.f32 %v838, 1.442695
        %v852 = vpow.pop %v851
        %v853 = vmul.f32 %v839, 1.442695
        %v854 = vpow.pop %v853
        %v855 = vmul.f32 %v840, 1.442695
        %v856 = vpow.pop %v855
        %v857 = vperm.slane %v777, 0
        %v858 = vlaneseq
        %v859 = vshrl.u32 %v858, 7
        %v860 = vadd.s32 %v859, 64
        %861 = vset.pattern.permute.xlu0 %v860
        %862 = vperm.xlu0 %861, %v857
        %v863 = vpop.permute.xlu0 %862
        %v864 = vperm.slane %v777, 1
        %v865 = vlaneseq
        %v866 = vshrl.u32 %v865, 7
        %v867 = vadd.s32 %v866, 64
        %868 = vset.pattern.permute.xlu0 %v867
        %869 = vperm.xlu0 %868, %v864
        %v870 = vpop.permute.xlu0 %869
        %v871 = vperm.slane %v777, 2
        %v872 = vlaneseq
        %v873 = vshrl.u32 %v872, 7
        %v874 = vadd.s32 %v873, 64
        %875 = vset.pattern.permute.xlu0 %v874
        %876 = vperm.xlu0 %875, %v871
        %v877 = vpop.permute.xlu0 %876
        %v878 = vperm.slane %v777, 3
        %v879 = vlaneseq
        %v880 = vshrl.u32 %v879, 7
        %v881 = vadd.s32 %v880, 64
        %882 = vset.pattern.permute.xlu0 %v881
        %883 = vperm.xlu0 %882, %v878
        %v884 = vpop.permute.xlu0 %883
        %v885 = vperm.slane %v777, 4
        %v886 = vlaneseq
        %v887 = vshrl.u32 %v886, 7
        %v888 = vadd.s32 %v887, 64
        %889 = vset.pattern.permute.xlu0 %v888
        %890 = vperm.xlu0 %889, %v885
        %v891 = vpop.permute.xlu0 %890
        %v892 = vperm.slane %v777, 5
        %v893 = vlaneseq
        %v894 = vshrl.u32 %v893, 7
        %v895 = vadd.s32 %v894, 64
        %896 = vset.pattern.permute.xlu0 %v895
        %897 = vperm.xlu0 %896, %v892
        %v898 = vpop.permute.xlu0 %897
        %v899 = vperm.slane %v777, 6
        %v900 = vlaneseq
        %v901 = vshrl.u32 %v900, 7
        %v902 = vadd.s32 %v901, 64
        %903 = vset.pattern.permute.xlu0 %v902
        %904 = vperm.xlu0 %903, %v899
        %v905 = vpop.permute.xlu0 %904
        %v906 = vperm.slane %v777, 7
        %v907 = vlaneseq
        %v908 = vshrl.u32 %v907, 7
        %v909 = vadd.s32 %v908, 64
        %910 = vset.pattern.permute.xlu0 %v909
        %911 = vperm.xlu0 %910, %v906
        %v912 = vpop.permute.xlu0 %911
        %v913 = vlaneseq
        %v914 = vshrl.u32 %v913, 7
        %v915 = vadd.s32 %v914, 72
        %916 = vset.pattern.permute.xlu0 %v915
        %917 = vperm.xlu0 %916, %v857
        %v918 = vpop.permute.xlu0 %917
        %v919 = vlaneseq
        %v920 = vshrl.u32 %v919, 7
        %v921 = vadd.s32 %v920, 72
        %922 = vset.pattern.permute.xlu0 %v921
        %923 = vperm.xlu0 %922, %v864
        %v924 = vpop.permute.xlu0 %923
        %v925 = vlaneseq
        %v926 = vshrl.u32 %v925, 7
        %v927 = vadd.s32 %v926, 72
        %928 = vset.pattern.permute.xlu0 %v927
        %929 = vperm.xlu0 %928, %v871
        %v930 = vpop.permute.xlu0 %929
        %v931 = vlaneseq
        %v932 = vshrl.u32 %v931, 7
        %v933 = vadd.s32 %v932, 72
        %934 = vset.pattern.permute.xlu0 %v933
        %935 = vperm.xlu0 %934, %v878
        %v936 = vpop.permute.xlu0 %935
        %v937 = vlaneseq
        %v938 = vshrl.u32 %v937, 7
        %v939 = vadd.s32 %v938, 72
        %940 = vset.pattern.permute.xlu0 %v939
        %941 = vperm.xlu0 %940, %v885
        %v942 = vpop.permute.xlu0 %941
        %v943 = vlaneseq
        %v944 = vshrl.u32 %v943, 7
        %v945 = vadd.s32 %v944, 72
        %946 = vset.pattern.permute.xlu0 %v945
        %947 = vperm.xlu0 %946, %v892
        %v948 = vpop.permute.xlu0 %947
        %v949 = vlaneseq
        %v950 = vshrl.u32 %v949, 7
        %v951 = vadd.s32 %v950, 72
        %952 = vset.pattern.permute.xlu0 %v951
        %953 = vperm.xlu0 %952, %v899
        %v954 = vpop.permute.xlu0 %953
        %v955 = vlaneseq
        %v956 = vshrl.u32 %v955, 7
        %v957 = vadd.s32 %v956, 72
        %958 = vset.pattern.permute.xlu0 %v957
        %959 = vperm.xlu0 %958, %v906
        %v960 = vpop.permute.xlu0 %959
        %v961 = vsel %vm755, %v863, %v918
        %v962 = vsel %vm755, %v870, %v924
        %v963 = vsel %vm755, %v877, %v930
        %v964 = vsel %vm755, %v884, %v936
        %v965 = vsel %vm755, %v891, %v942
        %v966 = vsel %vm755, %v898, %v948
        %v967 = vsel %vm755, %v905, %v954
        %v968 = vsel %vm755, %v912, %v960
        %v970 = vrot.slane %v807, 1
        %v971 = vrot.slane %v807, 2
        %v972 = vrot.slane %v807, 3
        %v973 = vrot.slane %v807, 4
        %v974 = vrot.slane %v807, 5
        %v975 = vrot.slane %v807, 6
        %v976 = vrot.slane %v807, 7
        %v977 = vperm.slane %v807, 0
        %v978 = vperm.slane %v970, 0
        %v979 = vperm.slane %v971, 0
        %v980 = vperm.slane %v972, 0
        %v981 = vperm.slane %v973, 0
        %v982 = vperm.slane %v974, 0
        %v983 = vperm.slane %v975, 0
        %v984 = vperm.slane %v976, 0
        %v993 = vmul.f32 %v977, %v961
        %v994 = vmul.f32 %v978, %v962
        %v995 = vmul.f32 %v979, %v963
        %v996 = vmul.f32 %v980, %v964
        %v997 = vmul.f32 %v981, %v965
        %v998 = vmul.f32 %v982, %v966
        %v999 = vmul.f32 %v983, %v967
        %v1000 = vmul.f32 %v984, %v968
        %v1001 = vlaneseq
        %v1002 = vshrl.u32 %v1001, 7
        %v1003 = vadd.s32 %v1002, 80
        %1004 = vset.pattern.permute.xlu0 %v1003
        %1005 = vperm.xlu0 %1004, %v857
        %v1006 = vpop.permute.xlu0 %1005
        %v1007 = vlaneseq
        %v1008 = vshrl.u32 %v1007, 7
        %v1009 = vadd.s32 %v1008, 80
        %1010 = vset.pattern.permute.xlu0 %v1009
        %1011 = vperm.xlu0 %1010, %v864
        %v1012 = vpop.permute.xlu0 %1011
        %v1013 = vlaneseq
        %v1014 = vshrl.u32 %v1013, 7
        %v1015 = vadd.s32 %v1014, 80
        %1016 = vset.pattern.permute.xlu0 %v1015
        %1017 = vperm.xlu0 %1016, %v871
        %v1018 = vpop.permute.xlu0 %1017
        %v1019 = vlaneseq
        %v1020 = vshrl.u32 %v1019, 7
        %v1021 = vadd.s32 %v1020, 80
        %1022 = vset.pattern.permute.xlu0 %v1021
        %1023 = vperm.xlu0 %1022, %v878
        %v1024 = vpop.permute.xlu0 %1023
        %v1025 = vlaneseq
        %v1026 = vshrl.u32 %v1025, 7
        %v1027 = vadd.s32 %v1026, 80
        %1028 = vset.pattern.permute.xlu0 %v1027
        %1029 = vperm.xlu0 %1028, %v885
        %v1030 = vpop.permute.xlu0 %1029
        %v1031 = vlaneseq
        %v1032 = vshrl.u32 %v1031, 7
        %v1033 = vadd.s32 %v1032, 80
        %1034 = vset.pattern.permute.xlu0 %v1033
        %1035 = vperm.xlu0 %1034, %v892
        %v1036 = vpop.permute.xlu0 %1035
        %v1037 = vlaneseq
        %v1038 = vshrl.u32 %v1037, 7
        %v1039 = vadd.s32 %v1038, 80
        %1040 = vset.pattern.permute.xlu0 %v1039
        %1041 = vperm.xlu0 %1040, %v899
        %v1042 = vpop.permute.xlu0 %1041
        %v1043 = vlaneseq
        %v1044 = vshrl.u32 %v1043, 7
        %v1045 = vadd.s32 %v1044, 80
        %1046 = vset.pattern.permute.xlu0 %v1045
        %1047 = vperm.xlu0 %1046, %v906
        %v1048 = vpop.permute.xlu0 %1047
        %v1049 = vlaneseq
        %v1050 = vshrl.u32 %v1049, 7
        %v1051 = vadd.s32 %v1050, 88
        %1052 = vset.pattern.permute.xlu0 %v1051
        %1053 = vperm.xlu0 %1052, %v857
        %v1054 = vpop.permute.xlu0 %1053
        %v1055 = vlaneseq
        %v1056 = vshrl.u32 %v1055, 7
        %v1057 = vadd.s32 %v1056, 88
        %1058 = vset.pattern.permute.xlu0 %v1057
        %1059 = vperm.xlu0 %1058, %v864
        %v1060 = vpop.permute.xlu0 %1059
        %v1061 = vlaneseq
        %v1062 = vshrl.u32 %v1061, 7
        %v1063 = vadd.s32 %v1062, 88
        %1064 = vset.pattern.permute.xlu0 %v1063
        %1065 = vperm.xlu0 %1064, %v871
        %v1066 = vpop.permute.xlu0 %1065
        %v1067 = vlaneseq
        %v1068 = vshrl.u32 %v1067, 7
        %v1069 = vadd.s32 %v1068, 88
        %1070 = vset.pattern.permute.xlu0 %v1069
        %1071 = vperm.xlu0 %1070, %v878
        %v1072 = vpop.permute.xlu0 %1071
        %v1073 = vlaneseq
        %v1074 = vshrl.u32 %v1073, 7
        %v1075 = vadd.s32 %v1074, 88
        %1076 = vset.pattern.permute.xlu0 %v1075
        %1077 = vperm.xlu0 %1076, %v885
        %v1078 = vpop.permute.xlu0 %1077
        %v1079 = vlaneseq
        %v1080 = vshrl.u32 %v1079, 7
        %v1081 = vadd.s32 %v1080, 88
        %1082 = vset.pattern.permute.xlu0 %v1081
        %1083 = vperm.xlu0 %1082, %v892
        %v1084 = vpop.permute.xlu0 %1083
        %v1085 = vlaneseq
        %v1086 = vshrl.u32 %v1085, 7
        %v1087 = vadd.s32 %v1086, 88
        %1088 = vset.pattern.permute.xlu0 %v1087
        %1089 = vperm.xlu0 %1088, %v899
        %v1090 = vpop.permute.xlu0 %1089
        %v1091 = vlaneseq
        %v1092 = vshrl.u32 %v1091, 7
        %v1093 = vadd.s32 %v1092, 88
        %1094 = vset.pattern.permute.xlu0 %v1093
        %1095 = vperm.xlu0 %1094, %v906
        %v1096 = vpop.permute.xlu0 %1095
        %v1097 = vsel %vm755, %v1006, %v1054
        %v1098 = vsel %vm755, %v1012, %v1060
        %v1099 = vsel %vm755, %v1018, %v1066
        %v1100 = vsel %vm755, %v1024, %v1072
        %v1101 = vsel %vm755, %v1030, %v1078
        %v1102 = vsel %vm755, %v1036, %v1084
        %v1103 = vsel %vm755, %v1042, %v1090
        %v1104 = vsel %vm755, %v1048, %v1096
        %v1105 = vmul.f32 %v842, 0.0
        %v1106 = vadd.f32 %v1105, %v993
        %v1107 = vmul.f32 %v844, %v1106
        %v1108 = vadd.f32 %v1107, %v994
        %v1109 = vmul.f32 %v846, %v1108
        %v1110 = vadd.f32 %v1109, %v995
        %v1111 = vmul.f32 %v848, %v1110
        %v1112 = vadd.f32 %v1111, %v996
        %v1113 = vmul.f32 %v850, %v1112
        %v1114 = vadd.f32 %v1113, %v997
        %v1115 = vmul.f32 %v852, %v1114
        %v1116 = vadd.f32 %v1115, %v998
        %v1117 = vmul.f32 %v854, %v1116
        %v1118 = vadd.f32 %v1117, %v999
        %v1119 = vmul.f32 %v856, %v1118
        %v1120 = vadd.f32 %v1119, %v1000
        %v1121 = vmul.f32 %v1106, %v1097
        %v1122 = vmul.f32 %v1108, %v1098
        %v1123 = vmul.f32 %v1110, %v1099
        %v1124 = vmul.f32 %v1112, %v1100
        %v1125 = vmul.f32 %v1114, %v1101
        %v1126 = vmul.f32 %v1116, %v1102
        %v1127 = vmul.f32 %v1118, %v1103
        %v1128 = vmul.f32 %v1120, %v1104
        %v1129 = vrot.slane %v1121, 4
        %v1130 = vadd.f32 %v1121, %v1129
        %v1131 = vrot.slane %v1130, 2
        %v1132 = vadd.f32 %v1130, %v1131
        %v1133 = vrot.slane %v1132, 1
        %v1134 = vadd.f32 %v1132, %v1133
        %v1135 = vrot.slane %v1122, 4
        %v1136 = vadd.f32 %v1122, %v1135
        %v1137 = vrot.slane %v1136, 2
        %v1138 = vadd.f32 %v1136, %v1137
        %v1139 = vrot.slane %v1138, 1
        %v1140 = vadd.f32 %v1138, %v1139
        %v1141 = vrot.slane %v1123, 4
        %v1142 = vadd.f32 %v1123, %v1141
        %v1143 = vrot.slane %v1142, 2
        %v1144 = vadd.f32 %v1142, %v1143
        %v1145 = vrot.slane %v1144, 1
        %v1146 = vadd.f32 %v1144, %v1145
        %v1147 = vrot.slane %v1124, 4
        %v1148 = vadd.f32 %v1124, %v1147
        %v1149 = vrot.slane %v1148, 2
        %v1150 = vadd.f32 %v1148, %v1149
        %v1151 = vrot.slane %v1150, 1
        %v1152 = vadd.f32 %v1150, %v1151
        %v1153 = vrot.slane %v1125, 4
        %v1154 = vadd.f32 %v1125, %v1153
        %v1155 = vrot.slane %v1154, 2
        %v1156 = vadd.f32 %v1154, %v1155
        %v1157 = vrot.slane %v1156, 1
        %v1158 = vadd.f32 %v1156, %v1157
        %v1159 = vrot.slane %v1126, 4
        %v1160 = vadd.f32 %v1126, %v1159
        %v1161 = vrot.slane %v1160, 2
        %v1162 = vadd.f32 %v1160, %v1161
        %v1163 = vrot.slane %v1162, 1
        %v1164 = vadd.f32 %v1162, %v1163
        %v1165 = vrot.slane %v1127, 4
        %v1166 = vadd.f32 %v1127, %v1165
        %v1167 = vrot.slane %v1166, 2
        %v1168 = vadd.f32 %v1166, %v1167
        %v1169 = vrot.slane %v1168, 1
        %v1170 = vadd.f32 %v1168, %v1169
        %v1171 = vrot.slane %v1128, 4
        %v1172 = vadd.f32 %v1128, %v1171
        %v1173 = vrot.slane %v1172, 2
        %v1174 = vadd.f32 %v1172, %v1173
        %v1175 = vrot.slane %v1174, 1
        %v1176 = vadd.f32 %v1174, %v1175
        %1185 = vrot.lane.b32.xlu0 %v1134, 64
        %v1186 = vpop.permute.xlu0 %1185
        %1187 = vrot.lane.b32.xlu0 %v1140, 64
        %v1188 = vpop.permute.xlu0 %1187
        %1189 = vrot.lane.b32.xlu0 %v1146, 64
        %v1190 = vpop.permute.xlu0 %1189
        %1191 = vrot.lane.b32.xlu0 %v1152, 64
        %v1192 = vpop.permute.xlu0 %1191
        %1193 = vrot.lane.b32.xlu0 %v1158, 64
        %v1194 = vpop.permute.xlu0 %1193
        %1195 = vrot.lane.b32.xlu0 %v1164, 64
        %v1196 = vpop.permute.xlu0 %1195
        %1197 = vrot.lane.b32.xlu0 %v1170, 64
        %v1198 = vpop.permute.xlu0 %1197
        %1199 = vrot.lane.b32.xlu0 %v1176, 64
        %v1200 = vpop.permute.xlu0 %1199
        %v1209 = vadd.f32 %v1134, %v1186
        %v1210 = vadd.f32 %v1140, %v1188
        %v1211 = vadd.f32 %v1146, %v1190
        %v1212 = vadd.f32 %v1152, %v1192
        %v1213 = vadd.f32 %v1158, %v1194
        %v1214 = vadd.f32 %v1164, %v1196
        %v1215 = vadd.f32 %v1170, %v1198
        %v1216 = vadd.f32 %v1176, %v1200
        %v1217 = vld [vmem:[#allocation13] sm:$0x1]
        %v1219 = vperm.slane %v1217, 0
        %v1221 = vmul.f32 %v746, %v1219
        %v1223 = vrot.slane %v1221, 1
        %v1224 = vrot.slane %v1221, 2
        %v1225 = vrot.slane %v1221, 3
        %v1226 = vrot.slane %v1221, 4
        %v1227 = vrot.slane %v1221, 5
        %v1228 = vrot.slane %v1221, 6
        %v1229 = vrot.slane %v1221, 7
        %v1238 = vadd.f32 %v1209, %v1221
        %v1239 = vadd.f32 %v1210, %v1223
        %v1240 = vadd.f32 %v1211, %v1224
        %v1241 = vadd.f32 %v1212, %v1225
        %v1242 = vadd.f32 %v1213, %v1226
        %v1243 = vadd.f32 %v1214, %v1227
        %v1244 = vadd.f32 %v1215, %v1228
        %v1245 = vadd.f32 %v1216, %v1229
        %v1246 = vsub.f32 0.0, %v701
        %v1247 = vmul.f32 %v1246, 1.442695
        %v1248 = vpow.pop %v1247
        %v1249 = vadd.f32 %v1248, 1.0
        %v1250 = vrcp.pop %v1249
        %v1251 = vmul.f32 %v1249, %v1250
        %v1252 = vsub.f32 1.0, %v1251
        %v1253 = vmul.f32 %v1250, %v1252
        %v1254 = vadd.f32 %v1250, %v1253
        %vm1255 = vweird.f32 %v1249
        %vm1256 = vweird.f32 %v1250
        %vm1257 = vmor %vm1255, %vm1256
        %v1258 = vsel %vm1257, %v1250, %v1254
        %v1259 = vand.u32 2147483647, %v1249
        %vm1260 = vcmp.eq.f32.partialorder %v1259, 8.507059e+37
        %v1261 = vand.u32 %v1249, 2147483648
        %v1262 = vor.u32 1.1754944e-38, %v1261
        %v1263 = vsel %vm1260, %v1262, %v1258
        %v1264 = vmul.f32 1.0, %v1263
        %v1265 = vmul.f32 %v701, %v1264
        %v1267 = vrot.slane %v1265, 1
        %v1268 = vrot.slane %v1265, 2
        %v1269 = vrot.slane %v1265, 3
        %v1270 = vrot.slane %v1265, 4
        %v1271 = vrot.slane %v1265, 5
        %v1272 = vrot.slane %v1265, 6
        %v1273 = vrot.slane %v1265, 7
        %1274 = vrot.lane.b32.xlu0 %v1265, 64
        %v1275 = vpop.permute.xlu0 %1274
        %1276 = vrot.lane.b32.xlu0 %v1267, 64
        %v1277 = vpop.permute.xlu0 %1276
        %1278 = vrot.lane.b32.xlu0 %v1268, 64
        %v1279 = vpop.permute.xlu0 %1278
        %1280 = vrot.lane.b32.xlu0 %v1269, 64
        %v1281 = vpop.permute.xlu0 %1280
        %1282 = vrot.lane.b32.xlu0 %v1270, 64
        %v1283 = vpop.permute.xlu0 %1282
        %1284 = vrot.lane.b32.xlu0 %v1271, 64
        %v1285 = vpop.permute.xlu0 %1284
        %1286 = vrot.lane.b32.xlu0 %v1272, 64
        %v1287 = vpop.permute.xlu0 %1286
        %1288 = vrot.lane.b32.xlu0 %v1273, 64
        %v1289 = vpop.permute.xlu0 %1288
        %v1298 = vmul.f32 %v1238, %v1275
        %v1299 = vmul.f32 %v1239, %v1277
        %v1300 = vmul.f32 %v1240, %v1279
        %v1301 = vmul.f32 %v1241, %v1281
        %v1302 = vmul.f32 %v1242, %v1283
        %v1303 = vmul.f32 %v1243, %v1285
        %v1304 = vmul.f32 %v1244, %v1287
        %v1305 = vmul.f32 %v1245, %v1289
        %v1306 = vpack.c.bf16 %v1298, %v1298
        %v1307 = vpack.c.bf16 %v1299, %v1299
        %v1308 = vpack.c.bf16 %v1300, %v1300
        %v1309 = vpack.c.bf16 %v1301, %v1301
        %v1310 = vpack.c.bf16 %v1302, %v1302
        %v1311 = vpack.c.bf16 %v1303, %v1303
        %v1312 = vpack.c.bf16 %v1304, %v1304
        %v1313 = vpack.c.bf16 %v1305, %v1305
        %v1314 = vld [vmem:[%s11] sm:$0xf]
        %v1315 = vld [vmem:[%s11 + $0x4] sm:$0xf]
        %v1316 = vld [vmem:[%s11 + $0x8] sm:$0xf]
        %v1317 = vld [vmem:[%s11 + $0xc] sm:$0xf]
        %v1318 = vld [vmem:[%s11 + $0x10] sm:$0xf]
        %v1319 = vld [vmem:[%s11 + $0x14] sm:$0xf]
        %v1320 = vld [vmem:[%s11 + $0x18] sm:$0xf]
        %v1321 = vld [vmem:[%s11 + $0x1c] sm:$0xf]
        %v1330 = vunpack.c.l.b16 %v1306
        %v1331 = vunpack.c.l.b16 %v1307
        %v1332 = vunpack.c.l.b16 %v1308
        %v1333 = vunpack.c.l.b16 %v1309
        %v1334 = vunpack.c.l.b16 %v1310
        %v1335 = vunpack.c.l.b16 %v1311
        %v1336 = vunpack.c.l.b16 %v1312
        %v1337 = vunpack.c.l.b16 %v1313
        %v1338 = vrot.slane %v1331, 7
        %vm1339 = vcmask 1041409
        %v1340 = vsel %vm1339, %v1338, %v1330
        %v1341 = vrot.slane %v1332, 6
        %vm1342 = vcmask 1042434
        %v1343 = vsel %vm1342, %v1341, %v1340
        %v1344 = vrot.slane %v1333, 5
        %vm1345 = vcmask 1043459
        %v1346 = vsel %vm1345, %v1344, %v1343
        %v1347 = vrot.slane %v1334, 4
        %vm1348 = vcmask 1044484
        %v1349 = vsel %vm1348, %v1347, %v1346
        %v1350 = vrot.slane %v1335, 3
        %vm1351 = vcmask 1045509
        %v1352 = vsel %vm1351, %v1350, %v1349
        %v1353 = vrot.slane %v1336, 2
        %vm1354 = vcmask 1046534
        %v1355 = vsel %vm1354, %v1353, %v1352
        %v1356 = vrot.slane %v1337, 1
        %vm1357 = vcmask 1047559
        %v1358 = vsel %vm1357, %v1356, %v1355
        %v1359 = vpack.c.b16 %v1358, %v1358
        %v1368 = vunpack.c.l.b16 %v1314
        %v1369 = vunpack.c.l.b16 %v1315
        %v1370 = vunpack.c.l.b16 %v1316
        %v1371 = vunpack.c.l.b16 %v1317
        %v1372 = vunpack.c.l.b16 %v1318
        %v1373 = vunpack.c.l.b16 %v1319
        %v1374 = vunpack.c.l.b16 %v1320
        %v1375 = vunpack.c.l.b16 %v1321
        %v1376 = vpack.c.b16 %v1369, %v1368
        %v1377 = vpack.c.b16 %v1371, %v1370
        %v1378 = vpack.c.b16 %v1373, %v1372
        %v1379 = vpack.c.b16 %v1375, %v1374
        %v1385 = vsel %vm755, %v1359, 0
        %1387 = vmatpush.bf16.msra.mxu0 0
        %1388 = vmatpush.bf16.msra.mxu0 0
        %1389 = vmatpush.bf16.msra.mxu0 0
        %1390 = vmatpush.bf16.msra.mxu0 0
        %1391 = vmatpush.bf16.msra.mxu0 %v1379
        %1392 = vmatpush.bf16.msra.mxu0 %v1378
        %1393 = vmatpush.bf16.msra.mxu0 %v1377
        %1394 = vmatpush.bf16.msra.mxu0 %v1376
        %1395 = vmatmul.bf16.gmra.mxu0 %v1385
        %v1396 = vpop.f32.mrf.mxu0
        %v1397 = vadd.f32 %v630, %v1396
        %v1398 = vpop.f32.mrf.mxu0
        %1399 = vdwg.mxu0
        %s1400 = scalar_lea.vmem [#allocation4], 1
        %v1401 = vld [vmem:[%s1400] sm:$0x1]
        %s1402 = scalar_lea.vmem [#allocation7], 1
        %v1403 = vld [vmem:[%s1402] sm:$0x1]
        %v1404 = vsel %vm633, %v1397, 0.0
        %1405 = vadd.xlane.f32.xlu0 %v1404
        %v1406 = vpop.xlane.xlu0 %1405
        %v1407 = vmul.f32 %v1406, %v643
        %v1408 = vsub.f32 %v1397, %v1407
        %v1409 = vmul.f32 %v1408, %v1408
        %v1410 = vsel %vm633, %v1409, 0.0
        %1411 = vadd.xlane.f32.xlu0 %v1410
        %v1412 = vpop.xlane.xlu0 %1411
        %v1413 = vmul.f32 %v1412, %v643
        %v1414 = vadd.f32 %v1413, 1e-05
        %v1415 = vrsqrt.pop %v1414
        %v1416 = vmul.f32 %v1415, %v1414
        %v1417 = vmul.f32 %v1416, %v1415
        %v1418 = vmul.f32 0.5, %v1417
        %v1419 = vsub.f32 1.5, %v1418
        %v1420 = vmul.f32 %v1415, %v1419
        %vm1421 = vweird.f32 %v1414
        %vm1422 = vweird.f32 %v1415
        %vm1423 = vmor %vm1421, %vm1422
        %v1424 = vsel %vm1423, %v1415, %v1420
        %v1425 = vmul.f32 %v1408, %v1424
        %v1427 = vperm.slane %v1401, 0
        %v1429 = vmul.f32 %v1425, %v1427
        %v1431 = vperm.slane %v1403, 0
        %v1433 = vadd.f32 %v1429, %v1431
        %v1434 = vpack.c.bf16 %v1433, %v1433
        %s1435 = scalar_lea.vmem %s4, 16
        %v1436 = vld [vmem:[%s1435] sm:$0xf]
        %v1437 = vld [vmem:[%s1435 + $0x4] sm:$0xf]
        %v1438 = vld [vmem:[%s1435 + $0x8] sm:$0xf]
        %v1439 = vld [vmem:[%s1435 + $0xc] sm:$0xf]
        %v1444 = vunpack.c.l.b16 %v1436
        %v1445 = vunpack.c.l.b16 %v1437
        %v1446 = vunpack.c.l.b16 %v1438
        %v1447 = vunpack.c.l.b16 %v1439
        %v1448 = vpack.c.b16 %v1445, %v1444
        %v1449 = vpack.c.b16 %v1447, %v1446
        %v1453 = vsel %vm633, %v1434, 0
        %1455 = vmatpush.bf16.msra.mxu0 0
        %1456 = vmatpush.bf16.msra.mxu0 0
        %1457 = vmatpush.bf16.msra.mxu0 0
        %1458 = vmatpush.bf16.msra.mxu0 0
        %1459 = vmatpush.bf16.msra.mxu0 0
        %1460 = vmatpush.bf16.msra.mxu0 0
        %1461 = vmatpush.bf16.msra.mxu0 %v1449
        %1462 = vmatpush.bf16.msra.mxu0 %v1448
        %1463 = vmatmul.bf16.gmra.mxu0 %v1453
        %v1464 = vpop.f32.mrf.mxu0
        %v1465 = vadd.f32 0.0, %v1464
        %v1466 = vpop.f32.mrf.mxu0
        %1467 = vdwg.mxu0
        %s1468 = scalar_lea.vmem %s5, 4
        %v1469 = vld [vmem:[%s1468] sm:$0xf]
        %v1470 = vrot.slane %v1465, 7
        %v1471 = vsel %vm627, %v1470, 0.0
        %v1472 = vrot.slane %v1465, 6
        %v1473 = vsel %vm628, %v1472, 0.0
        %v1474 = vrot.slane %v1465, 5
        %v1475 = vsel %vm629, %v1474, 0.0
        %s1476 = scalar_lea.vmem [#allocation9], 1
        %v1477 = vld [vmem:[%s1476] sm:$0x1]
        %v1479 = vperm.slane %v1477, 0
        %v1481 = vperm.slane %v1469, 3
        %v1482 = vmul.f32 %v1465, %v1481
        %v1483 = vadd.f32 %v1479, %v1482
        %v1484 = vperm.slane %v1469, 2
        %v1485 = vmul.f32 %v1471, %v1484
        %v1486 = vadd.f32 %v1483, %v1485
        %v1487 = vperm.slane %v1469, 1
        %v1488 = vmul.f32 %v1473, %v1487
        %v1489 = vadd.f32 %v1486, %v1488
        %v1490 = vperm.slane %v1469, 0
        %v1491 = vmul.f32 %v1475, %v1490
        %v1492 = vadd.f32 %v1489, %v1491
        %v1493 = vsub.f32 0.0, %v1492
        %v1494 = vmul.f32 %v1493, 1.442695
        %v1495 = vpow.pop %v1494
        %v1496 = vadd.f32 %v1495, 1.0
        %v1497 = vrcp.pop %v1496
        %v1498 = vmul.f32 %v1496, %v1497
        %v1499 = vsub.f32 1.0, %v1498
        %v1500 = vmul.f32 %v1497, %v1499
        %v1501 = vadd.f32 %v1497, %v1500
        %vm1502 = vweird.f32 %v1496
        %vm1503 = vweird.f32 %v1497
        %vm1504 = vmor %vm1502, %vm1503
        %v1505 = vsel %vm1504, %v1497, %v1501
        %v1506 = vand.u32 2147483647, %v1496
        %vm1507 = vcmp.eq.f32.partialorder %v1506, 8.507059e+37
        %v1508 = vand.u32 %v1496, 2147483648
        %v1509 = vor.u32 1.1754944e-38, %v1508
        %v1510 = vsel %vm1507, %v1509, %v1505
        %v1511 = vmul.f32 1.0, %v1510
        %v1512 = vmul.f32 %v1492, %v1511
        %s1513 = scalar_lea.vmem %s7, 64
        %v1514 = vld [vmem:[%s1513] sm:$0xff]
        %v1515 = vld [vmem:[%s1513 + $0x8] sm:$0xff]
        %v1516 = vld [vmem:[%s1513 + $0x10] sm:$0xff]
        %v1517 = vld [vmem:[%s1513 + $0x18] sm:$0xff]
        %v1518 = vld [vmem:[%s1513 + $0x20] sm:$0xff]
        %v1519 = vld [vmem:[%s1513 + $0x28] sm:$0xff]
        %v1520 = vld [vmem:[%s1513 + $0x30] sm:$0xff]
        %v1521 = vld [vmem:[%s1513 + $0x38] sm:$0xff]
        %v1523 = vsel %vm755, %v1512, 0
        %1525 = vmatpush.msra.mxu0 0.0
        %1526 = vmatpush.msra.mxu0 0.0
        %1527 = vmatpush.msra.mxu0 0.0
        %1528 = vmatpush.msra.mxu0 0.0
        %1529 = vmatpush.msra.mxu0 0.0
        %1530 = vmatpush.msra.mxu0 0.0
        %1531 = vmatpush.msra.mxu0 0.0
        %1532 = vmatpush.msra.mxu0 0.0
        %1533 = vmatpush.msra.mxu0 %v1521
        %1534 = vmatpush.msra.mxu0 %v1520
        %1535 = vmatpush.msra.mxu0 %v1519
        %1536 = vmatpush.msra.mxu0 %v1518
        %1537 = vmatpush.msra.mxu0 %v1517
        %1538 = vmatpush.msra.mxu0 %v1516
        %1539 = vmatpush.msra.mxu0 %v1515
        %1540 = vmatpush.msra.mxu0 %v1514
        %1541 = vmatmul.f32.gmra.mxu0 %v1523
        %v1542 = vpop.f32.mrf.mxu0
        %v1543 = vadd.f32 0.0, %v1542
        %1544 = vdwg.mxu0
        %s1545 = scalar_lea.vmem [#allocation10], 1
        %v1546 = vld [vmem:[%s1545] sm:$0x1]
        %v1548 = vperm.slane %v1546, 0
        %v1550 = vadd.f32 %v1543, %v1548
        %vm1551 = vcmp.gt.f32.partialorder %v1550, 20.0
        %v1552 = vmul.f32 %v1550, 1.442695
        %v1553 = vpow.pop %v1552
        %v1554 = vadd.f32 %v1553, 1.0
        %v1555 = vlog2.pop %v1554
        %v1556 = vmul.f32 %v1555, 0.6931472
        %v1557 = vmul.f32 -0.5, %v1553
        %v1558 = vadd.f32 %v1557, 1.0
        %v1559 = vmul.f32 %v1558, %v1553
        %v1560 = vand.u32 2147483647, %v1553
        %vm1561 = vcmp.lt.f32.partialorder %v1560, 0.0004427343
        %v1562 = vsel %vm1561, %v1559, %v1556
        %v1563 = vsel %vm1551, %v1550, %v1562
        %v1564 = vmul.f32 %v1563, %v1512
        %1566 = vrot.lane.b32.xlu0 %v1563, 64
        %v1567 = vpop.permute.xlu0 %1566
        %v1569 = vsel %vm755, %v1563, %v1567
        %1571 = vrot.lane.b32.xlu0 %v1564, 64
        %v1572 = vpop.permute.xlu0 %1571
        %v1574 = vsel %vm755, %v1564, %v1572
        %v1576 = vrot.slane %v1569, 1
        %v1577 = vrot.slane %v1569, 2
        %v1578 = vrot.slane %v1569, 3
        %v1579 = vrot.slane %v1569, 4
        %v1580 = vrot.slane %v1569, 5
        %v1581 = vrot.slane %v1569, 6
        %v1582 = vrot.slane %v1569, 7
        %s1583 = scalar_lea.vmem [#allocation12], 8
        %v1584 = vld [vmem:[%s1583] sm:$0xff]
        %v1585 = vperm.slane %v1569, 0
        %v1586 = vperm.slane %v1576, 0
        %v1587 = vperm.slane %v1577, 0
        %v1588 = vperm.slane %v1578, 0
        %v1589 = vperm.slane %v1579, 0
        %v1590 = vperm.slane %v1580, 0
        %v1591 = vperm.slane %v1581, 0
        %v1592 = vperm.slane %v1582, 0
        %v1601 = vmul.f32 %v1585, %v1584
        %v1602 = vmul.f32 %v1586, %v1584
        %v1603 = vmul.f32 %v1587, %v1584
        %v1604 = vmul.f32 %v1588, %v1584
        %v1605 = vmul.f32 %v1589, %v1584
        %v1606 = vmul.f32 %v1590, %v1584
        %v1607 = vmul.f32 %v1591, %v1584
        %v1608 = vmul.f32 %v1592, %v1584
        %v1609 = vmul.f32 %v1601, 1.442695
        %v1610 = vpow.pop %v1609
        %v1611 = vmul.f32 %v1602, 1.442695
        %v1612 = vpow.pop %v1611
        %v1613 = vmul.f32 %v1603, 1.442695
        %v1614 = vpow.pop %v1613
        %v1615 = vmul.f32 %v1604, 1.442695
        %v1616 = vpow.pop %v1615
        %v1617 = vmul.f32 %v1605, 1.442695
        %v1618 = vpow.pop %v1617
        %v1619 = vmul.f32 %v1606, 1.442695
        %v1620 = vpow.pop %v1619
        %v1621 = vmul.f32 %v1607, 1.442695
        %v1622 = vpow.pop %v1621
        %v1623 = vmul.f32 %v1608, 1.442695
        %v1624 = vpow.pop %v1623
        %v1625 = vperm.slane %v1543, 0
        %v1626 = vlaneseq
        %v1627 = vshrl.u32 %v1626, 7
        %v1628 = vadd.s32 %v1627, 64
        %1629 = vset.pattern.permute.xlu0 %v1628
        %1630 = vperm.xlu0 %1629, %v1625
        %v1631 = vpop.permute.xlu0 %1630
        %v1632 = vperm.slane %v1543, 1
        %v1633 = vlaneseq
        %v1634 = vshrl.u32 %v1633, 7
        %v1635 = vadd.s32 %v1634, 64
        %1636 = vset.pattern.permute.xlu0 %v1635
        %1637 = vperm.xlu0 %1636, %v1632
        %v1638 = vpop.permute.xlu0 %1637
        %v1639 = vperm.slane %v1543, 2
        %v1640 = vlaneseq
        %v1641 = vshrl.u32 %v1640, 7
        %v1642 = vadd.s32 %v1641, 64
        %1643 = vset.pattern.permute.xlu0 %v1642
        %1644 = vperm.xlu0 %1643, %v1639
        %v1645 = vpop.permute.xlu0 %1644
        %v1646 = vperm.slane %v1543, 3
        %v1647 = vlaneseq
        %v1648 = vshrl.u32 %v1647, 7
        %v1649 = vadd.s32 %v1648, 64
        %1650 = vset.pattern.permute.xlu0 %v1649
        %1651 = vperm.xlu0 %1650, %v1646
        %v1652 = vpop.permute.xlu0 %1651
        %v1653 = vperm.slane %v1543, 4
        %v1654 = vlaneseq
        %v1655 = vshrl.u32 %v1654, 7
        %v1656 = vadd.s32 %v1655, 64
        %1657 = vset.pattern.permute.xlu0 %v1656
        %1658 = vperm.xlu0 %1657, %v1653
        %v1659 = vpop.permute.xlu0 %1658
        %v1660 = vperm.slane %v1543, 5
        %v1661 = vlaneseq
        %v1662 = vshrl.u32 %v1661, 7
        %v1663 = vadd.s32 %v1662, 64
        %1664 = vset.pattern.permute.xlu0 %v1663
        %1665 = vperm.xlu0 %1664, %v1660
        %v1666 = vpop.permute.xlu0 %1665
        %v1667 = vperm.slane %v1543, 6
        %v1668 = vlaneseq
        %v1669 = vshrl.u32 %v1668, 7
        %v1670 = vadd.s32 %v1669, 64
        %1671 = vset.pattern.permute.xlu0 %v1670
        %1672 = vperm.xlu0 %1671, %v1667
        %v1673 = vpop.permute.xlu0 %1672
        %v1674 = vperm.slane %v1543, 7
        %v1675 = vlaneseq
        %v1676 = vshrl.u32 %v1675, 7
        %v1677 = vadd.s32 %v1676, 64
        %1678 = vset.pattern.permute.xlu0 %v1677
        %1679 = vperm.xlu0 %1678, %v1674
        %v1680 = vpop.permute.xlu0 %1679
        %v1681 = vlaneseq
        %v1682 = vshrl.u32 %v1681, 7
        %v1683 = vadd.s32 %v1682, 72
        %1684 = vset.pattern.permute.xlu0 %v1683
        %1685 = vperm.xlu0 %1684, %v1625
        %v1686 = vpop.permute.xlu0 %1685
        %v1687 = vlaneseq
        %v1688 = vshrl.u32 %v1687, 7
        %v1689 = vadd.s32 %v1688, 72
        %1690 = vset.pattern.permute.xlu0 %v1689
        %1691 = vperm.xlu0 %1690, %v1632
        %v1692 = vpop.permute.xlu0 %1691
        %v1693 = vlaneseq
        %v1694 = vshrl.u32 %v1693, 7
        %v1695 = vadd.s32 %v1694, 72
        %1696 = vset.pattern.permute.xlu0 %v1695
        %1697 = vperm.xlu0 %1696, %v1639
        %v1698 = vpop.permute.xlu0 %1697
        %v1699 = vlaneseq
        %v1700 = vshrl.u32 %v1699, 7
        %v1701 = vadd.s32 %v1700, 72
        %1702 = vset.pattern.permute.xlu0 %v1701
        %1703 = vperm.xlu0 %1702, %v1646
        %v1704 = vpop.permute.xlu0 %1703
        %v1705 = vlaneseq
        %v1706 = vshrl.u32 %v1705, 7
        %v1707 = vadd.s32 %v1706, 72
        %1708 = vset.pattern.permute.xlu0 %v1707
        %1709 = vperm.xlu0 %1708, %v1653
        %v1710 = vpop.permute.xlu0 %1709
        %v1711 = vlaneseq
        %v1712 = vshrl.u32 %v1711, 7
        %v1713 = vadd.s32 %v1712, 72
        %1714 = vset.pattern.permute.xlu0 %v1713
        %1715 = vperm.xlu0 %1714, %v1660
        %v1716 = vpop.permute.xlu0 %1715
        %v1717 = vlaneseq
        %v1718 = vshrl.u32 %v1717, 7
        %v1719 = vadd.s32 %v1718, 72
        %1720 = vset.pattern.permute.xlu0 %v1719
        %1721 = vperm.xlu0 %1720, %v1667
        %v1722 = vpop.permute.xlu0 %1721
        %v1723 = vlaneseq
        %v1724 = vshrl.u32 %v1723, 7
        %v1725 = vadd.s32 %v1724, 72
        %1726 = vset.pattern.permute.xlu0 %v1725
        %1727 = vperm.xlu0 %1726, %v1674
        %v1728 = vpop.permute.xlu0 %1727
        %v1729 = vsel %vm755, %v1631, %v1686
        %v1730 = vsel %vm755, %v1638, %v1692
        %v1731 = vsel %vm755, %v1645, %v1698
        %v1732 = vsel %vm755, %v1652, %v1704
        %v1733 = vsel %vm755, %v1659, %v1710
        %v1734 = vsel %vm755, %v1666, %v1716
        %v1735 = vsel %vm755, %v1673, %v1722
        %v1736 = vsel %vm755, %v1680, %v1728
        %v1738 = vrot.slane %v1574, 1
        %v1739 = vrot.slane %v1574, 2
        %v1740 = vrot.slane %v1574, 3
        %v1741 = vrot.slane %v1574, 4
        %v1742 = vrot.slane %v1574, 5
        %v1743 = vrot.slane %v1574, 6
        %v1744 = vrot.slane %v1574, 7
        %v1745 = vperm.slane %v1574, 0
        %v1746 = vperm.slane %v1738, 0
        %v1747 = vperm.slane %v1739, 0
        %v1748 = vperm.slane %v1740, 0
        %v1749 = vperm.slane %v1741, 0
        %v1750 = vperm.slane %v1742, 0
        %v1751 = vperm.slane %v1743, 0
        %v1752 = vperm.slane %v1744, 0
        %v1761 = vmul.f32 %v1745, %v1729
        %v1762 = vmul.f32 %v1746, %v1730
        %v1763 = vmul.f32 %v1747, %v1731
        %v1764 = vmul.f32 %v1748, %v1732
        %v1765 = vmul.f32 %v1749, %v1733
        %v1766 = vmul.f32 %v1750, %v1734
        %v1767 = vmul.f32 %v1751, %v1735
        %v1768 = vmul.f32 %v1752, %v1736
        %v1769 = vlaneseq
        %v1770 = vshrl.u32 %v1769, 7
        %v1771 = vadd.s32 %v1770, 80
        %1772 = vset.pattern.permute.xlu0 %v1771
        %1773 = vperm.xlu0 %1772, %v1625
        %v1774 = vpop.permute.xlu0 %1773
        %v1775 = vlaneseq
        %v1776 = vshrl.u32 %v1775, 7
        %v1777 = vadd.s32 %v1776, 80
        %1778 = vset.pattern.permute.xlu0 %v1777
        %1779 = vperm.xlu0 %1778, %v1632
        %v1780 = vpop.permute.xlu0 %1779
        %v1781 = vlaneseq
        %v1782 = vshrl.u32 %v1781, 7
        %v1783 = vadd.s32 %v1782, 80
        %1784 = vset.pattern.permute.xlu0 %v1783
        %1785 = vperm.xlu0 %1784, %v1639
        %v1786 = vpop.permute.xlu0 %1785
        %v1787 = vlaneseq
        %v1788 = vshrl.u32 %v1787, 7
        %v1789 = vadd.s32 %v1788, 80
        %1790 = vset.pattern.permute.xlu0 %v1789
        %1791 = vperm.xlu0 %1790, %v1646
        %v1792 = vpop.permute.xlu0 %1791
        %v1793 = vlaneseq
        %v1794 = vshrl.u32 %v1793, 7
        %v1795 = vadd.s32 %v1794, 80
        %1796 = vset.pattern.permute.xlu0 %v1795
        %1797 = vperm.xlu0 %1796, %v1653
        %v1798 = vpop.permute.xlu0 %1797
        %v1799 = vlaneseq
        %v1800 = vshrl.u32 %v1799, 7
        %v1801 = vadd.s32 %v1800, 80
        %1802 = vset.pattern.permute.xlu0 %v1801
        %1803 = vperm.xlu0 %1802, %v1660
        %v1804 = vpop.permute.xlu0 %1803
        %v1805 = vlaneseq
        %v1806 = vshrl.u32 %v1805, 7
        %v1807 = vadd.s32 %v1806, 80
        %1808 = vset.pattern.permute.xlu0 %v1807
        %1809 = vperm.xlu0 %1808, %v1667
        %v1810 = vpop.permute.xlu0 %1809
        %v1811 = vlaneseq
        %v1812 = vshrl.u32 %v1811, 7
        %v1813 = vadd.s32 %v1812, 80
        %1814 = vset.pattern.permute.xlu0 %v1813
        %1815 = vperm.xlu0 %1814, %v1674
        %v1816 = vpop.permute.xlu0 %1815
        %v1817 = vlaneseq
        %v1818 = vshrl.u32 %v1817, 7
        %v1819 = vadd.s32 %v1818, 88
        %1820 = vset.pattern.permute.xlu0 %v1819
        %1821 = vperm.xlu0 %1820, %v1625
        %v1822 = vpop.permute.xlu0 %1821
        %v1823 = vlaneseq
        %v1824 = vshrl.u32 %v1823, 7
        %v1825 = vadd.s32 %v1824, 88
        %1826 = vset.pattern.permute.xlu0 %v1825
        %1827 = vperm.xlu0 %1826, %v1632
        %v1828 = vpop.permute.xlu0 %1827
        %v1829 = vlaneseq
        %v1830 = vshrl.u32 %v1829, 7
        %v1831 = vadd.s32 %v1830, 88
        %1832 = vset.pattern.permute.xlu0 %v1831
        %1833 = vperm.xlu0 %1832, %v1639
        %v1834 = vpop.permute.xlu0 %1833
        %v1835 = vlaneseq
        %v1836 = vshrl.u32 %v1835, 7
        %v1837 = vadd.s32 %v1836, 88
        %1838 = vset.pattern.permute.xlu0 %v1837
        %1839 = vperm.xlu0 %1838, %v1646
        %v1840 = vpop.permute.xlu0 %1839
        %v1841 = vlaneseq
        %v1842 = vshrl.u32 %v1841, 7
        %v1843 = vadd.s32 %v1842, 88
        %1844 = vset.pattern.permute.xlu0 %v1843
        %1845 = vperm.xlu0 %1844, %v1653
        %v1846 = vpop.permute.xlu0 %1845
        %v1847 = vlaneseq
        %v1848 = vshrl.u32 %v1847, 7
        %v1849 = vadd.s32 %v1848, 88
        %1850 = vset.pattern.permute.xlu0 %v1849
        %1851 = vperm.xlu0 %1850, %v1660
        %v1852 = vpop.permute.xlu0 %1851
        %v1853 = vlaneseq
        %v1854 = vshrl.u32 %v1853, 7
        %v1855 = vadd.s32 %v1854, 88
        %1856 = vset.pattern.permute.xlu0 %v1855
        %1857 = vperm.xlu0 %1856, %v1667
        %v1858 = vpop.permute.xlu0 %1857
        %v1859 = vlaneseq
        %v1860 = vshrl.u32 %v1859, 7
        %v1861 = vadd.s32 %v1860, 88
        %1862 = vset.pattern.permute.xlu0 %v1861
        %1863 = vperm.xlu0 %1862, %v1674
        %v1864 = vpop.permute.xlu0 %1863
        %v1865 = vsel %vm755, %v1774, %v1822
        %v1866 = vsel %vm755, %v1780, %v1828
        %v1867 = vsel %vm755, %v1786, %v1834
        %v1868 = vsel %vm755, %v1792, %v1840
        %v1869 = vsel %vm755, %v1798, %v1846
        %v1870 = vsel %vm755, %v1804, %v1852
        %v1871 = vsel %vm755, %v1810, %v1858
        %v1872 = vsel %vm755, %v1816, %v1864
        %v1873 = vmul.f32 %v1610, 0.0
        %v1874 = vadd.f32 %v1873, %v1761
        %v1875 = vmul.f32 %v1612, %v1874
        %v1876 = vadd.f32 %v1875, %v1762
        %v1877 = vmul.f32 %v1614, %v1876
        %v1878 = vadd.f32 %v1877, %v1763
        %v1879 = vmul.f32 %v1616, %v1878
        %v1880 = vadd.f32 %v1879, %v1764
        %v1881 = vmul.f32 %v1618, %v1880
        %v1882 = vadd.f32 %v1881, %v1765
        %v1883 = vmul.f32 %v1620, %v1882
        %v1884 = vadd.f32 %v1883, %v1766
        %v1885 = vmul.f32 %v1622, %v1884
        %v1886 = vadd.f32 %v1885, %v1767
        %v1887 = vmul.f32 %v1624, %v1886
        %v1888 = vadd.f32 %v1887, %v1768
        %v1889 = vmul.f32 %v1874, %v1865
        %v1890 = vmul.f32 %v1876, %v1866
        %v1891 = vmul.f32 %v1878, %v1867
        %v1892 = vmul.f32 %v1880, %v1868
        %v1893 = vmul.f32 %v1882, %v1869
        %v1894 = vmul.f32 %v1884, %v1870
        %v1895 = vmul.f32 %v1886, %v1871
        %v1896 = vmul.f32 %v1888, %v1872
        %v1897 = vrot.slane %v1889, 4
        %v1898 = vadd.f32 %v1889, %v1897
        %v1899 = vrot.slane %v1898, 2
        %v1900 = vadd.f32 %v1898, %v1899
        %v1901 = vrot.slane %v1900, 1
        %v1902 = vadd.f32 %v1900, %v1901
        %v1903 = vrot.slane %v1890, 4
        %v1904 = vadd.f32 %v1890, %v1903
        %v1905 = vrot.slane %v1904, 2
        %v1906 = vadd.f32 %v1904, %v1905
        %v1907 = vrot.slane %v1906, 1
        %v1908 = vadd.f32 %v1906, %v1907
        %v1909 = vrot.slane %v1891, 4
        %v1910 = vadd.f32 %v1891, %v1909
        %v1911 = vrot.slane %v1910, 2
        %v1912 = vadd.f32 %v1910, %v1911
        %v1913 = vrot.slane %v1912, 1
        %v1914 = vadd.f32 %v1912, %v1913
        %v1915 = vrot.slane %v1892, 4
        %v1916 = vadd.f32 %v1892, %v1915
        %v1917 = vrot.slane %v1916, 2
        %v1918 = vadd.f32 %v1916, %v1917
        %v1919 = vrot.slane %v1918, 1
        %v1920 = vadd.f32 %v1918, %v1919
        %v1921 = vrot.slane %v1893, 4
        %v1922 = vadd.f32 %v1893, %v1921
        %v1923 = vrot.slane %v1922, 2
        %v1924 = vadd.f32 %v1922, %v1923
        %v1925 = vrot.slane %v1924, 1
        %v1926 = vadd.f32 %v1924, %v1925
        %v1927 = vrot.slane %v1894, 4
        %v1928 = vadd.f32 %v1894, %v1927
        %v1929 = vrot.slane %v1928, 2
        %v1930 = vadd.f32 %v1928, %v1929
        %v1931 = vrot.slane %v1930, 1
        %v1932 = vadd.f32 %v1930, %v1931
        %v1933 = vrot.slane %v1895, 4
        %v1934 = vadd.f32 %v1895, %v1933
        %v1935 = vrot.slane %v1934, 2
        %v1936 = vadd.f32 %v1934, %v1935
        %v1937 = vrot.slane %v1936, 1
        %v1938 = vadd.f32 %v1936, %v1937
        %v1939 = vrot.slane %v1896, 4
        %v1940 = vadd.f32 %v1896, %v1939
        %v1941 = vrot.slane %v1940, 2
        %v1942 = vadd.f32 %v1940, %v1941
        %v1943 = vrot.slane %v1942, 1
        %v1944 = vadd.f32 %v1942, %v1943
        %1953 = vrot.lane.b32.xlu0 %v1902, 64
        %v1954 = vpop.permute.xlu0 %1953
        %1955 = vrot.lane.b32.xlu0 %v1908, 64
        %v1956 = vpop.permute.xlu0 %1955
        %1957 = vrot.lane.b32.xlu0 %v1914, 64
        %v1958 = vpop.permute.xlu0 %1957
        %1959 = vrot.lane.b32.xlu0 %v1920, 64
        %v1960 = vpop.permute.xlu0 %1959
        %1961 = vrot.lane.b32.xlu0 %v1926, 64
        %v1962 = vpop.permute.xlu0 %1961
        %1963 = vrot.lane.b32.xlu0 %v1932, 64
        %v1964 = vpop.permute.xlu0 %1963
        %1965 = vrot.lane.b32.xlu0 %v1938, 64
        %v1966 = vpop.permute.xlu0 %1965
        %1967 = vrot.lane.b32.xlu0 %v1944, 64
        %v1968 = vpop.permute.xlu0 %1967
        %v1977 = vadd.f32 %v1902, %v1954
        %v1978 = vadd.f32 %v1908, %v1956
        %v1979 = vadd.f32 %v1914, %v1958
        %v1980 = vadd.f32 %v1920, %v1960
        %v1981 = vadd.f32 %v1926, %v1962
        %v1982 = vadd.f32 %v1932, %v1964
        %v1983 = vadd.f32 %v1938, %v1966
        %v1984 = vadd.f32 %v1944, %v1968
        %s1985 = scalar_lea.vmem [#allocation13], 1
        %v1986 = vld [vmem:[%s1985] sm:$0x1]
        %v1988 = vperm.slane %v1986, 0
        %v1990 = vmul.f32 %v1512, %v1988
        %v1992 = vrot.slane %v1990, 1
        %v1993 = vrot.slane %v1990, 2
        %v1994 = vrot.slane %v1990, 3
        %v1995 = vrot.slane %v1990, 4
        %v1996 = vrot.slane %v1990, 5
        %v1997 = vrot.slane %v1990, 6
        %v1998 = vrot.slane %v1990, 7
        %v2007 = vadd.f32 %v1977, %v1990
        %v2008 = vadd.f32 %v1978, %v1992
        %v2009 = vadd.f32 %v1979, %v1993
        %v2010 = vadd.f32 %v1980, %v1994
        %v2011 = vadd.f32 %v1981, %v1995
        %v2012 = vadd.f32 %v1982, %v1996
        %v2013 = vadd.f32 %v1983, %v1997
        %v2014 = vadd.f32 %v1984, %v1998
        %v2015 = vsub.f32 0.0, %v1465
        %v2016 = vmul.f32 %v2015, 1.442695
        %v2017 = vpow.pop %v2016
        %v2018 = vadd.f32 %v2017, 1.0
        %v2019 = vrcp.pop %v2018
        %v2020 = vmul.f32 %v2018, %v2019
        %v2021 = vsub.f32 1.0, %v2020
        %v2022 = vmul.f32 %v2019, %v2021
        %v2023 = vadd.f32 %v2019, %v2022
        %vm2024 = vweird.f32 %v2018
        %vm2025 = vweird.f32 %v2019
        %vm2026 = vmor %vm2024, %vm2025
        %v2027 = vsel %vm2026, %v2019, %v2023
        %v2028 = vand.u32 2147483647, %v2018
        %vm2029 = vcmp.eq.f32.partialorder %v2028, 8.507059e+37
        %v2030 = vand.u32 %v2018, 2147483648
        %v2031 = vor.u32 1.1754944e-38, %v2030
        %v2032 = vsel %vm2029, %v2031, %v2027
        %v2033 = vmul.f32 1.0, %v2032
        %v2034 = vmul.f32 %v1465, %v2033
        %v2036 = vrot.slane %v2034, 1
        %v2037 = vrot.slane %v2034, 2
        %v2038 = vrot.slane %v2034, 3
        %v2039 = vrot.slane %v2034, 4
        %v2040 = vrot.slane %v2034, 5
        %v2041 = vrot.slane %v2034, 6
        %v2042 = vrot.slane %v2034, 7
        %2043 = vrot.lane.b32.xlu0 %v2034, 64
        %v2044 = vpop.permute.xlu0 %2043
        %2045 = vrot.lane.b32.xlu0 %v2036, 64
        %v2046 = vpop.permute.xlu0 %2045
        %2047 = vrot.lane.b32.xlu0 %v2037, 64
        %v2048 = vpop.permute.xlu0 %2047
        %2049 = vrot.lane.b32.xlu0 %v2038, 64
        %v2050 = vpop.permute.xlu0 %2049
        %2051 = vrot.lane.b32.xlu0 %v2039, 64
        %v2052 = vpop.permute.xlu0 %2051
        %2053 = vrot.lane.b32.xlu0 %v2040, 64
        %v2054 = vpop.permute.xlu0 %2053
        %2055 = vrot.lane.b32.xlu0 %v2041, 64
        %v2056 = vpop.permute.xlu0 %2055
        %2057 = vrot.lane.b32.xlu0 %v2042, 64
        %v2058 = vpop.permute.xlu0 %2057
        %v2067 = vmul.f32 %v2007, %v2044
        %v2068 = vmul.f32 %v2008, %v2046
        %v2069 = vmul.f32 %v2009, %v2048
        %v2070 = vmul.f32 %v2010, %v2050
        %v2071 = vmul.f32 %v2011, %v2052
        %v2072 = vmul.f32 %v2012, %v2054
        %v2073 = vmul.f32 %v2013, %v2056
        %v2074 = vmul.f32 %v2014, %v2058
        %v2075 = vpack.c.bf16 %v2067, %v2067
        %v2076 = vpack.c.bf16 %v2068, %v2068
        %v2077 = vpack.c.bf16 %v2069, %v2069
        %v2078 = vpack.c.bf16 %v2070, %v2070
        %v2079 = vpack.c.bf16 %v2071, %v2071
        %v2080 = vpack.c.bf16 %v2072, %v2072
        %v2081 = vpack.c.bf16 %v2073, %v2073
        %v2082 = vpack.c.bf16 %v2074, %v2074
        %s2083 = scalar_lea.vmem %s11, 32
        %v2084 = vld [vmem:[%s2083] sm:$0xf]
        %v2085 = vld [vmem:[%s2083 + $0x4] sm:$0xf]
        %v2086 = vld [vmem:[%s2083 + $0x8] sm:$0xf]
        %v2087 = vld [vmem:[%s2083 + $0xc] sm:$0xf]
        %v2088 = vld [vmem:[%s2083 + $0x10] sm:$0xf]
        %v2089 = vld [vmem:[%s2083 + $0x14] sm:$0xf]
        %v2090 = vld [vmem:[%s2083 + $0x18] sm:$0xf]
        %v2091 = vld [vmem:[%s2083 + $0x1c] sm:$0xf]
        %v2100 = vunpack.c.l.b16 %v2075
        %v2101 = vunpack.c.l.b16 %v2076
        %v2102 = vunpack.c.l.b16 %v2077
        %v2103 = vunpack.c.l.b16 %v2078
        %v2104 = vunpack.c.l.b16 %v2079
        %v2105 = vunpack.c.l.b16 %v2080
        %v2106 = vunpack.c.l.b16 %v2081
        %v2107 = vunpack.c.l.b16 %v2082
        %v2108 = vrot.slane %v2101, 7
        %v2109 = vsel %vm1339, %v2108, %v2100
        %v2110 = vrot.slane %v2102, 6
        %v2111 = vsel %vm1342, %v2110, %v2109
        %v2112 = vrot.slane %v2103, 5
        %v2113 = vsel %vm1345, %v2112, %v2111
        %v2114 = vrot.slane %v2104, 4
        %v2115 = vsel %vm1348, %v2114, %v2113
        %v2116 = vrot.slane %v2105, 3
        %v2117 = vsel %vm1351, %v2116, %v2115
        %v2118 = vrot.slane %v2106, 2
        %v2119 = vsel %vm1354, %v2118, %v2117
        %v2120 = vrot.slane %v2107, 1
        %v2121 = vsel %vm1357, %v2120, %v2119
        %v2122 = vpack.c.b16 %v2121, %v2121
        %v2131 = vunpack.c.l.b16 %v2084
        %v2132 = vunpack.c.l.b16 %v2085
        %v2133 = vunpack.c.l.b16 %v2086
        %v2134 = vunpack.c.l.b16 %v2087
        %v2135 = vunpack.c.l.b16 %v2088
        %v2136 = vunpack.c.l.b16 %v2089
        %v2137 = vunpack.c.l.b16 %v2090
        %v2138 = vunpack.c.l.b16 %v2091
        %v2139 = vpack.c.b16 %v2132, %v2131
        %v2140 = vpack.c.b16 %v2134, %v2133
        %v2141 = vpack.c.b16 %v2136, %v2135
        %v2142 = vpack.c.b16 %v2138, %v2137
        %v2148 = vsel %vm755, %v2122, 0
        %2150 = vmatpush.bf16.msra.mxu0 0
        %2151 = vmatpush.bf16.msra.mxu0 0
        %2152 = vmatpush.bf16.msra.mxu0 0
        %2153 = vmatpush.bf16.msra.mxu0 0
        %2154 = vmatpush.bf16.msra.mxu0 %v2142
        %2155 = vmatpush.bf16.msra.mxu0 %v2141
        %2156 = vmatpush.bf16.msra.mxu0 %v2140
        %2157 = vmatpush.bf16.msra.mxu0 %v2139
        %2158 = vmatmul.bf16.gmra.mxu0 %v2148
        %v2159 = vpop.f32.mrf.mxu0
        %v2160 = vadd.f32 %v1397, %v2159
        %v2161 = vpop.f32.mrf.mxu0
        %2162 = vdwg.mxu0
        %v2163 = vld [vmem:[#allocation15] sm:$0x1]
        %v2164 = vld [vmem:[#allocation16] sm:$0x1]
        %v2165 = vsel %vm633, %v2160, 0.0
        %2166 = vadd.xlane.f32.xlu0 %v2165
        %v2167 = vpop.xlane.xlu0 %2166
        %v2168 = vmul.f32 %v2167, %v643
        %v2169 = vsub.f32 %v2160, %v2168
        %v2170 = vmul.f32 %v2169, %v2169
        %v2171 = vsel %vm633, %v2170, 0.0
        %2172 = vadd.xlane.f32.xlu0 %v2171
        %v2173 = vpop.xlane.xlu0 %2172
        %v2174 = vmul.f32 %v2173, %v643
        %v2175 = vadd.f32 %v2174, 1e-05
        %v2176 = vrsqrt.pop %v2175
        %v2177 = vmul.f32 %v2176, %v2175
        %v2178 = vmul.f32 %v2177, %v2176
        %v2179 = vmul.f32 0.5, %v2178
        %v2180 = vsub.f32 1.5, %v2179
        %v2181 = vmul.f32 %v2176, %v2180
        %vm2182 = vweird.f32 %v2175
        %vm2183 = vweird.f32 %v2176
        %vm2184 = vmor %vm2182, %vm2183
        %v2185 = vsel %vm2184, %v2176, %v2181
        %v2186 = vmul.f32 %v2169, %v2185
        %v2188 = vperm.slane %v2163, 0
        %v2190 = vmul.f32 %v2186, %v2188
        %v2192 = vperm.slane %v2164, 0
        %v2194 = vadd.f32 %v2190, %v2192
        %2195 = vst.msk [vmem:[%s556] sm:$0xff] %vm633, %v2194
        %s2196 = sand.u32 %s322, 1
        %s2197 = scalar_lea.sflag [#allocation6], %s2196
        %s2198 = sand.u32 %s322, 1
        %s2199 = smul.addr %s2198, 8
        %s2200 = scalar_lea.vmem [#allocation18], %s2199
        // Predicated region
        $region105: #{mixer_model_forward.1} parent=71 // pred_check
          %p2201 = pneg %p332
        $region106: #{mixer_model_forward.1} parent=71 // pred_check_branch
          %2203 = sbr.rel (%p2201) target = $region108
        $region107: #{mixer_model_forward.1} parent=71 // pred_region
          %2205 = vsyncadd %s2197, 0
          %s2206 = smul.addr %s41, 8
          %s2207 = scalar_lea.hbm %s14, %s2206
          %s2209 = sshll.u32 %s2200, 4
          %s2210 = int_to_ptr.vmem [resolvable:$true] %s2209
          %s2211 = sshll.u32 %s2207, 4
          %s2212 = int_to_ptr.hbm [resolvable:$true] %s2211
          %2214 = dma.vmem_to_hbm [thread:$0]  %s2210, 128, %s2212, %s2197
        $region108: #{mixer_model_forward.1} parent=71 // pred_fallthru
          _
      $region72: #{mixer_model_forward.1} parent=5 // pred_fallthru
        _
      %p2215 = scmp.le.s32.totalorder 2, %s36
      // Predicated region
      $region109: #{mixer_model_forward.1} parent=5 // pred_check
        %p2216 = pneg %p2215
      $region110: #{mixer_model_forward.1} parent=5 // pred_check_branch
        %2218 = sbr.rel (%p2216) target = $region112
      $region111: #{mixer_model_forward.1} parent=5 // pred_region
        %s2219 = ssub.s32 %s36, 2
        // Predicated region
        $region113: #{mixer_model_forward.1} parent=111 // pred_check
          %p2220 = pneg %p338
        $region114: #{mixer_model_forward.1} parent=111 // pred_check_branch
          %2222 = sbr.rel (%p2220) target = $region116
        $region115: #{mixer_model_forward.1} parent=111 // pred_region
          %s2223 = sand.u32 %s323, 1
          %s2224 = scalar_lea.sflag [#allocation6], %s2223
          %s2225 = sand.u32 %s323, 1
          %s2226 = smul.addr %s2225, 8
          %s2227 = scalar_lea.vmem [#allocation18], %s2226
          %2229 = dma.done %s2224, 128
        $region116: #{mixer_model_forward.1} parent=111 // pred_fallthru
          _
      $region112: #{mixer_model_forward.1} parent=5 // pred_fallthru
        _
    $region6: #{mixer_model_forward.1} parent=1 // loop_footer
      %s40 = sadd.s32 1, %s36
    $region7: #{mixer_model_forward.1} parent=1 // loop_footer_branch
      %35 = sbr.rel target = $region3
    $region8: #{mixer_model_forward.1} parent=1 // loop_exit
      _
    %2230 = vsyncpa [#allocation5], 1
    %s2231 = scalar_lea.sflag [#allocation5], 1
    %2232 = vsyncpa %s2231, 1
    %2233 = vsyncpa [#allocation8], 1
    %2234 = vsyncpa [#allocation11], 1
    %2235 = vsyncpa [#allocation14], 1
    %2236 = vsyncpa [#allocation17], 1
    %2237 = vsyncpa [#allocation6], 1
    %s2238 = scalar_lea.sflag [#allocation6], 1
    %2239 = vsyncpa %s2238, 1

</llo_original>
